<compile_context>
chip_gen: v5e
topology: v5e:2x2
jax: 0.10.0
libtpu: 0.0.40
codegen_flags: <defaults>
</compile_context>

<pallas_src>
from functools import partial

import jax
import jax.numpy as jnp
from jax.experimental import pallas as pl
from jax.experimental.pallas import tpu as pltpu

_VMEM_LIMIT = 48 * 1024 * 1024  # <= v7x's 64 MiB physical VMEM; fine on v5e/v6e


# --------------------------------------------------------------------------
# Fused DoubleConv kernel
# --------------------------------------------------------------------------

def _conv3x3_leaky(xp_ref, w_ref, b_ref, H, W):
    """3x3 'same' conv + bias + LeakyReLU(0.2) from a zero-padded VMEM buffer.

    xp_ref: (H+2, W+2, Cin)  bf16  -- zero-padded activation (halo in VMEM)
    w_ref : (3, 3*Cin, Cout) bf16  -- dx taps folded into the matmul K dim
    b_ref : (1, Cout)        f32
    returns (H, W, Cout) f32
    """
    cin = xp_ref.shape[-1]
    cout = w_ref.shape[-1]
    acc = jnp.zeros((H * W, cout), jnp.float32)
    for dy in range(3):
        # One contiguous row-band load per dy (major-axis slice, cheap).
        band = xp_ref[dy:dy + H, :, :]                              # (H, W+2, Cin)
        # im2col of the 3 dx shifts into the K dimension -> K = 3*Cin.
        cols = jnp.concatenate(
            [band[:, dx:dx + W, :] for dx in range(3)], axis=-1)    # (H, W, 3*Cin)
        acc = acc + jnp.dot(cols.reshape(H * W, 3 * cin), w_ref[dy],
                            preferred_element_type=jnp.float32)
    acc = acc + b_ref[...]                           # bias in f32
    acc = jnp.where(acc >= 0.0, acc, 0.2 * acc)      # LeakyReLU(0.2) in f32
    return acc.reshape(H, W, cout)


def _double_conv_kernel(x_ref, w1_ref, b1_ref, w2_ref, b2_ref, o_ref,
                        xp1_ref, xp2_ref, *, ispool):
    _, H, W, _ = x_ref.shape
    c2 = w2_ref.shape[-1]

    # Stage the input into a zero-padded VMEM buffer (no host-side jnp.pad).
    xp1_ref[...] = jnp.zeros_like(xp1_ref)
    xp1_ref[1:H + 1, 1:W + 1, :] = x_ref[0]

    y1 = _conv3x3_leaky(xp1_ref, w1_ref, b1_ref, H, W)              # (H, W, C1) f32

    # Intermediate activation stays in VMEM scratch (no HBM round-trip).
    xp2_ref[...] = jnp.zeros_like(xp2_ref)
    xp2_ref[1:H + 1, 1:W + 1, :] = y1.astype(xp2_ref.dtype)

    y2 = _conv3x3_leaky(xp2_ref, w2_ref, b2_ref, H, W)              # (H, W, C2) f32

    if ispool:
        # Fused 2x2 / stride-2 max-pool epilogue: pair-wise max via reshapes,
        # no strided ref indexing.
        y2 = jnp.max(y2.reshape(H, W // 2, 2, c2), axis=2)          # pool along W
        y2 = jnp.max(y2.reshape(H // 2, 2, W // 2, c2), axis=1)     # pool along H
    o_ref[0] = y2.astype(o_ref.dtype)


def double_conv(x_nchw, w1, b1, w2, b2, *, ispool=True):
    """DoubleConv forward, matching the PyTorch module.

    x_nchw: (N, Cin, H, W) f32   (PyTorch NCHW layout)
    w1: (C1, Cin, 3, 3), b1: (C1,)   -- conv1 (OIHW, like nn.Conv2d.weight)
    w2: (C2, C1, 3, 3), b2: (C2,)    -- conv2
    returns (N, C2, Ho, Wo) f32 with Ho,Wo = H//2,W//2 if ispool else H,W.
    """
    n, cin, h, w = x_nchw.shape
    c1 = w1.shape[0]
    c2 = w2.shape[0]
    if ispool:
        assert h % 2 == 0 and w % 2 == 0, "MaxPool2x2 needs even H, W"
    ho, wo = (h // 2, w // 2) if ispool else (h, w)

    # NHWC + bf16 at the kernel boundary; f32 accumulation inside the kernel.
    x = x_nchw.transpose(0, 2, 3, 1).astype(jnp.bfloat16)
    # Fold the 3 dx taps into the matmul K dim:
    #   w_folded[dy, dx*Cin + c, o] = w_torch[o, c, dy, dx]
    w1f = w1.transpose(2, 3, 1, 0).reshape(3, 3 * cin, c1).astype(jnp.bfloat16)
    w2f = w2.transpose(2, 3, 1, 0).reshape(3, 3 * c1, c2).astype(jnp.bfloat16)

    out = pl.pallas_call(
        partial(_double_conv_kernel, ispool=ispool),
        grid=(n,),
        in_specs=[
            pl.BlockSpec((1, h, w, cin), lambda i: (i, 0, 0, 0)),
            pl.BlockSpec((3, 3 * cin, c1), lambda i: (0, 0, 0)),
            pl.BlockSpec((1, c1), lambda i: (0, 0)),
            pl.BlockSpec((3, 3 * c1, c2), lambda i: (0, 0, 0)),
            pl.BlockSpec((1, c2), lambda i: (0, 0)),
        ],
        out_specs=pl.BlockSpec((1, ho, wo, c2), lambda i: (i, 0, 0, 0)),
        out_shape=jax.ShapeDtypeStruct((n, ho, wo, c2), jnp.float32),
        scratch_shapes=[
            pltpu.VMEM((h + 2, w + 2, cin), jnp.bfloat16),   # padded conv1 input
            pltpu.VMEM((h + 2, w + 2, c1), jnp.bfloat16),    # padded conv2 input
        ],
        compiler_params=pltpu.CompilerParams(
            dimension_semantics=("parallel",),               # batch is independent
            vmem_limit_bytes=_VMEM_LIMIT),
    )(x, w1f, b1.reshape(1, c1).astype(jnp.float32),
      w2f, b2.reshape(1, c2).astype(jnp.float32))
    return out.transpose(0, 3, 1, 2)                         # back to NCHW


# --------------------------------------------------------------------------
# Pure-JAX reference (same bf16-in / f32-accumulate numerics) for validation
# --------------------------------------------------------------------------

def _double_conv_reference(x_nchw, w1, b1, w2, b2, *, ispool=True):
    def conv(x_nhwc, w, b):
        w_hwio = w.transpose(2, 3, 1, 0).astype(jnp.bfloat16)
        y = jax.lax.conv_general_dilated(
            x_nhwc, w_hwio, window_strides=(1, 1), padding=((1, 1), (1, 1)),
            dimension_numbers=("NHWC", "HWIO", "NHWC"),
            preferred_element_type=jnp.float32)
        y = y + b.astype(jnp.float32)
        return jnp.where(y >= 0.0, y, 0.2 * y)

    x = x_nchw.transpose(0, 2, 3, 1).astype(jnp.bfloat16)
    y = conv(x, w1, b1)
    y = conv(y.astype(jnp.bfloat16), w2, b2)
    if ispool:
        y = jax.lax.reduce_window(y, -jnp.inf, jax.lax.max,
                                  (1, 2, 2, 1), (1, 2, 2, 1), "VALID")
    return y.transpose(0, 3, 1, 2)


# --------------------------------------------------------------------------
# Main
# --------------------------------------------------------------------------

if __name__ == "__main__":
    key = jax.random.PRNGKey(0)
    k_x, k_w1, k_b1, k_w2, k_b2 = jax.random.split(key, 5)

    N, Cin, H, W = 2, 4, 16, 16       # small shapes consistent with the module
    Cout = 32                         # DoubleConv(in_dim=4, out_dim=32)

    x = jax.random.normal(k_x, (N, Cin, H, W), jnp.float32)
    w1 = 0.1 * jax.random.normal(k_w1, (Cout, Cin, 3, 3), jnp.float32)
    b1 = 0.05 * jax.random.normal(k_b1, (Cout,), jnp.float32)
    w2 = 0.1 * jax.random.normal(k_w2, (Cout, Cout, 3, 3), jnp.float32)
    b2 = 0.05 * jax.random.normal(k_b2, (Cout,), jnp.float32)

    fwd = jax.jit(partial(double_conv, ispool=True))
    out = fwd(x, w1, b1, w2, b2)
    jax.block_until_ready(out)

    ref = _double_conv_reference(x, w1, b1, w2, b2, ispool=True)
    max_err = float(jnp.max(jnp.abs(out - ref)))
    if not bool(jnp.allclose(out, ref, rtol=2e-2, atol=2e-2)):
        raise SystemExit(f"DoubleConv kernel mismatch: max|err| = {max_err:.3e}")

    print("KERNEL_OK")
</pallas_src>

<mosaic_0001>
module attributes {stable_mosaic.version = 11 : i64} {
  func.func @_double_conv_kernel(%arg0: i32, %arg1: memref<1x16x16x4xbf16, #tpu.memory_space<vmem>>, %arg2: memref<3x12x32xbf16, #tpu.memory_space<vmem>>, %arg3: memref<1x32xf32, #tpu.memory_space<vmem>>, %arg4: memref<3x96x32xbf16, #tpu.memory_space<vmem>>, %arg5: memref<1x32xf32, #tpu.memory_space<vmem>>, %arg6: memref<1x8x8x32xf32, #tpu.memory_space<vmem>>, %arg7: memref<18x18x4xbf16, #tpu.memory_space<vmem>>, %arg8: memref<18x18x32xbf16, #tpu.memory_space<vmem>>) attributes {dimension_semantics = [#tpu.dimension_semantics<parallel>], iteration_bounds = array<i64: 2>, scalar_prefetch = 0 : i64, scratch_operands = 2 : i64, tpu.core_type = #tpu.core_type<tc>, window_params = [{transform_indices = @transform_0, window_bounds = array<i64: 1, 16, 16, 4>}, {pipeline_mode = #tpu.pipeline_mode<synchronous>, transform_indices = @transform_1, window_bounds = array<i64: 3, 12, 32>}, {pipeline_mode = #tpu.pipeline_mode<synchronous>, transform_indices = @transform_2, window_bounds = array<i64: 1, 32>}, {pipeline_mode = #tpu.pipeline_mode<synchronous>, transform_indices = @transform_3, window_bounds = array<i64: 3, 96, 32>}, {pipeline_mode = #tpu.pipeline_mode<synchronous>, transform_indices = @transform_4, window_bounds = array<i64: 1, 32>}, {transform_indices = @transform_5, window_bounds = array<i64: 1, 8, 8, 32>}]} {
    %cst = arith.constant 0.000000e+00 : bf16
    %0 = vector.broadcast %cst : bf16 to vector<18x18x4xbf16>
    %c0 = arith.constant 0 : index
    %c0_0 = arith.constant 0 : index
    %c0_1 = arith.constant 0 : index
    %1 = vector.load %arg7[%c0, %c0_0, %c0_1] : memref<18x18x4xbf16, #tpu.memory_space<vmem>>, vector<18x18x4xbf16>
    tpu.vector_store %arg7[%c0, %c0_0, %c0_1], %0 {strides = array<i32>} : memref<18x18x4xbf16, #tpu.memory_space<vmem>>, vector<18x18x4xbf16>,
    %c0_2 = arith.constant 0 : index
    %c0_3 = arith.constant 0 : index
    %c0_4 = arith.constant 0 : index
    %c0_5 = arith.constant 0 : index
    %2 = vector.load %arg1[%c0_2, %c0_3, %c0_4, %c0_5] : memref<1x16x16x4xbf16, #tpu.memory_space<vmem>>, vector<1x16x16x4xbf16>
    %3 = vector.shape_cast %2 : vector<1x16x16x4xbf16> to vector<16x16x4xbf16>
    %c1 = arith.constant 1 : index
    %c1_6 = arith.constant 1 : index
    %c0_7 = arith.constant 0 : index
    %4 = vector.load %arg7[%c1, %c1_6, %c0_7] : memref<18x18x4xbf16, #tpu.memory_space<vmem>>, vector<16x16x4xbf16>
    tpu.vector_store %arg7[%c1, %c1_6, %c0_7], %3 {strides = array<i32>} : memref<18x18x4xbf16, #tpu.memory_space<vmem>>, vector<16x16x4xbf16>,
    %cst_8 = arith.constant 0.000000e+00 : f32
    %5 = vector.broadcast %cst_8 : f32 to vector<256x32xf32>
    %c0_9 = arith.constant 0 : index
    %c0_10 = arith.constant 0 : index
    %c0_11 = arith.constant 0 : index
    %6 = vector.load %arg7[%c0_9, %c0_10, %c0_11] : memref<18x18x4xbf16, #tpu.memory_space<vmem>>, vector<16x18x4xbf16>
    %7 = vector.extract_strided_slice %6 {offsets = [0, 0, 0], sizes = [16, 16, 4], strides = [1, 1, 1]} : vector<16x18x4xbf16> to vector<16x16x4xbf16>
    %8 = vector.extract_strided_slice %6 {offsets = [0, 1, 0], sizes = [16, 16, 4], strides = [1, 1, 1]} : vector<16x18x4xbf16> to vector<16x16x4xbf16>
    %9 = vector.extract_strided_slice %6 {offsets = [0, 2, 0], sizes = [16, 16, 4], strides = [1, 1, 1]} : vector<16x18x4xbf16> to vector<16x16x4xbf16>
    %10 = tpu.concatenate %7, %8, %9 in 2 : vector<16x16x4xbf16>, vector<16x16x4xbf16>, vector<16x16x4xbf16> -> vector<16x16x12xbf16>
    %11 = vector.shape_cast %10 : vector<16x16x12xbf16> to vector<256x12xbf16>
    %c0_12 = arith.constant 0 : index
    %c0_13 = arith.constant 0 : index
    %c0_14 = arith.constant 0 : index
    %12 = vector.load %arg2[%c0_12, %c0_13, %c0_14] : memref<3x12x32xbf16, #tpu.memory_space<vmem>>, vector<1x12x32xbf16>
    %13 = vector.shape_cast %12 : vector<1x12x32xbf16> to vector<12x32xbf16>
    %cst_15 = arith.constant dense<0.000000e+00> : vector<256x32xf32>
    %14 = tpu.matmul %11, %13, %cst_15 {dimension_numbers = #tpu.dot_dimension_numbers<[1], [0], [0], [1], [0, 0, 1, 1], [], []>} : vector<256x12xbf16>, vector<12x32xbf16>, vector<256x32xf32> -> vector<256x32xf32>
    %15 = arith.addf %5, %14 : vector<256x32xf32>
    %c1_16 = arith.constant 1 : index
    %c0_17 = arith.constant 0 : index
    %c0_18 = arith.constant 0 : index
    %16 = vector.load %arg7[%c1_16, %c0_17, %c0_18] : memref<18x18x4xbf16, #tpu.memory_space<vmem>>, vector<16x18x4xbf16>
    %17 = vector.extract_strided_slice %16 {offsets = [0, 0, 0], sizes = [16, 16, 4], strides = [1, 1, 1]} : vector<16x18x4xbf16> to vector<16x16x4xbf16>
    %18 = vector.extract_strided_slice %16 {offsets = [0, 1, 0], sizes = [16, 16, 4], strides = [1, 1, 1]} : vector<16x18x4xbf16> to vector<16x16x4xbf16>
    %19 = vector.extract_strided_slice %16 {offsets = [0, 2, 0], sizes = [16, 16, 4], strides = [1, 1, 1]} : vector<16x18x4xbf16> to vector<16x16x4xbf16>
    %20 = tpu.concatenate %17, %18, %19 in 2 : vector<16x16x4xbf16>, vector<16x16x4xbf16>, vector<16x16x4xbf16> -> vector<16x16x12xbf16>
    %21 = vector.shape_cast %20 : vector<16x16x12xbf16> to vector<256x12xbf16>
    %c1_19 = arith.constant 1 : index
    %c0_20 = arith.constant 0 : index
    %c0_21 = arith.constant 0 : index
    %22 = vector.load %arg2[%c1_19, %c0_20, %c0_21] : memref<3x12x32xbf16, #tpu.memory_space<vmem>>, vector<1x12x32xbf16>
    %23 = vector.shape_cast %22 : vector<1x12x32xbf16> to vector<12x32xbf16>
    %cst_22 = arith.constant dense<0.000000e+00> : vector<256x32xf32>
    %24 = tpu.matmul %21, %23, %cst_22 {dimension_numbers = #tpu.dot_dimension_numbers<[1], [0], [0], [1], [0, 0, 1, 1], [], []>} : vector<256x12xbf16>, vector<12x32xbf16>, vector<256x32xf32> -> vector<256x32xf32>
    %25 = arith.addf %15, %24 : vector<256x32xf32>
    %c2 = arith.constant 2 : index
    %c0_23 = arith.constant 0 : index
    %c0_24 = arith.constant 0 : index
    %26 = vector.load %arg7[%c2, %c0_23, %c0_24] : memref<18x18x4xbf16, #tpu.memory_space<vmem>>, vector<16x18x4xbf16>
    %27 = vector.extract_strided_slice %26 {offsets = [0, 0, 0], sizes = [16, 16, 4], strides = [1, 1, 1]} : vector<16x18x4xbf16> to vector<16x16x4xbf16>
    %28 = vector.extract_strided_slice %26 {offsets = [0, 1, 0], sizes = [16, 16, 4], strides = [1, 1, 1]} : vector<16x18x4xbf16> to vector<16x16x4xbf16>
    %29 = vector.extract_strided_slice %26 {offsets = [0, 2, 0], sizes = [16, 16, 4], strides = [1, 1, 1]} : vector<16x18x4xbf16> to vector<16x16x4xbf16>
    %30 = tpu.concatenate %27, %28, %29 in 2 : vector<16x16x4xbf16>, vector<16x16x4xbf16>, vector<16x16x4xbf16> -> vector<16x16x12xbf16>
    %31 = vector.shape_cast %30 : vector<16x16x12xbf16> to vector<256x12xbf16>
    %c2_25 = arith.constant 2 : index
    %c0_26 = arith.constant 0 : index
    %c0_27 = arith.constant 0 : index
    %32 = vector.load %arg2[%c2_25, %c0_26, %c0_27] : memref<3x12x32xbf16, #tpu.memory_space<vmem>>, vector<1x12x32xbf16>
    %33 = vector.shape_cast %32 : vector<1x12x32xbf16> to vector<12x32xbf16>
    %cst_28 = arith.constant dense<0.000000e+00> : vector<256x32xf32>
    %34 = tpu.matmul %31, %33, %cst_28 {dimension_numbers = #tpu.dot_dimension_numbers<[1], [0], [0], [1], [0, 0, 1, 1], [], []>} : vector<256x12xbf16>, vector<12x32xbf16>, vector<256x32xf32> -> vector<256x32xf32>
    %35 = arith.addf %25, %34 : vector<256x32xf32>
    %c0_29 = arith.constant 0 : index
    %c0_30 = arith.constant 0 : index
    %36 = vector.load %arg3[%c0_29, %c0_30] : memref<1x32xf32, #tpu.memory_space<vmem>>, vector<1x32xf32>
    %37 = vector.broadcast %36 : vector<1x32xf32> to vector<256x32xf32>
    %38 = arith.addf %35, %37 : vector<256x32xf32>
    %cst_31 = arith.constant 0.000000e+00 : f32
    %39 = vector.broadcast %cst_31 : f32 to vector<256x32xf32>
    %40 = arith.cmpf oge, %38, %39 : vector<256x32xf32>
    %cst_32 = arith.constant 2.000000e-01 : f32
    %41 = vector.broadcast %cst_32 : f32 to vector<256x32xf32>
    %42 = arith.mulf %41, %38 : vector<256x32xf32>
    %43 = arith.select %40, %38, %42 : vector<256x32xi1>, vector<256x32xf32>
    %44 = vector.shape_cast %43 : vector<256x32xf32> to vector<16x16x32xf32>
    %cst_33 = arith.constant 0.000000e+00 : bf16
    %45 = vector.broadcast %cst_33 : bf16 to vector<18x18x32xbf16>
    %c0_34 = arith.constant 0 : index
    %c0_35 = arith.constant 0 : index
    %c0_36 = arith.constant 0 : index
    %46 = vector.load %arg8[%c0_34, %c0_35, %c0_36] : memref<18x18x32xbf16, #tpu.memory_space<vmem>>, vector<18x18x32xbf16>
    tpu.vector_store %arg8[%c0_34, %c0_35, %c0_36], %45 {strides = array<i32>} : memref<18x18x32xbf16, #tpu.memory_space<vmem>>, vector<18x18x32xbf16>,
    %47 = arith.truncf %44 : vector<16x16x32xf32> to vector<16x16x32xbf16>
    %c1_37 = arith.constant 1 : index
    %c1_38 = arith.constant 1 : index
    %c0_39 = arith.constant 0 : index
    %48 = vector.load %arg8[%c1_37, %c1_38, %c0_39] : memref<18x18x32xbf16, #tpu.memory_space<vmem>>, vector<16x16x32xbf16>
    tpu.vector_store %arg8[%c1_37, %c1_38, %c0_39], %47 {strides = array<i32>} : memref<18x18x32xbf16, #tpu.memory_space<vmem>>, vector<16x16x32xbf16>,
    %cst_40 = arith.constant 0.000000e+00 : f32
    %49 = vector.broadcast %cst_40 : f32 to vector<256x32xf32>
    %c0_41 = arith.constant 0 : index
    %c0_42 = arith.constant 0 : index
    %c0_43 = arith.constant 0 : index
    %50 = vector.load %arg8[%c0_41, %c0_42, %c0_43] : memref<18x18x32xbf16, #tpu.memory_space<vmem>>, vector<16x18x32xbf16>
    %51 = vector.extract_strided_slice %50 {offsets = [0, 0, 0], sizes = [16, 16, 32], strides = [1, 1, 1]} : vector<16x18x32xbf16> to vector<16x16x32xbf16>
    %52 = vector.extract_strided_slice %50 {offsets = [0, 1, 0], sizes = [16, 16, 32], strides = [1, 1, 1]} : vector<16x18x32xbf16> to vector<16x16x32xbf16>
    %53 = vector.extract_strided_slice %50 {offsets = [0, 2, 0], sizes = [16, 16, 32], strides = [1, 1, 1]} : vector<16x18x32xbf16> to vector<16x16x32xbf16>
    %54 = tpu.concatenate %51, %52, %53 in 2 : vector<16x16x32xbf16>, vector<16x16x32xbf16>, vector<16x16x32xbf16> -> vector<16x16x96xbf16>
    %55 = vector.shape_cast %54 : vector<16x16x96xbf16> to vector<256x96xbf16>
    %c0_44 = arith.constant 0 : index
    %c0_45 = arith.constant 0 : index
    %c0_46 = arith.constant 0 : index
    %56 = vector.load %arg4[%c0_44, %c0_45, %c0_46] : memref<3x96x32xbf16, #tpu.memory_space<vmem>>, vector<1x96x32xbf16>
    %57 = vector.shape_cast %56 : vector<1x96x32xbf16> to vector<96x32xbf16>
    %cst_47 = arith.constant dense<0.000000e+00> : vector<256x32xf32>
    %58 = tpu.matmul %55, %57, %cst_47 {dimension_numbers = #tpu.dot_dimension_numbers<[1], [0], [0], [1], [0, 0, 1, 1], [], []>} : vector<256x96xbf16>, vector<96x32xbf16>, vector<256x32xf32> -> vector<256x32xf32>
    %59 = arith.addf %49, %58 : vector<256x32xf32>
    %c1_48 = arith.constant 1 : index
    %c0_49 = arith.constant 0 : index
    %c0_50 = arith.constant 0 : index
    %60 = vector.load %arg8[%c1_48, %c0_49, %c0_50] : memref<18x18x32xbf16, #tpu.memory_space<vmem>>, vector<16x18x32xbf16>
    %61 = vector.extract_strided_slice %60 {offsets = [0, 0, 0], sizes = [16, 16, 32], strides = [1, 1, 1]} : vector<16x18x32xbf16> to vector<16x16x32xbf16>
    %62 = vector.extract_strided_slice %60 {offsets = [0, 1, 0], sizes = [16, 16, 32], strides = [1, 1, 1]} : vector<16x18x32xbf16> to vector<16x16x32xbf16>
    %63 = vector.extract_strided_slice %60 {offsets = [0, 2, 0], sizes = [16, 16, 32], strides = [1, 1, 1]} : vector<16x18x32xbf16> to vector<16x16x32xbf16>
    %64 = tpu.concatenate %61, %62, %63 in 2 : vector<16x16x32xbf16>, vector<16x16x32xbf16>, vector<16x16x32xbf16> -> vector<16x16x96xbf16>
    %65 = vector.shape_cast %64 : vector<16x16x96xbf16> to vector<256x96xbf16>
    %c1_51 = arith.constant 1 : index
    %c0_52 = arith.constant 0 : index
    %c0_53 = arith.constant 0 : index
    %66 = vector.load %arg4[%c1_51, %c0_52, %c0_53] : memref<3x96x32xbf16, #tpu.memory_space<vmem>>, vector<1x96x32xbf16>
    %67 = vector.shape_cast %66 : vector<1x96x32xbf16> to vector<96x32xbf16>
    %cst_54 = arith.constant dense<0.000000e+00> : vector<256x32xf32>
    %68 = tpu.matmul %65, %67, %cst_54 {dimension_numbers = #tpu.dot_dimension_numbers<[1], [0], [0], [1], [0, 0, 1, 1], [], []>} : vector<256x96xbf16>, vector<96x32xbf16>, vector<256x32xf32> -> vector<256x32xf32>
    %69 = arith.addf %59, %68 : vector<256x32xf32>
    %c2_55 = arith.constant 2 : index
    %c0_56 = arith.constant 0 : index
    %c0_57 = arith.constant 0 : index
    %70 = vector.load %arg8[%c2_55, %c0_56, %c0_57] : memref<18x18x32xbf16, #tpu.memory_space<vmem>>, vector<16x18x32xbf16>
    %71 = vector.extract_strided_slice %70 {offsets = [0, 0, 0], sizes = [16, 16, 32], strides = [1, 1, 1]} : vector<16x18x32xbf16> to vector<16x16x32xbf16>
    %72 = vector.extract_strided_slice %70 {offsets = [0, 1, 0], sizes = [16, 16, 32], strides = [1, 1, 1]} : vector<16x18x32xbf16> to vector<16x16x32xbf16>
    %73 = vector.extract_strided_slice %70 {offsets = [0, 2, 0], sizes = [16, 16, 32], strides = [1, 1, 1]} : vector<16x18x32xbf16> to vector<16x16x32xbf16>
    %74 = tpu.concatenate %71, %72, %73 in 2 : vector<16x16x32xbf16>, vector<16x16x32xbf16>, vector<16x16x32xbf16> -> vector<16x16x96xbf16>
    %75 = vector.shape_cast %74 : vector<16x16x96xbf16> to vector<256x96xbf16>
    %c2_58 = arith.constant 2 : index
    %c0_59 = arith.constant 0 : index
    %c0_60 = arith.constant 0 : index
    %76 = vector.load %arg4[%c2_58, %c0_59, %c0_60] : memref<3x96x32xbf16, #tpu.memory_space<vmem>>, vector<1x96x32xbf16>
    %77 = vector.shape_cast %76 : vector<1x96x32xbf16> to vector<96x32xbf16>
    %cst_61 = arith.constant dense<0.000000e+00> : vector<256x32xf32>
    %78 = tpu.matmul %75, %77, %cst_61 {dimension_numbers = #tpu.dot_dimension_numbers<[1], [0], [0], [1], [0, 0, 1, 1], [], []>} : vector<256x96xbf16>, vector<96x32xbf16>, vector<256x32xf32> -> vector<256x32xf32>
    %79 = arith.addf %69, %78 : vector<256x32xf32>
    %c0_62 = arith.constant 0 : index
    %c0_63 = arith.constant 0 : index
    %80 = vector.load %arg5[%c0_62, %c0_63] : memref<1x32xf32, #tpu.memory_space<vmem>>, vector<1x32xf32>
    %81 = vector.broadcast %80 : vector<1x32xf32> to vector<256x32xf32>
    %82 = arith.addf %79, %81 : vector<256x32xf32>
    %cst_64 = arith.constant 0.000000e+00 : f32
    %83 = vector.broadcast %cst_64 : f32 to vector<256x32xf32>
    %84 = arith.cmpf oge, %82, %83 : vector<256x32xf32>
    %cst_65 = arith.constant 2.000000e-01 : f32
    %85 = vector.broadcast %cst_65 : f32 to vector<256x32xf32>
    %86 = arith.mulf %85, %82 : vector<256x32xf32>
    %87 = arith.select %84, %82, %86 : vector<256x32xi1>, vector<256x32xf32>
    %88 = vector.shape_cast %87 : vector<256x32xf32> to vector<16x16x32xf32>
    %89 = vector.shape_cast %88 : vector<16x16x32xf32> to vector<16x8x2x32xf32>
    %cst_66 = arith.constant dense<0xFF800000> : vector<16x8x32xf32>
    %90 = vector.multi_reduction <maximumf>, %89, %cst_66 [2] : vector<16x8x2x32xf32> to vector<16x8x32xf32>
    %91 = vector.shape_cast %90 : vector<16x8x32xf32> to vector<8x2x8x32xf32>
    %cst_67 = arith.constant dense<0xFF800000> : vector<8x8x32xf32>
    %92 = vector.multi_reduction <maximumf>, %91, %cst_67 [1] : vector<8x2x8x32xf32> to vector<8x8x32xf32>
    %c0_68 = arith.constant 0 : index
    %c0_69 = arith.constant 0 : index
    %c0_70 = arith.constant 0 : index
    %c0_71 = arith.constant 0 : index
    %93 = vector.load %arg6[%c0_68, %c0_69, %c0_70, %c0_71] : memref<1x8x8x32xf32, #tpu.memory_space<vmem>>, vector<1x8x8x32xf32>
    %94 = vector.shape_cast %93 : vector<1x8x8x32xf32> to vector<8x8x32xf32>
    %95 = vector.shape_cast %92 : vector<8x8x32xf32> to vector<1x8x8x32xf32>
    tpu.vector_store %arg6[%c0_68, %c0_69, %c0_70, %c0_71], %95 {strides = array<i32>} : memref<1x8x8x32xf32, #tpu.memory_space<vmem>>, vector<1x8x8x32xf32>,
    return
  }
  func.func @transform_0(%arg0: i32) -> (i32, i32, i32, i32) {
    %c0_i32 = arith.constant 0 : i32
    %c0_i32_0 = arith.constant 0 : i32
    %c0_i32_1 = arith.constant 0 : i32
    %c0_i32_2 = arith.constant 0 : i32
    return %arg0, %c0_i32, %c0_i32_0, %c0_i32_1 : i32, i32, i32, i32
  }
  func.func @transform_1(%arg0: i32) -> (i32, i32, i32) {
    %c0_i32 = arith.constant 0 : i32
    %c0_i32_0 = arith.constant 0 : i32
    %c0_i32_1 = arith.constant 0 : i32
    %c0_i32_2 = arith.constant 0 : i32
    return %c0_i32, %c0_i32_0, %c0_i32_1 : i32, i32, i32
  }
  func.func @transform_2(%arg0: i32) -> (i32, i32) {
    %c0_i32 = arith.constant 0 : i32
    %c0_i32_0 = arith.constant 0 : i32
    %c0_i32_1 = arith.constant 0 : i32
    return %c0_i32, %c0_i32_0 : i32, i32
  }
  func.func @transform_3(%arg0: i32) -> (i32, i32, i32) {
    %c0_i32 = arith.constant 0 : i32
    %c0_i32_0 = arith.constant 0 : i32
    %c0_i32_1 = arith.constant 0 : i32
    %c0_i32_2 = arith.constant 0 : i32
    return %c0_i32, %c0_i32_0, %c0_i32_1 : i32, i32, i32
  }
  func.func @transform_4(%arg0: i32) -> (i32, i32) {
    %c0_i32 = arith.constant 0 : i32
    %c0_i32_0 = arith.constant 0 : i32
    %c0_i32_1 = arith.constant 0 : i32
    return %c0_i32, %c0_i32_0 : i32, i32
  }
  func.func @transform_5(%arg0: i32) -> (i32, i32, i32, i32) {
    %c0_i32 = arith.constant 0 : i32
    %c0_i32_0 = arith.constant 0 : i32
    %c0_i32_1 = arith.constant 0 : i32
    %c0_i32_2 = arith.constant 0 : i32
    return %arg0, %c0_i32, %c0_i32_0, %c0_i32_1 : i32, i32, i32, i32
  }
}

</mosaic_0001>

<llo_original>
// kernel: double_conv.1
$region0: #{double_conv.1}
  #allocation0 [shape = 'u32[]', space=smem, size = 0x4, offset = 0x4, fixed_abs, tag = 'smem constant byte address 0x4 - core index']
  #allocation1 [shape = 'u32[72,128]{1,0:T(1,128)}', space=vmem, size = 0x9000, scoped, tag = 'internal scratch']
  #allocation2 [shape = 'bf16[18,18,4]{2,1,0:T(8,128)(2,1)}', space=vmem, size = 0x1b000, scoped, tag = 'scratch operand']
  #allocation3 [shape = 'bf16[18,18,32]{2,1,0:T(8,128)(2,1)}', space=vmem, size = 0x1b000, scoped, tag = 'scratch operand']
  %s0 = inlined_call_operand.vmem [shape: bf16[2,16,16,4], index: 0, kind: input, shape index: {}]
  %s1 = inlined_call_operand.vmem [shape: bf16[3,12,32], index: 1, kind: input, shape index: {}]
  %s2 = inlined_call_operand.vmem [shape: f32[1,32], index: 2, kind: input, shape index: {}]
  %s3 = inlined_call_operand.vmem [shape: bf16[3,96,32], index: 3, kind: input, shape index: {}]
  %s4 = inlined_call_operand.vmem [shape: f32[1,32], index: 4, kind: input, shape index: {}]
  %s5 = inlined_call_operand.hbm [shape: f32[2,8,8,32], index: 5, kind: output, shape index: {}]
  %s6 = sld [smem:[#allocation0]]
  $region53: #{double_conv.1} parent=0
    _
  %s8 = ssub.s32 1, %s6
  %s9 = scalar_select 0, %s8, %s6
  $region1: #{double_conv.1} parent=0
    #allocation4 [shape = 'u8[65536]{0}', space=vmem, size = 0x10000, scoped, tag = 'output window, operand 0']
    #allocation5 [shape = 's32[2]{0}', space=sflag, size = 0x8, scoped, tag = 'scoped memory for double_conv.1']
    %10 = vsyncpa [#allocation5], 0
    %s11 = scalar_lea.sflag [#allocation5], 1
    %12 = vsyncpa %s11, 0
    loop: start=0, step=1, limit=4
    $region2: #{double_conv.1} parent=1 // loop_pre_header
      _
    $region3: #{double_conv.1} parent=1 // loop_header
      %s14 = sphi 0, %s18
      %p15 = scmp.ge.s32.totalorder %s14, 4
      %s24 = sphi 0, %s26
      %s27 = sphi 0, %s24
      %s28 = sphi 0, %s27
      %s44 = sphi 0, %s28
      %s48 = sphi 0, %s48
      %s50 = sphi 0, %s48
      %s51 = sphi 0, %s50
      %s65 = sphi 0, %s51
      %s69 = sphi 0, %s69
      %s71 = sphi 0, %s69
      %s72 = sphi 0, %s71
      %s86 = sphi 0, %s72
      %s90 = sphi 0, %s90
      %s92 = sphi 0, %s90
      %s93 = sphi 0, %s92
      %s107 = sphi 0, %s93
      %s111 = sphi 0, %s111
      %s113 = sphi 0, %s111
      %s114 = sphi 0, %s113
      %s128 = sphi 0, %s114
      %s134 = sphi 0, %s136
      %s137 = sphi 0, %s134
      %s138 = sphi 0, %s137
      %s154 = sphi 0, %s138
    $region4: #{double_conv.1} parent=1 // loop_header_branch
      %17 = sbr.rel (%p15) target = $region8
    $region5: #{double_conv.1} parent=1 // loop_body
      %s19 = ssub.s32 %s14, 1
      %s20 = ssub.s32 %s14, 2
      %s21 = sadd.s32 %s14, 1
      %s22 = ssub.s32 %s14, %s21
      %p23 = scmp.eq.s32.totalorder %s22, 0
      %s25 = sadd.s32 %s24, 1
      %s26 = scalar_select %p23, %s24, %s25
      %p29 = pneg %p23
      %p30 = scmp.eq.s32.totalorder %s14, 1
      %p31 = por %p29, %p30
      %p32 = scmp.ne.s32.totalorder %s24, %s27
      %p33 = scmp.eq.s32.totalorder %s14, 0
      %p34 = por %p32, %p33
      %p35 = scmp.ne.s32.totalorder %s24, %s27
      %p36 = scmp.eq.s32.totalorder %s19, 1
      %p37 = por %p35, %p36
      %p38 = scmp.ne.s32.totalorder %s27, %s28
      %p39 = scmp.eq.s32.totalorder %s19, 0
      %p40 = por %p38, %p39
      %p41 = scmp.ne.s32.totalorder %s27, %s28
      %p42 = scmp.eq.s32.totalorder %s20, 1
      %p43 = por %p41, %p42
      %p45 = scmp.ne.s32.totalorder %s28, %s44
      %p46 = scmp.eq.s32.totalorder %s20, 0
      %p47 = por %p45, %p46
      %s49 = sadd.s32 %s48, 1
      %p52 = scmp.eq.s32.totalorder %s14, 1
      %p53 = scmp.ne.s32.totalorder %s48, %s50
      %p54 = scmp.eq.s32.totalorder %s14, 0
      %p55 = por %p53, %p54
      %p56 = scmp.ne.s32.totalorder %s48, %s50
      %p57 = scmp.eq.s32.totalorder %s19, 1
      %p58 = por %p56, %p57
      %p59 = scmp.ne.s32.totalorder %s50, %s51
      %p60 = scmp.eq.s32.totalorder %s19, 0
      %p61 = por %p59, %p60
      %p62 = scmp.ne.s32.totalorder %s50, %s51
      %p63 = scmp.eq.s32.totalorder %s20, 1
      %p64 = por %p62, %p63
      %p66 = scmp.ne.s32.totalorder %s51, %s65
      %p67 = scmp.eq.s32.totalorder %s20, 0
      %p68 = por %p66, %p67
      %s70 = sadd.s32 %s69, 1
      %p73 = scmp.eq.s32.totalorder %s14, 1
      %p74 = scmp.ne.s32.totalorder %s69, %s71
      %p75 = scmp.eq.s32.totalorder %s14, 0
      %p76 = por %p74, %p75
      %p77 = scmp.ne.s32.totalorder %s69, %s71
      %p78 = scmp.eq.s32.totalorder %s19, 1
      %p79 = por %p77, %p78
      %p80 = scmp.ne.s32.totalorder %s71, %s72
      %p81 = scmp.eq.s32.totalorder %s19, 0
      %p82 = por %p80, %p81
      %p83 = scmp.ne.s32.totalorder %s71, %s72
      %p84 = scmp.eq.s32.totalorder %s20, 1
      %p85 = por %p83, %p84
      %p87 = scmp.ne.s32.totalorder %s72, %s86
      %p88 = scmp.eq.s32.totalorder %s20, 0
      %p89 = por %p87, %p88
      %s91 = sadd.s32 %s90, 1
      %p94 = scmp.eq.s32.totalorder %s14, 1
      %p95 = scmp.ne.s32.totalorder %s90, %s92
      %p96 = scmp.eq.s32.totalorder %s14, 0
      %p97 = por %p95, %p96
      %p98 = scmp.ne.s32.totalorder %s90, %s92
      %p99 = scmp.eq.s32.totalorder %s19, 1
      %p100 = por %p98, %p99
      %p101 = scmp.ne.s32.totalorder %s92, %s93
      %p102 = scmp.eq.s32.totalorder %s19, 0
      %p103 = por %p101, %p102
      %p104 = scmp.ne.s32.totalorder %s92, %s93
      %p105 = scmp.eq.s32.totalorder %s20, 1
      %p106 = por %p104, %p105
      %p108 = scmp.ne.s32.totalorder %s93, %s107
      %p109 = scmp.eq.s32.totalorder %s20, 0
      %p110 = por %p108, %p109
      %s112 = sadd.s32 %s111, 1
      %p115 = scmp.eq.s32.totalorder %s14, 1
      %p116 = scmp.ne.s32.totalorder %s111, %s113
      %p117 = scmp.eq.s32.totalorder %s14, 0
      %p118 = por %p116, %p117
      %p119 = scmp.ne.s32.totalorder %s111, %s113
      %p120 = scmp.eq.s32.totalorder %s19, 1
      %p121 = por %p119, %p120
      %p122 = scmp.ne.s32.totalorder %s113, %s114
      %p123 = scmp.eq.s32.totalorder %s19, 0
      %p124 = por %p122, %p123
      %p125 = scmp.ne.s32.totalorder %s113, %s114
      %p126 = scmp.eq.s32.totalorder %s20, 1
      %p127 = por %p125, %p126
      %p129 = scmp.ne.s32.totalorder %s114, %s128
      %p130 = scmp.eq.s32.totalorder %s20, 0
      %p131 = por %p129, %p130
      %s132 = ssub.s32 %s14, %s21
      %p133 = scmp.eq.s32.totalorder %s132, 0
      %s135 = sadd.s32 %s134, 1
      %s136 = scalar_select %p133, %s134, %s135
      %p139 = pneg %p133
      %p140 = scmp.eq.s32.totalorder %s14, 1
      %p141 = por %p139, %p140
      %p142 = scmp.ne.s32.totalorder %s134, %s137
      %p143 = scmp.eq.s32.totalorder %s14, 0
      %p144 = por %p142, %p143
      %p145 = scmp.ne.s32.totalorder %s134, %s137
      %p146 = scmp.eq.s32.totalorder %s19, 1
      %p147 = por %p145, %p146
      %p148 = scmp.ne.s32.totalorder %s137, %s138
      %p149 = scmp.eq.s32.totalorder %s19, 0
      %p150 = por %p148, %p149
      %p151 = scmp.ne.s32.totalorder %s137, %s138
      %p152 = scmp.eq.s32.totalorder %s20, 1
      %p153 = por %p151, %p152
      %p155 = scmp.ne.s32.totalorder %s138, %s154
      %p156 = scmp.eq.s32.totalorder %s20, 0
      %p157 = por %p155, %p156
      %p158 = scmp.le.s32.totalorder 1, %s14
      %p159 = scmp.lt.s32.totalorder %s14, 3
      %p160 = pnand %p158, %p159
      %p161 = pneg %p160
      // Predicated region
      $region9: #{double_conv.1} parent=5 // pred_check
        _
      $region10: #{double_conv.1} parent=5 // pred_check_branch
        %163 = sbr.rel (%p160) target = $region12
      $region11: #{double_conv.1} parent=5 // pred_region
        %s164 = ssub.s32 %s14, 1
        // Predicated region
        $region13: #{double_conv.1} parent=11 // pred_check
          %p165 = pneg %p61
        $region14: #{double_conv.1} parent=11 // pred_check_branch
          %167 = sbr.rel (%p165) target = $region16
        $region15: #{double_conv.1} parent=11 // pred_region
          _
        $region16: #{double_conv.1} parent=11 // pred_fallthru
          _
        // Predicated region
        $region17: #{double_conv.1} parent=11 // pred_check
          %p168 = pneg %p82
        $region18: #{double_conv.1} parent=11 // pred_check_branch
          %170 = sbr.rel (%p168) target = $region20
        $region19: #{double_conv.1} parent=11 // pred_region
          _
        $region20: #{double_conv.1} parent=11 // pred_fallthru
          _
        // Predicated region
        $region21: #{double_conv.1} parent=11 // pred_check
          %p171 = pneg %p103
        $region22: #{double_conv.1} parent=11 // pred_check_branch
          %173 = sbr.rel (%p171) target = $region24
        $region23: #{double_conv.1} parent=11 // pred_region
          _
        $region24: #{double_conv.1} parent=11 // pred_fallthru
          _
        // Predicated region
        $region25: #{double_conv.1} parent=11 // pred_check
          %p174 = pneg %p124
        $region26: #{double_conv.1} parent=11 // pred_check_branch
          %176 = sbr.rel (%p174) target = $region28
        $region27: #{double_conv.1} parent=11 // pred_region
          _
        $region28: #{double_conv.1} parent=11 // pred_fallthru
          _
      $region12: #{double_conv.1} parent=5 // pred_fallthru
        _
      %p177 = scmp.lt.s32.totalorder %s14, 2
      // Predicated region
      $region29: #{double_conv.1} parent=5 // pred_check
        %p178 = pneg %p177
      $region30: #{double_conv.1} parent=5 // pred_check_branch
        %180 = sbr.rel (%p178) target = $region32
      $region31: #{double_conv.1} parent=5 // pred_region
        // Predicated region
        $region33: #{double_conv.1} parent=31 // pred_check
          %p181 = pneg %p34
        $region34: #{double_conv.1} parent=31 // pred_check_branch
          %183 = sbr.rel (%p181) target = $region36
        $region35: #{double_conv.1} parent=31 // pred_region
          %p184 = scmp.lt.s32.totalorder %s14, 1
          %s185 = scalar_select %p184, %s14, 1
          %s186 = smul.addr %s185, 32
          %s187 = smul.addr %s186, 4
          %s188 = scalar_lea.vmem %s0, %s187
        $region36: #{double_conv.1} parent=31 // pred_fallthru
          _
      $region32: #{double_conv.1} parent=5 // pred_fallthru
        _
      %p189 = scmp.le.s32.totalorder 1, %s14
      %p190 = scmp.lt.s32.totalorder %s14, 3
      %p191 = pnand %p189, %p190
      %p192 = pneg %p191
      // Predicated region
      $region37: #{double_conv.1} parent=5 // pred_check
        _
      $region38: #{double_conv.1} parent=5 // pred_check_branch
        %194 = sbr.rel (%p191) target = $region40
      $region39: #{double_conv.1} parent=5 // pred_region
        %s195 = ssub.s32 %s14, 1
        %p196 = scmp.lt.s32.totalorder %s19, 1
        %s197 = scalar_select %p196, %s19, 1
        %s198 = smul.addr %s197, 32
        %s199 = smul.addr %s198, 4
        %s200 = scalar_lea.vmem %s0, %s199
        %p201 = pneg %p40
        %p202 = pneg %p37
        %p203 = pneg %p61
        %p204 = pneg %p58
        %p205 = pneg %p82
        %p206 = pneg %p79
        %p207 = pneg %p103
        %p208 = pneg %p100
        %p209 = pneg %p124
        %p210 = pneg %p121
        %p211 = pneg %p150
        %p212 = pneg %p147
        %s213 = sand.u32 %s137, 1
        %s214 = scalar_lea.sflag [#allocation5], %s213
        %s215 = sand.u32 %s137, 1
        %s216 = smul.addr %s215, 64
        %s217 = scalar_lea.vmem [#allocation4], %s216
        %p218 = scmp.lt.s32.totalorder %s19, 1
        %s219 = scalar_select %p218, %s19, 1
        %s220 = smul.addr %s219, 32
        %s221 = smul.addr %s220, 4
        %s222 = scalar_lea.vmem %s0, %s221
        %vm224 = vcmask 27648
        %225 = vst.msk [vmem:[#allocation2] sm:$0xf] %vm224, 0
        %226 = vst.msk [vmem:[#allocation2 + $0x4] sm:$0xf] %vm224, 0
        %vm227 = vcmask 24576
        %228 = vst.msk [vmem:[#allocation2 + $0x8] sm:$0x1] %vm227, 0
        %229 = vst.msk [vmem:[#allocation2 + $0xc] sm:$0xf] %vm224, 0
        %230 = vst.msk [vmem:[#allocation2 + $0x10] sm:$0xf] %vm224, 0
        %231 = vst.msk [vmem:[#allocation2 + $0x14] sm:$0x1] %vm227, 0
        %232 = vst.msk [vmem:[#allocation2 + $0x18] sm:$0xf] %vm224, 0
        %233 = vst.msk [vmem:[#allocation2 + $0x1c] sm:$0xf] %vm224, 0
        %234 = vst.msk [vmem:[#allocation2 + $0x20] sm:$0x1] %vm227, 0
        %235 = vst.msk [vmem:[#allocation2 + $0x24] sm:$0xf] %vm224, 0
        %236 = vst.msk [vmem:[#allocation2 + $0x28] sm:$0xf] %vm224, 0
        %237 = vst.msk [vmem:[#allocation2 + $0x2c] sm:$0x1] %vm227, 0
        %238 = vst.msk [vmem:[#allocation2 + $0x30] sm:$0xf] %vm224, 0
        %239 = vst.msk [vmem:[#allocation2 + $0x34] sm:$0xf] %vm224, 0
        %240 = vst.msk [vmem:[#allocation2 + $0x38] sm:$0x1] %vm227, 0
        %241 = vst.msk [vmem:[#allocation2 + $0x3c] sm:$0xf] %vm224, 0
        %242 = vst.msk [vmem:[#allocation2 + $0x40] sm:$0xf] %vm224, 0
        %243 = vst.msk [vmem:[#allocation2 + $0x44] sm:$0x1] %vm227, 0
        %244 = vst.msk [vmem:[#allocation2 + $0x48] sm:$0xf] %vm224, 0
        %245 = vst.msk [vmem:[#allocation2 + $0x4c] sm:$0xf] %vm224, 0
        %246 = vst.msk [vmem:[#allocation2 + $0x50] sm:$0x1] %vm227, 0
        %247 = vst.msk [vmem:[#allocation2 + $0x54] sm:$0xf] %vm224, 0
        %248 = vst.msk [vmem:[#allocation2 + $0x58] sm:$0xf] %vm224, 0
        %249 = vst.msk [vmem:[#allocation2 + $0x5c] sm:$0x1] %vm227, 0
        %250 = vst.msk [vmem:[#allocation2 + $0x60] sm:$0xf] %vm224, 0
        %251 = vst.msk [vmem:[#allocation2 + $0x64] sm:$0xf] %vm224, 0
        %252 = vst.msk [vmem:[#allocation2 + $0x68] sm:$0x1] %vm227, 0
        %253 = vst.msk [vmem:[#allocation2 + $0x6c] sm:$0xf] %vm224, 0
        %254 = vst.msk [vmem:[#allocation2 + $0x70] sm:$0xf] %vm224, 0
        %255 = vst.msk [vmem:[#allocation2 + $0x74] sm:$0x1] %vm227, 0
        %256 = vst.msk [vmem:[#allocation2 + $0x78] sm:$0xf] %vm224, 0
        %257 = vst.msk [vmem:[#allocation2 + $0x7c] sm:$0xf] %vm224, 0
        %258 = vst.msk [vmem:[#allocation2 + $0x80] sm:$0x1] %vm227, 0
        %259 = vst.msk [vmem:[#allocation2 + $0x84] sm:$0xf] %vm224, 0
        %260 = vst.msk [vmem:[#allocation2 + $0x88] sm:$0xf] %vm224, 0
        %261 = vst.msk [vmem:[#allocation2 + $0x8c] sm:$0x1] %vm227, 0
        %262 = vst.msk [vmem:[#allocation2 + $0x90] sm:$0xf] %vm224, 0
        %263 = vst.msk [vmem:[#allocation2 + $0x94] sm:$0xf] %vm224, 0
        %264 = vst.msk [vmem:[#allocation2 + $0x98] sm:$0x1] %vm227, 0
        %265 = vst.msk [vmem:[#allocation2 + $0x9c] sm:$0xf] %vm224, 0
        %266 = vst.msk [vmem:[#allocation2 + $0xa0] sm:$0xf] %vm224, 0
        %267 = vst.msk [vmem:[#allocation2 + $0xa4] sm:$0x1] %vm227, 0
        %268 = vst.msk [vmem:[#allocation2 + $0xa8] sm:$0xf] %vm224, 0
        %269 = vst.msk [vmem:[#allocation2 + $0xac] sm:$0xf] %vm224, 0
        %270 = vst.msk [vmem:[#allocation2 + $0xb0] sm:$0x1] %vm227, 0
        %271 = vst.msk [vmem:[#allocation2 + $0xb4] sm:$0xf] %vm224, 0
        %272 = vst.msk [vmem:[#allocation2 + $0xb8] sm:$0xf] %vm224, 0
        %273 = vst.msk [vmem:[#allocation2 + $0xbc] sm:$0x1] %vm227, 0
        %274 = vst.msk [vmem:[#allocation2 + $0xc0] sm:$0xf] %vm224, 0
        %275 = vst.msk [vmem:[#allocation2 + $0xc4] sm:$0xf] %vm224, 0
        %276 = vst.msk [vmem:[#allocation2 + $0xc8] sm:$0x1] %vm227, 0
        %277 = vst.msk [vmem:[#allocation2 + $0xcc] sm:$0xf] %vm224, 0
        %278 = vst.msk [vmem:[#allocation2 + $0xd0] sm:$0xf] %vm224, 0
        %279 = vst.msk [vmem:[#allocation2 + $0xd4] sm:$0x1] %vm227, 0
        %v280 = vld [vmem:[%s222] sm:$0xf]
        %v281 = vld [vmem:[%s222 + $0x4] sm:$0xf]
        %v282 = vld [vmem:[%s222 + $0x8] sm:$0xf]
        %v283 = vld [vmem:[%s222 + $0xc] sm:$0xf]
        %v284 = vld [vmem:[%s222 + $0x10] sm:$0xf]
        %v285 = vld [vmem:[%s222 + $0x14] sm:$0xf]
        %v286 = vld [vmem:[%s222 + $0x18] sm:$0xf]
        %v287 = vld [vmem:[%s222 + $0x1c] sm:$0xf]
        %v288 = vld [vmem:[%s222 + $0x20] sm:$0xf]
        %v289 = vld [vmem:[%s222 + $0x24] sm:$0xf]
        %v290 = vld [vmem:[%s222 + $0x28] sm:$0xf]
        %v291 = vld [vmem:[%s222 + $0x2c] sm:$0xf]
        %v292 = vld [vmem:[%s222 + $0x30] sm:$0xf]
        %v293 = vld [vmem:[%s222 + $0x34] sm:$0xf]
        %v294 = vld [vmem:[%s222 + $0x38] sm:$0xf]
        %v295 = vld [vmem:[%s222 + $0x3c] sm:$0xf]
        %v296 = vld [vmem:[%s222 + $0x40] sm:$0xf]
        %v297 = vld [vmem:[%s222 + $0x44] sm:$0xf]
        %v298 = vld [vmem:[%s222 + $0x48] sm:$0xf]
        %v299 = vld [vmem:[%s222 + $0x4c] sm:$0xf]
        %v300 = vld [vmem:[%s222 + $0x50] sm:$0xf]
        %v301 = vld [vmem:[%s222 + $0x54] sm:$0xf]
        %v302 = vld [vmem:[%s222 + $0x58] sm:$0xf]
        %v303 = vld [vmem:[%s222 + $0x5c] sm:$0xf]
        %v304 = vld [vmem:[%s222 + $0x60] sm:$0xf]
        %v305 = vld [vmem:[%s222 + $0x64] sm:$0xf]
        %v306 = vld [vmem:[%s222 + $0x68] sm:$0xf]
        %v307 = vld [vmem:[%s222 + $0x6c] sm:$0xf]
        %v308 = vld [vmem:[%s222 + $0x70] sm:$0xf]
        %v309 = vld [vmem:[%s222 + $0x74] sm:$0xf]
        %v310 = vld [vmem:[%s222 + $0x78] sm:$0xf]
        %v311 = vld [vmem:[%s222 + $0x7c] sm:$0xf]
        %vm312 = vsmask.f32 256
        %vm313 = vsmask.f32 4368
        %vm314 = vmor %vm312, %vm313
        %v316 = vshrl.u32 %v280, 16
        %v318 = vrot.slane %v316, 7
        %v319 = vshll.u32 %v280, 16
        %v321 = vor.u32 %v318, %v319
        %v322 = vrot.slane %v318, 4
        %v324 = vshrl.u32 %v281, 16
        %v326 = vrot.slane %v324, 7
        %v327 = vshll.u32 %v281, 16
        %v329 = vor.u32 %v326, %v327
        %v330 = vsel %vm314, %v322, %v329
        %v331 = vrot.slane %v326, 4
        %v333 = vshrl.u32 %v282, 16
        %v335 = vrot.slane %v333, 7
        %v336 = vshll.u32 %v282, 16
        %v338 = vor.u32 %v335, %v336
        %v339 = vrot.slane %v335, 4
        %v341 = vshrl.u32 %v283, 16
        %v343 = vrot.slane %v341, 7
        %v344 = vshll.u32 %v283, 16
        %v346 = vor.u32 %v343, %v344
        %v347 = vsel %vm314, %v339, %v346
        %v348 = vrot.slane %v343, 4
        %v350 = vshrl.u32 %v284, 16
        %v352 = vrot.slane %v350, 7
        %v353 = vshll.u32 %v284, 16
        %v355 = vor.u32 %v352, %v353
        %v356 = vrot.slane %v352, 4
        %v358 = vshrl.u32 %v285, 16
        %v360 = vrot.slane %v358, 7
        %v361 = vshll.u32 %v285, 16
        %v363 = vor.u32 %v360, %v361
        %v364 = vsel %vm314, %v356, %v363
        %v365 = vrot.slane %v360, 4
        %v367 = vshrl.u32 %v286, 16
        %v369 = vrot.slane %v367, 7
        %v370 = vshll.u32 %v286, 16
        %v372 = vor.u32 %v369, %v370
        %v373 = vrot.slane %v369, 4
        %v375 = vshrl.u32 %v287, 16
        %v377 = vrot.slane %v375, 7
        %v378 = vshll.u32 %v287, 16
        %v380 = vor.u32 %v377, %v378
        %v381 = vsel %vm314, %v373, %v380
        %v382 = vrot.slane %v377, 4
        %v384 = vshrl.u32 %v288, 16
        %v386 = vrot.slane %v384, 7
        %v387 = vshll.u32 %v288, 16
        %v389 = vor.u32 %v386, %v387
        %v390 = vrot.slane %v386, 4
        %v392 = vshrl.u32 %v289, 16
        %v394 = vrot.slane %v392, 7
        %v395 = vshll.u32 %v289, 16
        %v397 = vor.u32 %v394, %v395
        %v398 = vsel %vm314, %v390, %v397
        %v399 = vrot.slane %v394, 4
        %v401 = vshrl.u32 %v290, 16
        %v403 = vrot.slane %v401, 7
        %v404 = vshll.u32 %v290, 16
        %v406 = vor.u32 %v403, %v404
        %v407 = vrot.slane %v403, 4
        %v409 = vshrl.u32 %v291, 16
        %v411 = vrot.slane %v409, 7
        %v412 = vshll.u32 %v291, 16
        %v414 = vor.u32 %v411, %v412
        %v415 = vsel %vm314, %v407, %v414
        %v416 = vrot.slane %v411, 4
        %v418 = vshrl.u32 %v292, 16
        %v420 = vrot.slane %v418, 7
        %v421 = vshll.u32 %v292, 16
        %v423 = vor.u32 %v420, %v421
        %v424 = vrot.slane %v420, 4
        %v426 = vshrl.u32 %v293, 16
        %v428 = vrot.slane %v426, 7
        %v429 = vshll.u32 %v293, 16
        %v431 = vor.u32 %v428, %v429
        %v432 = vsel %vm314, %v424, %v431
        %v433 = vrot.slane %v428, 4
        %v435 = vshrl.u32 %v294, 16
        %v437 = vrot.slane %v435, 7
        %v438 = vshll.u32 %v294, 16
        %v440 = vor.u32 %v437, %v438
        %v441 = vrot.slane %v437, 4
        %v443 = vshrl.u32 %v295, 16
        %v445 = vrot.slane %v443, 7
        %v446 = vshll.u32 %v295, 16
        %v448 = vor.u32 %v445, %v446
        %v449 = vsel %vm314, %v441, %v448
        %v450 = vrot.slane %v445, 4
        %v452 = vshrl.u32 %v296, 16
        %v454 = vrot.slane %v452, 7
        %v455 = vshll.u32 %v296, 16
        %v457 = vor.u32 %v454, %v455
        %v458 = vrot.slane %v454, 4
        %v460 = vshrl.u32 %v297, 16
        %v462 = vrot.slane %v460, 7
        %v463 = vshll.u32 %v297, 16
        %v465 = vor.u32 %v462, %v463
        %v466 = vsel %vm314, %v458, %v465
        %v467 = vrot.slane %v462, 4
        %v469 = vshrl.u32 %v298, 16
        %v471 = vrot.slane %v469, 7
        %v472 = vshll.u32 %v298, 16
        %v474 = vor.u32 %v471, %v472
        %v475 = vrot.slane %v471, 4
        %v477 = vshrl.u32 %v299, 16
        %v479 = vrot.slane %v477, 7
        %v480 = vshll.u32 %v299, 16
        %v482 = vor.u32 %v479, %v480
        %v483 = vsel %vm314, %v475, %v482
        %v484 = vrot.slane %v479, 4
        %v486 = vshrl.u32 %v300, 16
        %v488 = vrot.slane %v486, 7
        %v489 = vshll.u32 %v300, 16
        %v491 = vor.u32 %v488, %v489
        %v492 = vrot.slane %v488, 4
        %v494 = vshrl.u32 %v301, 16
        %v496 = vrot.slane %v494, 7
        %v497 = vshll.u32 %v301, 16
        %v499 = vor.u32 %v496, %v497
        %v500 = vsel %vm314, %v492, %v499
        %v501 = vrot.slane %v496, 4
        %v503 = vshrl.u32 %v302, 16
        %v505 = vrot.slane %v503, 7
        %v506 = vshll.u32 %v302, 16
        %v508 = vor.u32 %v505, %v506
        %v509 = vrot.slane %v505, 4
        %v511 = vshrl.u32 %v303, 16
        %v513 = vrot.slane %v511, 7
        %v514 = vshll.u32 %v303, 16
        %v516 = vor.u32 %v513, %v514
        %v517 = vsel %vm314, %v509, %v516
        %v518 = vrot.slane %v513, 4
        %v520 = vshrl.u32 %v304, 16
        %v522 = vrot.slane %v520, 7
        %v523 = vshll.u32 %v304, 16
        %v525 = vor.u32 %v522, %v523
        %v526 = vrot.slane %v522, 4
        %v528 = vshrl.u32 %v305, 16
        %v530 = vrot.slane %v528, 7
        %v531 = vshll.u32 %v305, 16
        %v533 = vor.u32 %v530, %v531
        %v534 = vsel %vm314, %v526, %v533
        %v535 = vrot.slane %v530, 4
        %v537 = vshrl.u32 %v306, 16
        %v539 = vrot.slane %v537, 7
        %v540 = vshll.u32 %v306, 16
        %v542 = vor.u32 %v539, %v540
        %v543 = vrot.slane %v539, 4
        %v545 = vshrl.u32 %v307, 16
        %v547 = vrot.slane %v545, 7
        %v548 = vshll.u32 %v307, 16
        %v550 = vor.u32 %v547, %v548
        %v551 = vsel %vm314, %v543, %v550
        %v552 = vrot.slane %v547, 4
        %v554 = vshrl.u32 %v308, 16
        %v556 = vrot.slane %v554, 7
        %v557 = vshll.u32 %v308, 16
        %v559 = vor.u32 %v556, %v557
        %v560 = vrot.slane %v556, 4
        %v562 = vshrl.u32 %v309, 16
        %v564 = vrot.slane %v562, 7
        %v565 = vshll.u32 %v309, 16
        %v567 = vor.u32 %v564, %v565
        %v568 = vsel %vm314, %v560, %v567
        %v569 = vrot.slane %v564, 4
        %v571 = vshrl.u32 %v310, 16
        %v573 = vrot.slane %v571, 7
        %v574 = vshll.u32 %v310, 16
        %v576 = vor.u32 %v573, %v574
        %v577 = vrot.slane %v573, 4
        %v579 = vshrl.u32 %v311, 16
        %v581 = vrot.slane %v579, 7
        %v582 = vshll.u32 %v311, 16
        %v584 = vor.u32 %v581, %v582
        %v585 = vsel %vm314, %v577, %v584
        %v586 = vrot.slane %v581, 4
        %s635 = scalar_lea.vmem [#allocation2], 12
        %vm636 = vcmask 27648
        %vm637 = vsmask.f32 7938
        %vm638 = vmand %vm636, %vm637
        %v639 = vld [vmem:[%s635] sm:$0xf]
        %v640 = vsel %vm638, %v321, %v639
        %641 = vst [vmem:[%s635] sm:$0xf] %v640
        %642 = vst.msk [vmem:[%s635 + $0x4] sm:$0xf] %vm224, %v330
        %vm643 = vcmask 24576
        %vm644 = vmand %vm643, %vm312
        %v645 = vld [vmem:[%s635 + $0x8] sm:$0x1]
        %v646 = vsel %vm644, %v331, %v645
        %647 = vst [vmem:[%s635 + $0x8] sm:$0x1] %v646
        %v648 = vld [vmem:[%s635 + $0xc] sm:$0xf]
        %v649 = vsel %vm638, %v338, %v648
        %650 = vst [vmem:[%s635 + $0xc] sm:$0xf] %v649
        %651 = vst.msk [vmem:[%s635 + $0x10] sm:$0xf] %vm224, %v347
        %v652 = vld [vmem:[%s635 + $0x14] sm:$0x1]
        %v653 = vsel %vm644, %v348, %v652
        %654 = vst [vmem:[%s635 + $0x14] sm:$0x1] %v653
        %v655 = vld [vmem:[%s635 + $0x18] sm:$0xf]
        %v656 = vsel %vm638, %v355, %v655
        %657 = vst [vmem:[%s635 + $0x18] sm:$0xf] %v656
        %658 = vst.msk [vmem:[%s635 + $0x1c] sm:$0xf] %vm224, %v364
        %v659 = vld [vmem:[%s635 + $0x20] sm:$0x1]
        %v660 = vsel %vm644, %v365, %v659
        %661 = vst [vmem:[%s635 + $0x20] sm:$0x1] %v660
        %v662 = vld [vmem:[%s635 + $0x24] sm:$0xf]
        %v663 = vsel %vm638, %v372, %v662
        %664 = vst [vmem:[%s635 + $0x24] sm:$0xf] %v663
        %665 = vst.msk [vmem:[%s635 + $0x28] sm:$0xf] %vm224, %v381
        %v666 = vld [vmem:[%s635 + $0x2c] sm:$0x1]
        %v667 = vsel %vm644, %v382, %v666
        %668 = vst [vmem:[%s635 + $0x2c] sm:$0x1] %v667
        %v669 = vld [vmem:[%s635 + $0x30] sm:$0xf]
        %v670 = vsel %vm638, %v389, %v669
        %671 = vst [vmem:[%s635 + $0x30] sm:$0xf] %v670
        %672 = vst.msk [vmem:[%s635 + $0x34] sm:$0xf] %vm224, %v398
        %v673 = vld [vmem:[%s635 + $0x38] sm:$0x1]
        %v674 = vsel %vm644, %v399, %v673
        %675 = vst [vmem:[%s635 + $0x38] sm:$0x1] %v674
        %v676 = vld [vmem:[%s635 + $0x3c] sm:$0xf]
        %v677 = vsel %vm638, %v406, %v676
        %678 = vst [vmem:[%s635 + $0x3c] sm:$0xf] %v677
        %679 = vst.msk [vmem:[%s635 + $0x40] sm:$0xf] %vm224, %v415
        %v680 = vld [vmem:[%s635 + $0x44] sm:$0x1]
        %v681 = vsel %vm644, %v416, %v680
        %682 = vst [vmem:[%s635 + $0x44] sm:$0x1] %v681
        %v683 = vld [vmem:[%s635 + $0x48] sm:$0xf]
        %v684 = vsel %vm638, %v423, %v683
        %685 = vst [vmem:[%s635 + $0x48] sm:$0xf] %v684
        %686 = vst.msk [vmem:[%s635 + $0x4c] sm:$0xf] %vm224, %v432
        %v687 = vld [vmem:[%s635 + $0x50] sm:$0x1]
        %v688 = vsel %vm644, %v433, %v687
        %689 = vst [vmem:[%s635 + $0x50] sm:$0x1] %v688
        %v690 = vld [vmem:[%s635 + $0x54] sm:$0xf]
        %v691 = vsel %vm638, %v440, %v690
        %692 = vst [vmem:[%s635 + $0x54] sm:$0xf] %v691
        %693 = vst.msk [vmem:[%s635 + $0x58] sm:$0xf] %vm224, %v449
        %v694 = vld [vmem:[%s635 + $0x5c] sm:$0x1]
        %v695 = vsel %vm644, %v450, %v694
        %696 = vst [vmem:[%s635 + $0x5c] sm:$0x1] %v695
        %v697 = vld [vmem:[%s635 + $0x60] sm:$0xf]
        %v698 = vsel %vm638, %v457, %v697
        %699 = vst [vmem:[%s635 + $0x60] sm:$0xf] %v698
        %700 = vst.msk [vmem:[%s635 + $0x64] sm:$0xf] %vm224, %v466
        %v701 = vld [vmem:[%s635 + $0x68] sm:$0x1]
        %v702 = vsel %vm644, %v467, %v701
        %703 = vst [vmem:[%s635 + $0x68] sm:$0x1] %v702
        %v704 = vld [vmem:[%s635 + $0x6c] sm:$0xf]
        %v705 = vsel %vm638, %v474, %v704
        %706 = vst [vmem:[%s635 + $0x6c] sm:$0xf] %v705
        %707 = vst.msk [vmem:[%s635 + $0x70] sm:$0xf] %vm224, %v483
        %v708 = vld [vmem:[%s635 + $0x74] sm:$0x1]
        %v709 = vsel %vm644, %v484, %v708
        %710 = vst [vmem:[%s635 + $0x74] sm:$0x1] %v709
        %v711 = vld [vmem:[%s635 + $0x78] sm:$0xf]
        %v712 = vsel %vm638, %v491, %v711
        %713 = vst [vmem:[%s635 + $0x78] sm:$0xf] %v712
        %714 = vst.msk [vmem:[%s635 + $0x7c] sm:$0xf] %vm224, %v500
        %v715 = vld [vmem:[%s635 + $0x80] sm:$0x1]
        %v716 = vsel %vm644, %v501, %v715
        %717 = vst [vmem:[%s635 + $0x80] sm:$0x1] %v716
        %v718 = vld [vmem:[%s635 + $0x84] sm:$0xf]
        %v719 = vsel %vm638, %v508, %v718
        %720 = vst [vmem:[%s635 + $0x84] sm:$0xf] %v719
        %721 = vst.msk [vmem:[%s635 + $0x88] sm:$0xf] %vm224, %v517
        %v722 = vld [vmem:[%s635 + $0x8c] sm:$0x1]
        %v723 = vsel %vm644, %v518, %v722
        %724 = vst [vmem:[%s635 + $0x8c] sm:$0x1] %v723
        %v725 = vld [vmem:[%s635 + $0x90] sm:$0xf]
        %v726 = vsel %vm638, %v525, %v725
        %727 = vst [vmem:[%s635 + $0x90] sm:$0xf] %v726
        %728 = vst.msk [vmem:[%s635 + $0x94] sm:$0xf] %vm224, %v534
        %v729 = vld [vmem:[%s635 + $0x98] sm:$0x1]
        %v730 = vsel %vm644, %v535, %v729
        %731 = vst [vmem:[%s635 + $0x98] sm:$0x1] %v730
        %v732 = vld [vmem:[%s635 + $0x9c] sm:$0xf]
        %v733 = vsel %vm638, %v542, %v732
        %734 = vst [vmem:[%s635 + $0x9c] sm:$0xf] %v733
        %735 = vst.msk [vmem:[%s635 + $0xa0] sm:$0xf] %vm224, %v551
        %v736 = vld [vmem:[%s635 + $0xa4] sm:$0x1]
        %v737 = vsel %vm644, %v552, %v736
        %738 = vst [vmem:[%s635 + $0xa4] sm:$0x1] %v737
        %v739 = vld [vmem:[%s635 + $0xa8] sm:$0xf]
        %v740 = vsel %vm638, %v559, %v739
        %741 = vst [vmem:[%s635 + $0xa8] sm:$0xf] %v740
        %742 = vst.msk [vmem:[%s635 + $0xac] sm:$0xf] %vm224, %v568
        %v743 = vld [vmem:[%s635 + $0xb0] sm:$0x1]
        %v744 = vsel %vm644, %v569, %v743
        %745 = vst [vmem:[%s635 + $0xb0] sm:$0x1] %v744
        %v746 = vld [vmem:[%s635 + $0xb4] sm:$0xf]
        %v747 = vsel %vm638, %v576, %v746
        %748 = vst [vmem:[%s635 + $0xb4] sm:$0xf] %v747
        %749 = vst.msk [vmem:[%s635 + $0xb8] sm:$0xf] %vm224, %v585
        %v750 = vld [vmem:[%s635 + $0xbc] sm:$0x1]
        %v751 = vsel %vm644, %v586, %v750
        %752 = vst [vmem:[%s635 + $0xbc] sm:$0x1] %v751
        %v753 = vld [vmem:[#allocation2] sm:$0xf]
        %v754 = vld [vmem:[#allocation2 + $0x4] sm:$0xf]
        %v755 = vld [vmem:[#allocation2 + $0x8] sm:$0x1]
        %v756 = vld [vmem:[#allocation2 + $0xc] sm:$0xf]
        %v757 = vld [vmem:[#allocation2 + $0x10] sm:$0xf]
        %v758 = vld [vmem:[#allocation2 + $0x14] sm:$0x1]
        %v759 = vld [vmem:[#allocation2 + $0x18] sm:$0xf]
        %v760 = vld [vmem:[#allocation2 + $0x1c] sm:$0xf]
        %v761 = vld [vmem:[#allocation2 + $0x20] sm:$0x1]
        %v762 = vld [vmem:[#allocation2 + $0x24] sm:$0xf]
        %v763 = vld [vmem:[#allocation2 + $0x28] sm:$0xf]
        %v764 = vld [vmem:[#allocation2 + $0x2c] sm:$0x1]
        %v765 = vld [vmem:[#allocation2 + $0x30] sm:$0xf]
        %v766 = vld [vmem:[#allocation2 + $0x34] sm:$0xf]
        %v767 = vld [vmem:[#allocation2 + $0x38] sm:$0x1]
        %v768 = vld [vmem:[#allocation2 + $0x3c] sm:$0xf]
        %v769 = vld [vmem:[#allocation2 + $0x40] sm:$0xf]
        %v770 = vld [vmem:[#allocation2 + $0x44] sm:$0x1]
        %v771 = vld [vmem:[#allocation2 + $0x48] sm:$0xf]
        %v772 = vld [vmem:[#allocation2 + $0x4c] sm:$0xf]
        %v773 = vld [vmem:[#allocation2 + $0x50] sm:$0x1]
        %v774 = vld [vmem:[#allocation2 + $0x54] sm:$0xf]
        %v775 = vld [vmem:[#allocation2 + $0x58] sm:$0xf]
        %v776 = vld [vmem:[#allocation2 + $0x5c] sm:$0x1]
        %v777 = vld [vmem:[#allocation2 + $0x60] sm:$0xf]
        %v778 = vld [vmem:[#allocation2 + $0x64] sm:$0xf]
        %v779 = vld [vmem:[#allocation2 + $0x68] sm:$0x1]
        %v780 = vld [vmem:[#allocation2 + $0x6c] sm:$0xf]
        %v781 = vld [vmem:[#allocation2 + $0x70] sm:$0xf]
        %v782 = vld [vmem:[#allocation2 + $0x74] sm:$0x1]
        %v783 = vld [vmem:[#allocation2 + $0x78] sm:$0xf]
        %v784 = vld [vmem:[#allocation2 + $0x7c] sm:$0xf]
        %v785 = vld [vmem:[#allocation2 + $0x80] sm:$0x1]
        %v786 = vld [vmem:[#allocation2 + $0x84] sm:$0xf]
        %v787 = vld [vmem:[#allocation2 + $0x88] sm:$0xf]
        %v788 = vld [vmem:[#allocation2 + $0x8c] sm:$0x1]
        %v789 = vld [vmem:[#allocation2 + $0x90] sm:$0xf]
        %v790 = vld [vmem:[#allocation2 + $0x94] sm:$0xf]
        %v791 = vld [vmem:[#allocation2 + $0x98] sm:$0x1]
        %v792 = vld [vmem:[#allocation2 + $0x9c] sm:$0xf]
        %v793 = vld [vmem:[#allocation2 + $0xa0] sm:$0xf]
        %v794 = vld [vmem:[#allocation2 + $0xa4] sm:$0x1]
        %v795 = vld [vmem:[#allocation2 + $0xa8] sm:$0xf]
        %v796 = vld [vmem:[#allocation2 + $0xac] sm:$0xf]
        %v797 = vld [vmem:[#allocation2 + $0xb0] sm:$0x1]
        %v798 = vld [vmem:[#allocation2 + $0xb4] sm:$0xf]
        %v799 = vld [vmem:[#allocation2 + $0xb8] sm:$0xf]
        %v800 = vld [vmem:[#allocation2 + $0xbc] sm:$0x1]
        %v833 = vunpack.c.l.b16 %v753
        %v834 = vunpack.c.l.b16 %v754
        %v835 = vunpack.c.l.b16 %v756
        %v836 = vunpack.c.l.b16 %v757
        %v837 = vunpack.c.l.b16 %v759
        %v838 = vunpack.c.l.b16 %v760
        %v839 = vunpack.c.l.b16 %v762
        %v840 = vunpack.c.l.b16 %v763
        %v841 = vunpack.c.l.b16 %v765
        %v842 = vunpack.c.l.b16 %v766
        %v843 = vunpack.c.l.b16 %v768
        %v844 = vunpack.c.l.b16 %v769
        %v845 = vunpack.c.l.b16 %v771
        %v846 = vunpack.c.l.b16 %v772
        %v847 = vunpack.c.l.b16 %v774
        %v848 = vunpack.c.l.b16 %v775
        %v849 = vunpack.c.l.b16 %v777
        %v850 = vunpack.c.l.b16 %v778
        %v851 = vunpack.c.l.b16 %v780
        %v852 = vunpack.c.l.b16 %v781
        %v853 = vunpack.c.l.b16 %v783
        %v854 = vunpack.c.l.b16 %v784
        %v855 = vunpack.c.l.b16 %v786
        %v856 = vunpack.c.l.b16 %v787
        %v857 = vunpack.c.l.b16 %v789
        %v858 = vunpack.c.l.b16 %v790
        %v859 = vunpack.c.l.b16 %v792
        %v860 = vunpack.c.l.b16 %v793
        %v861 = vunpack.c.l.b16 %v795
        %v862 = vunpack.c.l.b16 %v796
        %v863 = vunpack.c.l.b16 %v798
        %v864 = vunpack.c.l.b16 %v799
        %v865 = vpack.c.b16 %v834, %v833
        %v866 = vpack.c.b16 %v836, %v835
        %v867 = vpack.c.b16 %v838, %v837
        %v868 = vpack.c.b16 %v840, %v839
        %v869 = vpack.c.b16 %v842, %v841
        %v870 = vpack.c.b16 %v844, %v843
        %v871 = vpack.c.b16 %v846, %v845
        %v872 = vpack.c.b16 %v848, %v847
        %v873 = vpack.c.b16 %v850, %v849
        %v874 = vpack.c.b16 %v852, %v851
        %v875 = vpack.c.b16 %v854, %v853
        %v876 = vpack.c.b16 %v856, %v855
        %v877 = vpack.c.b16 %v858, %v857
        %v878 = vpack.c.b16 %v860, %v859
        %v879 = vpack.c.b16 %v862, %v861
        %v880 = vpack.c.b16 %v864, %v863
        %v897 = vunpack.c.l.b16 %v755
        %v898 = vunpack.c.l.b16 %v758
        %v899 = vunpack.c.l.b16 %v761
        %v900 = vunpack.c.l.b16 %v764
        %v901 = vunpack.c.l.b16 %v767
        %v902 = vunpack.c.l.b16 %v770
        %v903 = vunpack.c.l.b16 %v773
        %v904 = vunpack.c.l.b16 %v776
        %v905 = vunpack.c.l.b16 %v779
        %v906 = vunpack.c.l.b16 %v782
        %v907 = vunpack.c.l.b16 %v785
        %v908 = vunpack.c.l.b16 %v788
        %v909 = vunpack.c.l.b16 %v791
        %v910 = vunpack.c.l.b16 %v794
        %v911 = vunpack.c.l.b16 %v797
        %v912 = vunpack.c.l.b16 %v800
        %v913 = vpack.c.b16 %v897, %v897
        %v914 = vpack.c.b16 %v898, %v898
        %v915 = vpack.c.b16 %v899, %v899
        %v916 = vpack.c.b16 %v900, %v900
        %v917 = vpack.c.b16 %v901, %v901
        %v918 = vpack.c.b16 %v902, %v902
        %v919 = vpack.c.b16 %v903, %v903
        %v920 = vpack.c.b16 %v904, %v904
        %v921 = vpack.c.b16 %v905, %v905
        %v922 = vpack.c.b16 %v906, %v906
        %v923 = vpack.c.b16 %v907, %v907
        %v924 = vpack.c.b16 %v908, %v908
        %v925 = vpack.c.b16 %v909, %v909
        %v926 = vpack.c.b16 %v910, %v910
        %v927 = vpack.c.b16 %v911, %v911
        %v928 = vpack.c.b16 %v912, %v912
        %vm929 = vsmask.f32 7424
        %v931 = vshrl.u32 %v865, 16
        %v933 = vshll.u32 %v865, 16
        %v935 = vrot.slane %v933, 1
        %v936 = vor.u32 %v931, %v935
        %v938 = vshll.u32 %v913, 16
        %v940 = vrot.slane %v938, 1
        %v941 = vsel %vm929, %v936, %v940
        %v943 = vshrl.u32 %v866, 16
        %v945 = vshll.u32 %v866, 16
        %v947 = vrot.slane %v945, 1
        %v948 = vor.u32 %v943, %v947
        %v950 = vshll.u32 %v914, 16
        %v952 = vrot.slane %v950, 1
        %v953 = vsel %vm929, %v948, %v952
        %v955 = vshrl.u32 %v867, 16
        %v957 = vshll.u32 %v867, 16
        %v959 = vrot.slane %v957, 1
        %v960 = vor.u32 %v955, %v959
        %v962 = vshll.u32 %v915, 16
        %v964 = vrot.slane %v962, 1
        %v965 = vsel %vm929, %v960, %v964
        %v967 = vshrl.u32 %v868, 16
        %v969 = vshll.u32 %v868, 16
        %v971 = vrot.slane %v969, 1
        %v972 = vor.u32 %v967, %v971
        %v974 = vshll.u32 %v916, 16
        %v976 = vrot.slane %v974, 1
        %v977 = vsel %vm929, %v972, %v976
        %v979 = vshrl.u32 %v869, 16
        %v981 = vshll.u32 %v869, 16
        %v983 = vrot.slane %v981, 1
        %v984 = vor.u32 %v979, %v983
        %v986 = vshll.u32 %v917, 16
        %v988 = vrot.slane %v986, 1
        %v989 = vsel %vm929, %v984, %v988
        %v991 = vshrl.u32 %v870, 16
        %v993 = vshll.u32 %v870, 16
        %v995 = vrot.slane %v993, 1
        %v996 = vor.u32 %v991, %v995
        %v998 = vshll.u32 %v918, 16
        %v1000 = vrot.slane %v998, 1
        %v1001 = vsel %vm929, %v996, %v1000
        %v1003 = vshrl.u32 %v871, 16
        %v1005 = vshll.u32 %v871, 16
        %v1007 = vrot.slane %v1005, 1
        %v1008 = vor.u32 %v1003, %v1007
        %v1010 = vshll.u32 %v919, 16
        %v1012 = vrot.slane %v1010, 1
        %v1013 = vsel %vm929, %v1008, %v1012
        %v1015 = vshrl.u32 %v872, 16
        %v1017 = vshll.u32 %v872, 16
        %v1019 = vrot.slane %v1017, 1
        %v1020 = vor.u32 %v1015, %v1019
        %v1022 = vshll.u32 %v920, 16
        %v1024 = vrot.slane %v1022, 1
        %v1025 = vsel %vm929, %v1020, %v1024
        %v1027 = vshrl.u32 %v873, 16
        %v1029 = vshll.u32 %v873, 16
        %v1031 = vrot.slane %v1029, 1
        %v1032 = vor.u32 %v1027, %v1031
        %v1034 = vshll.u32 %v921, 16
        %v1036 = vrot.slane %v1034, 1
        %v1037 = vsel %vm929, %v1032, %v1036
        %v1039 = vshrl.u32 %v874, 16
        %v1041 = vshll.u32 %v874, 16
        %v1043 = vrot.slane %v1041, 1
        %v1044 = vor.u32 %v1039, %v1043
        %v1046 = vshll.u32 %v922, 16
        %v1048 = vrot.slane %v1046, 1
        %v1049 = vsel %vm929, %v1044, %v1048
        %v1051 = vshrl.u32 %v875, 16
        %v1053 = vshll.u32 %v875, 16
        %v1055 = vrot.slane %v1053, 1
        %v1056 = vor.u32 %v1051, %v1055
        %v1058 = vshll.u32 %v923, 16
        %v1060 = vrot.slane %v1058, 1
        %v1061 = vsel %vm929, %v1056, %v1060
        %v1063 = vshrl.u32 %v876, 16
        %v1065 = vshll.u32 %v876, 16
        %v1067 = vrot.slane %v1065, 1
        %v1068 = vor.u32 %v1063, %v1067
        %v1070 = vshll.u32 %v924, 16
        %v1072 = vrot.slane %v1070, 1
        %v1073 = vsel %vm929, %v1068, %v1072
        %v1075 = vshrl.u32 %v877, 16
        %v1077 = vshll.u32 %v877, 16
        %v1079 = vrot.slane %v1077, 1
        %v1080 = vor.u32 %v1075, %v1079
        %v1082 = vshll.u32 %v925, 16
        %v1084 = vrot.slane %v1082, 1
        %v1085 = vsel %vm929, %v1080, %v1084
        %v1087 = vshrl.u32 %v878, 16
        %v1089 = vshll.u32 %v878, 16
        %v1091 = vrot.slane %v1089, 1
        %v1092 = vor.u32 %v1087, %v1091
        %v1094 = vshll.u32 %v926, 16
        %v1096 = vrot.slane %v1094, 1
        %v1097 = vsel %vm929, %v1092, %v1096
        %v1099 = vshrl.u32 %v879, 16
        %v1101 = vshll.u32 %v879, 16
        %v1103 = vrot.slane %v1101, 1
        %v1104 = vor.u32 %v1099, %v1103
        %v1106 = vshll.u32 %v927, 16
        %v1108 = vrot.slane %v1106, 1
        %v1109 = vsel %vm929, %v1104, %v1108
        %v1111 = vshrl.u32 %v880, 16
        %v1113 = vshll.u32 %v880, 16
        %v1115 = vrot.slane %v1113, 1
        %v1116 = vor.u32 %v1111, %v1115
        %v1118 = vshll.u32 %v928, 16
        %v1120 = vrot.slane %v1118, 1
        %v1121 = vsel %vm929, %v1116, %v1120
        %1122 = vrot.lane.b32.xlu0 %v941, 4
        %v1123 = vpop.permute.xlu0 %1122
        %1124 = vrot.lane.b32.xlu0 %v953, 4
        %v1125 = vpop.permute.xlu0 %1124
        %1126 = vrot.lane.b32.xlu0 %v965, 4
        %v1127 = vpop.permute.xlu0 %1126
        %1128 = vrot.lane.b32.xlu0 %v977, 4
        %v1129 = vpop.permute.xlu0 %1128
        %1130 = vrot.lane.b32.xlu0 %v989, 4
        %v1131 = vpop.permute.xlu0 %1130
        %1132 = vrot.lane.b32.xlu0 %v1001, 4
        %v1133 = vpop.permute.xlu0 %1132
        %1134 = vrot.lane.b32.xlu0 %v1013, 4
        %v1135 = vpop.permute.xlu0 %1134
        %1136 = vrot.lane.b32.xlu0 %v1025, 4
        %v1137 = vpop.permute.xlu0 %1136
        %1138 = vrot.lane.b32.xlu0 %v1037, 4
        %v1139 = vpop.permute.xlu0 %1138
        %1140 = vrot.lane.b32.xlu0 %v1049, 4
        %v1141 = vpop.permute.xlu0 %1140
        %1142 = vrot.lane.b32.xlu0 %v1061, 4
        %v1143 = vpop.permute.xlu0 %1142
        %1144 = vrot.lane.b32.xlu0 %v1073, 4
        %v1145 = vpop.permute.xlu0 %1144
        %1146 = vrot.lane.b32.xlu0 %v1085, 4
        %v1147 = vpop.permute.xlu0 %1146
        %1148 = vrot.lane.b32.xlu0 %v1097, 4
        %v1149 = vpop.permute.xlu0 %1148
        %1150 = vrot.lane.b32.xlu0 %v1109, 4
        %v1151 = vpop.permute.xlu0 %1150
        %1152 = vrot.lane.b32.xlu0 %v1121, 4
        %v1153 = vpop.permute.xlu0 %1152
        %vm1154 = vcmask 1046528
        %v1155 = vrot.slane %v865, 1
        %v1156 = vrot.slane %v913, 1
        %v1157 = vsel %vm1154, %v1155, %v1156
        %v1158 = vrot.slane %v866, 1
        %v1159 = vrot.slane %v914, 1
        %v1160 = vsel %vm1154, %v1158, %v1159
        %v1161 = vrot.slane %v867, 1
        %v1162 = vrot.slane %v915, 1
        %v1163 = vsel %vm1154, %v1161, %v1162
        %v1164 = vrot.slane %v868, 1
        %v1165 = vrot.slane %v916, 1
        %v1166 = vsel %vm1154, %v1164, %v1165
        %v1167 = vrot.slane %v869, 1
        %v1168 = vrot.slane %v917, 1
        %v1169 = vsel %vm1154, %v1167, %v1168
        %v1170 = vrot.slane %v870, 1
        %v1171 = vrot.slane %v918, 1
        %v1172 = vsel %vm1154, %v1170, %v1171
        %v1173 = vrot.slane %v871, 1
        %v1174 = vrot.slane %v919, 1
        %v1175 = vsel %vm1154, %v1173, %v1174
        %v1176 = vrot.slane %v872, 1
        %v1177 = vrot.slane %v920, 1
        %v1178 = vsel %vm1154, %v1176, %v1177
        %v1179 = vrot.slane %v873, 1
        %v1180 = vrot.slane %v921, 1
        %v1181 = vsel %vm1154, %v1179, %v1180
        %v1182 = vrot.slane %v874, 1
        %v1183 = vrot.slane %v922, 1
        %v1184 = vsel %vm1154, %v1182, %v1183
        %v1185 = vrot.slane %v875, 1
        %v1186 = vrot.slane %v923, 1
        %v1187 = vsel %vm1154, %v1185, %v1186
        %v1188 = vrot.slane %v876, 1
        %v1189 = vrot.slane %v924, 1
        %v1190 = vsel %vm1154, %v1188, %v1189
        %v1191 = vrot.slane %v877, 1
        %v1192 = vrot.slane %v925, 1
        %v1193 = vsel %vm1154, %v1191, %v1192
        %v1194 = vrot.slane %v878, 1
        %v1195 = vrot.slane %v926, 1
        %v1196 = vsel %vm1154, %v1194, %v1195
        %v1197 = vrot.slane %v879, 1
        %v1198 = vrot.slane %v927, 1
        %v1199 = vsel %vm1154, %v1197, %v1198
        %v1200 = vrot.slane %v880, 1
        %v1201 = vrot.slane %v928, 1
        %v1202 = vsel %vm1154, %v1200, %v1201
        %1203 = vrot.lane.b32.xlu0 %v1157, 8
        %v1204 = vpop.permute.xlu0 %1203
        %1205 = vrot.lane.b32.xlu0 %v1160, 8
        %v1206 = vpop.permute.xlu0 %1205
        %1207 = vrot.lane.b32.xlu0 %v1163, 8
        %v1208 = vpop.permute.xlu0 %1207
        %1209 = vrot.lane.b32.xlu0 %v1166, 8
        %v1210 = vpop.permute.xlu0 %1209
        %1211 = vrot.lane.b32.xlu0 %v1169, 8
        %v1212 = vpop.permute.xlu0 %1211
        %1213 = vrot.lane.b32.xlu0 %v1172, 8
        %v1214 = vpop.permute.xlu0 %1213
        %1215 = vrot.lane.b32.xlu0 %v1175, 8
        %v1216 = vpop.permute.xlu0 %1215
        %1217 = vrot.lane.b32.xlu0 %v1178, 8
        %v1218 = vpop.permute.xlu0 %1217
        %1219 = vrot.lane.b32.xlu0 %v1181, 8
        %v1220 = vpop.permute.xlu0 %1219
        %1221 = vrot.lane.b32.xlu0 %v1184, 8
        %v1222 = vpop.permute.xlu0 %1221
        %1223 = vrot.lane.b32.xlu0 %v1187, 8
        %v1224 = vpop.permute.xlu0 %1223
        %1225 = vrot.lane.b32.xlu0 %v1190, 8
        %v1226 = vpop.permute.xlu0 %1225
        %1227 = vrot.lane.b32.xlu0 %v1193, 8
        %v1228 = vpop.permute.xlu0 %1227
        %1229 = vrot.lane.b32.xlu0 %v1196, 8
        %v1230 = vpop.permute.xlu0 %1229
        %1231 = vrot.lane.b32.xlu0 %v1199, 8
        %v1232 = vpop.permute.xlu0 %1231
        %1233 = vrot.lane.b32.xlu0 %v1202, 8
        %v1234 = vpop.permute.xlu0 %1233
        %vm1235 = vcmask 31744
        %v1237 = vsel %vm1235, %v865, %v1123
        %v1239 = vsel %vm1235, %v866, %v1125
        %v1241 = vsel %vm1235, %v867, %v1127
        %v1243 = vsel %vm1235, %v868, %v1129
        %v1245 = vsel %vm1235, %v869, %v1131
        %v1247 = vsel %vm1235, %v870, %v1133
        %v1249 = vsel %vm1235, %v871, %v1135
        %v1251 = vsel %vm1235, %v872, %v1137
        %v1253 = vsel %vm1235, %v873, %v1139
        %v1255 = vsel %vm1235, %v874, %v1141
        %v1257 = vsel %vm1235, %v875, %v1143
        %v1259 = vsel %vm1235, %v876, %v1145
        %v1261 = vsel %vm1235, %v877, %v1147
        %v1263 = vsel %vm1235, %v878, %v1149
        %v1265 = vsel %vm1235, %v879, %v1151
        %v1267 = vsel %vm1235, %v880, %v1153
        %vm1268 = vcmask 64512
        %v1270 = vsel %vm1268, %v1237, %v1204
        %v1272 = vsel %vm1268, %v1239, %v1206
        %v1274 = vsel %vm1268, %v1241, %v1208
        %v1276 = vsel %vm1268, %v1243, %v1210
        %v1278 = vsel %vm1268, %v1245, %v1212
        %v1280 = vsel %vm1268, %v1247, %v1214
        %v1282 = vsel %vm1268, %v1249, %v1216
        %v1284 = vsel %vm1268, %v1251, %v1218
        %v1286 = vsel %vm1268, %v1253, %v1220
        %v1288 = vsel %vm1268, %v1255, %v1222
        %v1290 = vsel %vm1268, %v1257, %v1224
        %v1292 = vsel %vm1268, %v1259, %v1226
        %v1294 = vsel %vm1268, %v1261, %v1228
        %v1296 = vsel %vm1268, %v1263, %v1230
        %v1298 = vsel %vm1268, %v1265, %v1232
        %v1300 = vsel %vm1268, %v1267, %v1234
        %v1301 = vld [vmem:[%s1] sm:$0xf]
        %v1302 = vld [vmem:[%s1 + $0x4] sm:$0x3]
        %v1303 = vld [vmem:[%s635] sm:$0xf]
        %v1304 = vld [vmem:[%s635 + $0x4] sm:$0xf]
        %v1305 = vld [vmem:[%s635 + $0x8] sm:$0x1]
        %v1306 = vld [vmem:[%s635 + $0xc] sm:$0xf]
        %v1307 = vld [vmem:[%s635 + $0x10] sm:$0xf]
        %v1308 = vld [vmem:[%s635 + $0x14] sm:$0x1]
        %v1309 = vld [vmem:[%s635 + $0x18] sm:$0xf]
        %v1310 = vld [vmem:[%s635 + $0x1c] sm:$0xf]
        %v1311 = vld [vmem:[%s635 + $0x20] sm:$0x1]
        %v1312 = vld [vmem:[%s635 + $0x24] sm:$0xf]
        %v1313 = vld [vmem:[%s635 + $0x28] sm:$0xf]
        %v1314 = vld [vmem:[%s635 + $0x2c] sm:$0x1]
        %v1315 = vld [vmem:[%s635 + $0x30] sm:$0xf]
        %v1316 = vld [vmem:[%s635 + $0x34] sm:$0xf]
        %v1317 = vld [vmem:[%s635 + $0x38] sm:$0x1]
        %v1318 = vld [vmem:[%s635 + $0x3c] sm:$0xf]
        %v1319 = vld [vmem:[%s635 + $0x40] sm:$0xf]
        %v1320 = vld [vmem:[%s635 + $0x44] sm:$0x1]
        %v1321 = vld [vmem:[%s635 + $0x48] sm:$0xf]
        %v1322 = vld [vmem:[%s635 + $0x4c] sm:$0xf]
        %v1323 = vld [vmem:[%s635 + $0x50] sm:$0x1]
        %v1324 = vld [vmem:[%s635 + $0x54] sm:$0xf]
        %v1325 = vld [vmem:[%s635 + $0x58] sm:$0xf]
        %v1326 = vld [vmem:[%s635 + $0x5c] sm:$0x1]
        %v1327 = vld [vmem:[%s635 + $0x60] sm:$0xf]
        %v1328 = vld [vmem:[%s635 + $0x64] sm:$0xf]
        %v1329 = vld [vmem:[%s635 + $0x68] sm:$0x1]
        %v1330 = vld [vmem:[%s635 + $0x6c] sm:$0xf]
        %v1331 = vld [vmem:[%s635 + $0x70] sm:$0xf]
        %v1332 = vld [vmem:[%s635 + $0x74] sm:$0x1]
        %v1333 = vld [vmem:[%s635 + $0x78] sm:$0xf]
        %v1334 = vld [vmem:[%s635 + $0x7c] sm:$0xf]
        %v1335 = vld [vmem:[%s635 + $0x80] sm:$0x1]
        %v1336 = vld [vmem:[%s635 + $0x84] sm:$0xf]
        %v1337 = vld [vmem:[%s635 + $0x88] sm:$0xf]
        %v1338 = vld [vmem:[%s635 + $0x8c] sm:$0x1]
        %v1339 = vld [vmem:[%s635 + $0x90] sm:$0xf]
        %v1340 = vld [vmem:[%s635 + $0x94] sm:$0xf]
        %v1341 = vld [vmem:[%s635 + $0x98] sm:$0x1]
        %v1342 = vld [vmem:[%s635 + $0x9c] sm:$0xf]
        %v1343 = vld [vmem:[%s635 + $0xa0] sm:$0xf]
        %v1344 = vld [vmem:[%s635 + $0xa4] sm:$0x1]
        %v1345 = vld [vmem:[%s635 + $0xa8] sm:$0xf]
        %v1346 = vld [vmem:[%s635 + $0xac] sm:$0xf]
        %v1347 = vld [vmem:[%s635 + $0xb0] sm:$0x1]
        %v1348 = vld [vmem:[%s635 + $0xb4] sm:$0xf]
        %v1349 = vld [vmem:[%s635 + $0xb8] sm:$0xf]
        %v1350 = vld [vmem:[%s635 + $0xbc] sm:$0x1]
        %v1383 = vunpack.c.l.b16 %v1303
        %v1384 = vunpack.c.l.b16 %v1304
        %v1385 = vunpack.c.l.b16 %v1306
        %v1386 = vunpack.c.l.b16 %v1307
        %v1387 = vunpack.c.l.b16 %v1309
        %v1388 = vunpack.c.l.b16 %v1310
        %v1389 = vunpack.c.l.b16 %v1312
        %v1390 = vunpack.c.l.b16 %v1313
        %v1391 = vunpack.c.l.b16 %v1315
        %v1392 = vunpack.c.l.b16 %v1316
        %v1393 = vunpack.c.l.b16 %v1318
        %v1394 = vunpack.c.l.b16 %v1319
        %v1395 = vunpack.c.l.b16 %v1321
        %v1396 = vunpack.c.l.b16 %v1322
        %v1397 = vunpack.c.l.b16 %v1324
        %v1398 = vunpack.c.l.b16 %v1325
        %v1399 = vunpack.c.l.b16 %v1327
        %v1400 = vunpack.c.l.b16 %v1328
        %v1401 = vunpack.c.l.b16 %v1330
        %v1402 = vunpack.c.l.b16 %v1331
        %v1403 = vunpack.c.l.b16 %v1333
        %v1404 = vunpack.c.l.b16 %v1334
        %v1405 = vunpack.c.l.b16 %v1336
        %v1406 = vunpack.c.l.b16 %v1337
        %v1407 = vunpack.c.l.b16 %v1339
        %v1408 = vunpack.c.l.b16 %v1340
        %v1409 = vunpack.c.l.b16 %v1342
        %v1410 = vunpack.c.l.b16 %v1343
        %v1411 = vunpack.c.l.b16 %v1345
        %v1412 = vunpack.c.l.b16 %v1346
        %v1413 = vunpack.c.l.b16 %v1348
        %v1414 = vunpack.c.l.b16 %v1349
        %v1415 = vpack.c.b16 %v1384, %v1383
        %v1416 = vpack.c.b16 %v1386, %v1385
        %v1417 = vpack.c.b16 %v1388, %v1387
        %v1418 = vpack.c.b16 %v1390, %v1389
        %v1419 = vpack.c.b16 %v1392, %v1391
        %v1420 = vpack.c.b16 %v1394, %v1393
        %v1421 = vpack.c.b16 %v1396, %v1395
        %v1422 = vpack.c.b16 %v1398, %v1397
        %v1423 = vpack.c.b16 %v1400, %v1399
        %v1424 = vpack.c.b16 %v1402, %v1401
        %v1425 = vpack.c.b16 %v1404, %v1403
        %v1426 = vpack.c.b16 %v1406, %v1405
        %v1427 = vpack.c.b16 %v1408, %v1407
        %v1428 = vpack.c.b16 %v1410, %v1409
        %v1429 = vpack.c.b16 %v1412, %v1411
        %v1430 = vpack.c.b16 %v1414, %v1413
        %v1447 = vunpack.c.l.b16 %v1305
        %v1448 = vunpack.c.l.b16 %v1308
        %v1449 = vunpack.c.l.b16 %v1311
        %v1450 = vunpack.c.l.b16 %v1314
        %v1451 = vunpack.c.l.b16 %v1317
        %v1452 = vunpack.c.l.b16 %v1320
        %v1453 = vunpack.c.l.b16 %v1323
        %v1454 = vunpack.c.l.b16 %v1326
        %v1455 = vunpack.c.l.b16 %v1329
        %v1456 = vunpack.c.l.b16 %v1332
        %v1457 = vunpack.c.l.b16 %v1335
        %v1458 = vunpack.c.l.b16 %v1338
        %v1459 = vunpack.c.l.b16 %v1341
        %v1460 = vunpack.c.l.b16 %v1344
        %v1461 = vunpack.c.l.b16 %v1347
        %v1462 = vunpack.c.l.b16 %v1350
        %v1463 = vpack.c.b16 %v1447, %v1447
        %v1464 = vpack.c.b16 %v1448, %v1448
        %v1465 = vpack.c.b16 %v1449, %v1449
        %v1466 = vpack.c.b16 %v1450, %v1450
        %v1467 = vpack.c.b16 %v1451, %v1451
        %v1468 = vpack.c.b16 %v1452, %v1452
        %v1469 = vpack.c.b16 %v1453, %v1453
        %v1470 = vpack.c.b16 %v1454, %v1454
        %v1471 = vpack.c.b16 %v1455, %v1455
        %v1472 = vpack.c.b16 %v1456, %v1456
        %v1473 = vpack.c.b16 %v1457, %v1457
        %v1474 = vpack.c.b16 %v1458, %v1458
        %v1475 = vpack.c.b16 %v1459, %v1459
        %v1476 = vpack.c.b16 %v1460, %v1460
        %v1477 = vpack.c.b16 %v1461, %v1461
        %v1478 = vpack.c.b16 %v1462, %v1462
        %v1480 = vshrl.u32 %v1415, 16
        %v1482 = vshll.u32 %v1415, 16
        %v1484 = vrot.slane %v1482, 1
        %v1485 = vor.u32 %v1480, %v1484
        %v1487 = vshll.u32 %v1463, 16
        %v1489 = vrot.slane %v1487, 1
        %v1490 = vsel %vm929, %v1485, %v1489
        %v1492 = vshrl.u32 %v1416, 16
        %v1494 = vshll.u32 %v1416, 16
        %v1496 = vrot.slane %v1494, 1
        %v1497 = vor.u32 %v1492, %v1496
        %v1499 = vshll.u32 %v1464, 16
        %v1501 = vrot.slane %v1499, 1
        %v1502 = vsel %vm929, %v1497, %v1501
        %v1504 = vshrl.u32 %v1417, 16
        %v1506 = vshll.u32 %v1417, 16
        %v1508 = vrot.slane %v1506, 1
        %v1509 = vor.u32 %v1504, %v1508
        %v1511 = vshll.u32 %v1465, 16
        %v1513 = vrot.slane %v1511, 1
        %v1514 = vsel %vm929, %v1509, %v1513
        %v1516 = vshrl.u32 %v1418, 16
        %v1518 = vshll.u32 %v1418, 16
        %v1520 = vrot.slane %v1518, 1
        %v1521 = vor.u32 %v1516, %v1520
        %v1523 = vshll.u32 %v1466, 16
        %v1525 = vrot.slane %v1523, 1
        %v1526 = vsel %vm929, %v1521, %v1525
        %v1528 = vshrl.u32 %v1419, 16
        %v1530 = vshll.u32 %v1419, 16
        %v1532 = vrot.slane %v1530, 1
        %v1533 = vor.u32 %v1528, %v1532
        %v1535 = vshll.u32 %v1467, 16
        %v1537 = vrot.slane %v1535, 1
        %v1538 = vsel %vm929, %v1533, %v1537
        %v1540 = vshrl.u32 %v1420, 16
        %v1542 = vshll.u32 %v1420, 16
        %v1544 = vrot.slane %v1542, 1
        %v1545 = vor.u32 %v1540, %v1544
        %v1547 = vshll.u32 %v1468, 16
        %v1549 = vrot.slane %v1547, 1
        %v1550 = vsel %vm929, %v1545, %v1549
        %v1552 = vshrl.u32 %v1421, 16
        %v1554 = vshll.u32 %v1421, 16
        %v1556 = vrot.slane %v1554, 1
        %v1557 = vor.u32 %v1552, %v1556
        %v1559 = vshll.u32 %v1469, 16
        %v1561 = vrot.slane %v1559, 1
        %v1562 = vsel %vm929, %v1557, %v1561
        %v1564 = vshrl.u32 %v1422, 16
        %v1566 = vshll.u32 %v1422, 16
        %v1568 = vrot.slane %v1566, 1
        %v1569 = vor.u32 %v1564, %v1568
        %v1571 = vshll.u32 %v1470, 16
        %v1573 = vrot.slane %v1571, 1
        %v1574 = vsel %vm929, %v1569, %v1573
        %v1576 = vshrl.u32 %v1423, 16
        %v1578 = vshll.u32 %v1423, 16
        %v1580 = vrot.slane %v1578, 1
        %v1581 = vor.u32 %v1576, %v1580
        %v1583 = vshll.u32 %v1471, 16
        %v1585 = vrot.slane %v1583, 1
        %v1586 = vsel %vm929, %v1581, %v1585
        %v1588 = vshrl.u32 %v1424, 16
        %v1590 = vshll.u32 %v1424, 16
        %v1592 = vrot.slane %v1590, 1
        %v1593 = vor.u32 %v1588, %v1592
        %v1595 = vshll.u32 %v1472, 16
        %v1597 = vrot.slane %v1595, 1
        %v1598 = vsel %vm929, %v1593, %v1597
        %v1600 = vshrl.u32 %v1425, 16
        %v1602 = vshll.u32 %v1425, 16
        %v1604 = vrot.slane %v1602, 1
        %v1605 = vor.u32 %v1600, %v1604
        %v1607 = vshll.u32 %v1473, 16
        %v1609 = vrot.slane %v1607, 1
        %v1610 = vsel %vm929, %v1605, %v1609
        %v1612 = vshrl.u32 %v1426, 16
        %v1614 = vshll.u32 %v1426, 16
        %v1616 = vrot.slane %v1614, 1
        %v1617 = vor.u32 %v1612, %v1616
        %v1619 = vshll.u32 %v1474, 16
        %v1621 = vrot.slane %v1619, 1
        %v1622 = vsel %vm929, %v1617, %v1621
        %v1624 = vshrl.u32 %v1427, 16
        %v1626 = vshll.u32 %v1427, 16
        %v1628 = vrot.slane %v1626, 1
        %v1629 = vor.u32 %v1624, %v1628
        %v1631 = vshll.u32 %v1475, 16
        %v1633 = vrot.slane %v1631, 1
        %v1634 = vsel %vm929, %v1629, %v1633
        %v1636 = vshrl.u32 %v1428, 16
        %v1638 = vshll.u32 %v1428, 16
        %v1640 = vrot.slane %v1638, 1
        %v1641 = vor.u32 %v1636, %v1640
        %v1643 = vshll.u32 %v1476, 16
        %v1645 = vrot.slane %v1643, 1
        %v1646 = vsel %vm929, %v1641, %v1645
        %v1648 = vshrl.u32 %v1429, 16
        %v1650 = vshll.u32 %v1429, 16
        %v1652 = vrot.slane %v1650, 1
        %v1653 = vor.u32 %v1648, %v1652
        %v1655 = vshll.u32 %v1477, 16
        %v1657 = vrot.slane %v1655, 1
        %v1658 = vsel %vm929, %v1653, %v1657
        %v1660 = vshrl.u32 %v1430, 16
        %v1662 = vshll.u32 %v1430, 16
        %v1664 = vrot.slane %v1662, 1
        %v1665 = vor.u32 %v1660, %v1664
        %v1667 = vshll.u32 %v1478, 16
        %v1669 = vrot.slane %v1667, 1
        %v1670 = vsel %vm929, %v1665, %v1669
        %1671 = vrot.lane.b32.xlu0 %v1490, 4
        %v1672 = vpop.permute.xlu0 %1671
        %1673 = vrot.lane.b32.xlu0 %v1502, 4
        %v1674 = vpop.permute.xlu0 %1673
        %1675 = vrot.lane.b32.xlu0 %v1514, 4
        %v1676 = vpop.permute.xlu0 %1675
        %1677 = vrot.lane.b32.xlu0 %v1526, 4
        %v1678 = vpop.permute.xlu0 %1677
        %1679 = vrot.lane.b32.xlu0 %v1538, 4
        %v1680 = vpop.permute.xlu0 %1679
        %1681 = vrot.lane.b32.xlu0 %v1550, 4
        %v1682 = vpop.permute.xlu0 %1681
        %1683 = vrot.lane.b32.xlu0 %v1562, 4
        %v1684 = vpop.permute.xlu0 %1683
        %1685 = vrot.lane.b32.xlu0 %v1574, 4
        %v1686 = vpop.permute.xlu0 %1685
        %1687 = vrot.lane.b32.xlu0 %v1586, 4
        %v1688 = vpop.permute.xlu0 %1687
        %1689 = vrot.lane.b32.xlu0 %v1598, 4
        %v1690 = vpop.permute.xlu0 %1689
        %1691 = vrot.lane.b32.xlu0 %v1610, 4
        %v1692 = vpop.permute.xlu0 %1691
        %1693 = vrot.lane.b32.xlu0 %v1622, 4
        %v1694 = vpop.permute.xlu0 %1693
        %1695 = vrot.lane.b32.xlu0 %v1634, 4
        %v1696 = vpop.permute.xlu0 %1695
        %1697 = vrot.lane.b32.xlu0 %v1646, 4
        %v1698 = vpop.permute.xlu0 %1697
        %1699 = vrot.lane.b32.xlu0 %v1658, 4
        %v1700 = vpop.permute.xlu0 %1699
        %1701 = vrot.lane.b32.xlu0 %v1670, 4
        %v1702 = vpop.permute.xlu0 %1701
        %v1703 = vrot.slane %v1415, 1
        %v1704 = vrot.slane %v1463, 1
        %v1705 = vsel %vm1154, %v1703, %v1704
        %v1706 = vrot.slane %v1416, 1
        %v1707 = vrot.slane %v1464, 1
        %v1708 = vsel %vm1154, %v1706, %v1707
        %v1709 = vrot.slane %v1417, 1
        %v1710 = vrot.slane %v1465, 1
        %v1711 = vsel %vm1154, %v1709, %v1710
        %v1712 = vrot.slane %v1418, 1
        %v1713 = vrot.slane %v1466, 1
        %v1714 = vsel %vm1154, %v1712, %v1713
        %v1715 = vrot.slane %v1419, 1
        %v1716 = vrot.slane %v1467, 1
        %v1717 = vsel %vm1154, %v1715, %v1716
        %v1718 = vrot.slane %v1420, 1
        %v1719 = vrot.slane %v1468, 1
        %v1720 = vsel %vm1154, %v1718, %v1719
        %v1721 = vrot.slane %v1421, 1
        %v1722 = vrot.slane %v1469, 1
        %v1723 = vsel %vm1154, %v1721, %v1722
        %v1724 = vrot.slane %v1422, 1
        %v1725 = vrot.slane %v1470, 1
        %v1726 = vsel %vm1154, %v1724, %v1725
        %v1727 = vrot.slane %v1423, 1
        %v1728 = vrot.slane %v1471, 1
        %v1729 = vsel %vm1154, %v1727, %v1728
        %v1730 = vrot.slane %v1424, 1
        %v1731 = vrot.slane %v1472, 1
        %v1732 = vsel %vm1154, %v1730, %v1731
        %v1733 = vrot.slane %v1425, 1
        %v1734 = vrot.slane %v1473, 1
        %v1735 = vsel %vm1154, %v1733, %v1734
        %v1736 = vrot.slane %v1426, 1
        %v1737 = vrot.slane %v1474, 1
        %v1738 = vsel %vm1154, %v1736, %v1737
        %v1739 = vrot.slane %v1427, 1
        %v1740 = vrot.slane %v1475, 1
        %v1741 = vsel %vm1154, %v1739, %v1740
        %v1742 = vrot.slane %v1428, 1
        %v1743 = vrot.slane %v1476, 1
        %v1744 = vsel %vm1154, %v1742, %v1743
        %v1745 = vrot.slane %v1429, 1
        %v1746 = vrot.slane %v1477, 1
        %v1747 = vsel %vm1154, %v1745, %v1746
        %v1748 = vrot.slane %v1430, 1
        %v1749 = vrot.slane %v1478, 1
        %v1750 = vsel %vm1154, %v1748, %v1749
        %1751 = vrot.lane.b32.xlu0 %v1705, 8
        %v1752 = vpop.permute.xlu0 %1751
        %1753 = vrot.lane.b32.xlu0 %v1708, 8
        %v1754 = vpop.permute.xlu0 %1753
        %1755 = vrot.lane.b32.xlu0 %v1711, 8
        %v1756 = vpop.permute.xlu0 %1755
        %1757 = vrot.lane.b32.xlu0 %v1714, 8
        %v1758 = vpop.permute.xlu0 %1757
        %1759 = vrot.lane.b32.xlu0 %v1717, 8
        %v1760 = vpop.permute.xlu0 %1759
        %1761 = vrot.lane.b32.xlu0 %v1720, 8
        %v1762 = vpop.permute.xlu0 %1761
        %1763 = vrot.lane.b32.xlu0 %v1723, 8
        %v1764 = vpop.permute.xlu0 %1763
        %1765 = vrot.lane.b32.xlu0 %v1726, 8
        %v1766 = vpop.permute.xlu0 %1765
        %1767 = vrot.lane.b32.xlu0 %v1729, 8
        %v1768 = vpop.permute.xlu0 %1767
        %1769 = vrot.lane.b32.xlu0 %v1732, 8
        %v1770 = vpop.permute.xlu0 %1769
        %1771 = vrot.lane.b32.xlu0 %v1735, 8
        %v1772 = vpop.permute.xlu0 %1771
        %1773 = vrot.lane.b32.xlu0 %v1738, 8
        %v1774 = vpop.permute.xlu0 %1773
        %1775 = vrot.lane.b32.xlu0 %v1741, 8
        %v1776 = vpop.permute.xlu0 %1775
        %1777 = vrot.lane.b32.xlu0 %v1744, 8
        %v1778 = vpop.permute.xlu0 %1777
        %1779 = vrot.lane.b32.xlu0 %v1747, 8
        %v1780 = vpop.permute.xlu0 %1779
        %1781 = vrot.lane.b32.xlu0 %v1750, 8
        %v1782 = vpop.permute.xlu0 %1781
        %v1784 = vsel %vm1235, %v1415, %v1672
        %v1786 = vsel %vm1235, %v1416, %v1674
        %v1788 = vsel %vm1235, %v1417, %v1676
        %v1790 = vsel %vm1235, %v1418, %v1678
        %v1792 = vsel %vm1235, %v1419, %v1680
        %v1794 = vsel %vm1235, %v1420, %v1682
        %v1796 = vsel %vm1235, %v1421, %v1684
        %v1798 = vsel %vm1235, %v1422, %v1686
        %v1800 = vsel %vm1235, %v1423, %v1688
        %v1802 = vsel %vm1235, %v1424, %v1690
        %v1804 = vsel %vm1235, %v1425, %v1692
        %v1806 = vsel %vm1235, %v1426, %v1694
        %v1808 = vsel %vm1235, %v1427, %v1696
        %v1810 = vsel %vm1235, %v1428, %v1698
        %v1812 = vsel %vm1235, %v1429, %v1700
        %v1814 = vsel %vm1235, %v1430, %v1702
        %v1816 = vsel %vm1268, %v1784, %v1752
        %v1818 = vsel %vm1268, %v1786, %v1754
        %v1820 = vsel %vm1268, %v1788, %v1756
        %v1822 = vsel %vm1268, %v1790, %v1758
        %v1824 = vsel %vm1268, %v1792, %v1760
        %v1826 = vsel %vm1268, %v1794, %v1762
        %v1828 = vsel %vm1268, %v1796, %v1764
        %v1830 = vsel %vm1268, %v1798, %v1766
        %v1832 = vsel %vm1268, %v1800, %v1768
        %v1834 = vsel %vm1268, %v1802, %v1770
        %v1836 = vsel %vm1268, %v1804, %v1772
        %v1838 = vsel %vm1268, %v1806, %v1774
        %v1840 = vsel %vm1268, %v1808, %v1776
        %v1842 = vsel %vm1268, %v1810, %v1778
        %v1844 = vsel %vm1268, %v1812, %v1780
        %v1846 = vsel %vm1268, %v1814, %v1782
        %s1847 = scalar_lea.vmem %s1, 8
        %v1848 = vld [vmem:[%s1847] sm:$0xf]
        %v1849 = vld [vmem:[%s1847 + $0x4] sm:$0x3]
        %v1852 = vunpack.c.l.b16 %v1848
        %v1853 = vunpack.c.l.b16 %v1849
        %v1854 = vpack.c.b16 %v1853, %v1852
        %vm1855 = vcmask 97280
        %v1856 = vsel %vm1855, %v1816, 0
        %v1858 = vsel %vm1855, %v1818, 0
        %v1860 = vsel %vm1855, %v1820, 0
        %v1862 = vsel %vm1855, %v1822, 0
        %v1864 = vsel %vm1855, %v1824, 0
        %v1866 = vsel %vm1855, %v1826, 0
        %v1868 = vsel %vm1855, %v1828, 0
        %v1870 = vsel %vm1855, %v1830, 0
        %v1872 = vsel %vm1855, %v1832, 0
        %v1874 = vsel %vm1855, %v1834, 0
        %v1876 = vsel %vm1855, %v1836, 0
        %v1878 = vsel %vm1855, %v1838, 0
        %v1880 = vsel %vm1855, %v1840, 0
        %v1882 = vsel %vm1855, %v1842, 0
        %v1884 = vsel %vm1855, %v1844, 0
        %v1886 = vsel %vm1855, %v1846, 0
        %vm1888 = vcmask 1045504
        %v1890 = vsel %vm1888, %v1854, 0
        %1892 = vmatpush.bf16.msra.mxu0 0
        %1893 = vmatpush.bf16.msra.mxu0 0
        %1894 = vmatpush.bf16.msra.mxu0 0
        %1895 = vmatpush.bf16.msra.mxu0 0
        %1896 = vmatpush.bf16.msra.mxu0 0
        %1897 = vmatpush.bf16.msra.mxu0 0
        %1898 = vmatpush.bf16.msra.mxu0 0
        %1899 = vmatpush.bf16.msra.mxu0 %v1890
        %1900 = vmatmul.bf16.gmra.mxu0 %v1856
        %v1901 = vpop.f32.mrf.mxu0
        %v1902 = vadd.f32 0.0, %v1901
        %v1903 = vpop.f32.mrf.mxu0
        %v1904 = vadd.f32 0.0, %v1903
        %1905 = vmatmul.bf16.gmra.mxu0 %v1858
        %v1906 = vpop.f32.mrf.mxu0
        %v1907 = vadd.f32 0.0, %v1906
        %v1908 = vpop.f32.mrf.mxu0
        %v1909 = vadd.f32 0.0, %v1908
        %1910 = vmatmul.bf16.gmra.mxu0 %v1860
        %v1911 = vpop.f32.mrf.mxu0
        %v1912 = vadd.f32 0.0, %v1911
        %v1913 = vpop.f32.mrf.mxu0
        %v1914 = vadd.f32 0.0, %v1913
        %1915 = vmatmul.bf16.gmra.mxu0 %v1862
        %v1916 = vpop.f32.mrf.mxu0
        %v1917 = vadd.f32 0.0, %v1916
        %v1918 = vpop.f32.mrf.mxu0
        %v1919 = vadd.f32 0.0, %v1918
        %1920 = vmatmul.bf16.gmra.mxu0 %v1864
        %v1921 = vpop.f32.mrf.mxu0
        %v1922 = vadd.f32 0.0, %v1921
        %v1923 = vpop.f32.mrf.mxu0
        %v1924 = vadd.f32 0.0, %v1923
        %1925 = vmatmul.bf16.gmra.mxu0 %v1866
        %v1926 = vpop.f32.mrf.mxu0
        %v1927 = vadd.f32 0.0, %v1926
        %v1928 = vpop.f32.mrf.mxu0
        %v1929 = vadd.f32 0.0, %v1928
        %1930 = vmatmul.bf16.gmra.mxu0 %v1868
        %v1931 = vpop.f32.mrf.mxu0
        %v1932 = vadd.f32 0.0, %v1931
        %v1933 = vpop.f32.mrf.mxu0
        %v1934 = vadd.f32 0.0, %v1933
        %1935 = vmatmul.bf16.gmra.mxu0 %v1870
        %v1936 = vpop.f32.mrf.mxu0
        %v1937 = vadd.f32 0.0, %v1936
        %v1938 = vpop.f32.mrf.mxu0
        %v1939 = vadd.f32 0.0, %v1938
        %1940 = vmatmul.bf16.gmra.mxu0 %v1872
        %v1941 = vpop.f32.mrf.mxu0
        %v1942 = vadd.f32 0.0, %v1941
        %v1943 = vpop.f32.mrf.mxu0
        %v1944 = vadd.f32 0.0, %v1943
        %1945 = vmatmul.bf16.gmra.mxu0 %v1874
        %v1946 = vpop.f32.mrf.mxu0
        %v1947 = vadd.f32 0.0, %v1946
        %v1948 = vpop.f32.mrf.mxu0
        %v1949 = vadd.f32 0.0, %v1948
        %1950 = vmatmul.bf16.gmra.mxu0 %v1876
        %v1951 = vpop.f32.mrf.mxu0
        %v1952 = vadd.f32 0.0, %v1951
        %v1953 = vpop.f32.mrf.mxu0
        %v1954 = vadd.f32 0.0, %v1953
        %1955 = vmatmul.bf16.gmra.mxu0 %v1878
        %v1956 = vpop.f32.mrf.mxu0
        %v1957 = vadd.f32 0.0, %v1956
        %v1958 = vpop.f32.mrf.mxu0
        %v1959 = vadd.f32 0.0, %v1958
        %1960 = vmatmul.bf16.gmra.mxu0 %v1880
        %v1961 = vpop.f32.mrf.mxu0
        %v1962 = vadd.f32 0.0, %v1961
        %v1963 = vpop.f32.mrf.mxu0
        %v1964 = vadd.f32 0.0, %v1963
        %1965 = vmatmul.bf16.gmra.mxu0 %v1882
        %v1966 = vpop.f32.mrf.mxu0
        %v1967 = vadd.f32 0.0, %v1966
        %v1968 = vpop.f32.mrf.mxu0
        %v1969 = vadd.f32 0.0, %v1968
        %1970 = vmatmul.bf16.gmra.mxu0 %v1884
        %v1971 = vpop.f32.mrf.mxu0
        %v1972 = vadd.f32 0.0, %v1971
        %v1973 = vpop.f32.mrf.mxu0
        %v1974 = vadd.f32 0.0, %v1973
        %1975 = vmatmul.bf16.gmra.mxu0 %v1886
        %v1976 = vpop.f32.mrf.mxu0
        %v1977 = vadd.f32 0.0, %v1976
        %v1978 = vpop.f32.mrf.mxu0
        %v1979 = vadd.f32 0.0, %v1978
        %1980 = vdwg.mxu0
        %v1983 = vunpack.c.l.b16 %v1301
        %v1984 = vunpack.c.l.b16 %v1302
        %v1985 = vpack.c.b16 %v1984, %v1983
        %v1986 = vsel %vm1855, %v1270, 0
        %v1988 = vsel %vm1855, %v1272, 0
        %v1990 = vsel %vm1855, %v1274, 0
        %v1992 = vsel %vm1855, %v1276, 0
        %v1994 = vsel %vm1855, %v1278, 0
        %v1996 = vsel %vm1855, %v1280, 0
        %v1998 = vsel %vm1855, %v1282, 0
        %v2000 = vsel %vm1855, %v1284, 0
        %v2002 = vsel %vm1855, %v1286, 0
        %v2004 = vsel %vm1855, %v1288, 0
        %v2006 = vsel %vm1855, %v1290, 0
        %v2008 = vsel %vm1855, %v1292, 0
        %v2010 = vsel %vm1855, %v1294, 0
        %v2012 = vsel %vm1855, %v1296, 0
        %v2014 = vsel %vm1855, %v1298, 0
        %v2016 = vsel %vm1855, %v1300, 0
        %v2019 = vsel %vm1888, %v1985, 0
        %2021 = vmatpush.bf16.msra.mxu0 0
        %2022 = vmatpush.bf16.msra.mxu0 0
        %2023 = vmatpush.bf16.msra.mxu0 0
        %2024 = vmatpush.bf16.msra.mxu0 0
        %2025 = vmatpush.bf16.msra.mxu0 0
        %2026 = vmatpush.bf16.msra.mxu0 0
        %2027 = vmatpush.bf16.msra.mxu0 0
        %2028 = vmatpush.bf16.msra.mxu0 %v2019
        %2029 = vmatmul.bf16.gmra.mxu0 %v1986
        %v2030 = vpop.f32.mrf.mxu0
        %v2031 = vadd.f32 %v1902, %v2030
        %v2032 = vpop.f32.mrf.mxu0
        %v2033 = vadd.f32 %v1904, %v2032
        %2034 = vmatmul.bf16.gmra.mxu0 %v1988
        %v2035 = vpop.f32.mrf.mxu0
        %v2036 = vadd.f32 %v1907, %v2035
        %v2037 = vpop.f32.mrf.mxu0
        %v2038 = vadd.f32 %v1909, %v2037
        %2039 = vmatmul.bf16.gmra.mxu0 %v1990
        %v2040 = vpop.f32.mrf.mxu0
        %v2041 = vadd.f32 %v1912, %v2040
        %v2042 = vpop.f32.mrf.mxu0
        %v2043 = vadd.f32 %v1914, %v2042
        %2044 = vmatmul.bf16.gmra.mxu0 %v1992
        %v2045 = vpop.f32.mrf.mxu0
        %v2046 = vadd.f32 %v1917, %v2045
        %v2047 = vpop.f32.mrf.mxu0
        %v2048 = vadd.f32 %v1919, %v2047
        %2049 = vmatmul.bf16.gmra.mxu0 %v1994
        %v2050 = vpop.f32.mrf.mxu0
        %v2051 = vadd.f32 %v1922, %v2050
        %v2052 = vpop.f32.mrf.mxu0
        %v2053 = vadd.f32 %v1924, %v2052
        %2054 = vmatmul.bf16.gmra.mxu0 %v1996
        %v2055 = vpop.f32.mrf.mxu0
        %v2056 = vadd.f32 %v1927, %v2055
        %v2057 = vpop.f32.mrf.mxu0
        %v2058 = vadd.f32 %v1929, %v2057
        %2059 = vmatmul.bf16.gmra.mxu0 %v1998
        %v2060 = vpop.f32.mrf.mxu0
        %v2061 = vadd.f32 %v1932, %v2060
        %v2062 = vpop.f32.mrf.mxu0
        %v2063 = vadd.f32 %v1934, %v2062
        %2064 = vmatmul.bf16.gmra.mxu0 %v2000
        %v2065 = vpop.f32.mrf.mxu0
        %v2066 = vadd.f32 %v1937, %v2065
        %v2067 = vpop.f32.mrf.mxu0
        %v2068 = vadd.f32 %v1939, %v2067
        %2069 = vmatmul.bf16.gmra.mxu0 %v2002
        %v2070 = vpop.f32.mrf.mxu0
        %v2071 = vadd.f32 %v1942, %v2070
        %v2072 = vpop.f32.mrf.mxu0
        %v2073 = vadd.f32 %v1944, %v2072
        %2074 = vmatmul.bf16.gmra.mxu0 %v2004
        %v2075 = vpop.f32.mrf.mxu0
        %v2076 = vadd.f32 %v1947, %v2075
        %v2077 = vpop.f32.mrf.mxu0
        %v2078 = vadd.f32 %v1949, %v2077
        %2079 = vmatmul.bf16.gmra.mxu0 %v2006
        %v2080 = vpop.f32.mrf.mxu0
        %v2081 = vadd.f32 %v1952, %v2080
        %v2082 = vpop.f32.mrf.mxu0
        %v2083 = vadd.f32 %v1954, %v2082
        %2084 = vmatmul.bf16.gmra.mxu0 %v2008
        %v2085 = vpop.f32.mrf.mxu0
        %v2086 = vadd.f32 %v1957, %v2085
        %v2087 = vpop.f32.mrf.mxu0
        %v2088 = vadd.f32 %v1959, %v2087
        %2089 = vmatmul.bf16.gmra.mxu0 %v2010
        %v2090 = vpop.f32.mrf.mxu0
        %v2091 = vadd.f32 %v1962, %v2090
        %v2092 = vpop.f32.mrf.mxu0
        %v2093 = vadd.f32 %v1964, %v2092
        %2094 = vmatmul.bf16.gmra.mxu0 %v2012
        %v2095 = vpop.f32.mrf.mxu0
        %v2096 = vadd.f32 %v1967, %v2095
        %v2097 = vpop.f32.mrf.mxu0
        %v2098 = vadd.f32 %v1969, %v2097
        %2099 = vmatmul.bf16.gmra.mxu0 %v2014
        %v2100 = vpop.f32.mrf.mxu0
        %v2101 = vadd.f32 %v1972, %v2100
        %v2102 = vpop.f32.mrf.mxu0
        %v2103 = vadd.f32 %v1974, %v2102
        %2104 = vmatmul.bf16.gmra.mxu0 %v2016
        %v2105 = vpop.f32.mrf.mxu0
        %v2106 = vadd.f32 %v1977, %v2105
        %v2107 = vpop.f32.mrf.mxu0
        %v2108 = vadd.f32 %v1979, %v2107
        %2109 = vdwg.mxu0
        %s2110 = scalar_lea.vmem [#allocation2], 24
        %v2111 = vld [vmem:[%s2110] sm:$0xf]
        %v2112 = vld [vmem:[%s2110 + $0x4] sm:$0xf]
        %v2113 = vld [vmem:[%s2110 + $0x8] sm:$0x1]
        %v2114 = vld [vmem:[%s2110 + $0xc] sm:$0xf]
        %v2115 = vld [vmem:[%s2110 + $0x10] sm:$0xf]
        %v2116 = vld [vmem:[%s2110 + $0x14] sm:$0x1]
        %v2117 = vld [vmem:[%s2110 + $0x18] sm:$0xf]
        %v2118 = vld [vmem:[%s2110 + $0x1c] sm:$0xf]
        %v2119 = vld [vmem:[%s2110 + $0x20] sm:$0x1]
        %v2120 = vld [vmem:[%s2110 + $0x24] sm:$0xf]
        %v2121 = vld [vmem:[%s2110 + $0x28] sm:$0xf]
        %v2122 = vld [vmem:[%s2110 + $0x2c] sm:$0x1]
        %v2123 = vld [vmem:[%s2110 + $0x30] sm:$0xf]
        %v2124 = vld [vmem:[%s2110 + $0x34] sm:$0xf]
        %v2125 = vld [vmem:[%s2110 + $0x38] sm:$0x1]
        %v2126 = vld [vmem:[%s2110 + $0x3c] sm:$0xf]
        %v2127 = vld [vmem:[%s2110 + $0x40] sm:$0xf]
        %v2128 = vld [vmem:[%s2110 + $0x44] sm:$0x1]
        %v2129 = vld [vmem:[%s2110 + $0x48] sm:$0xf]
        %v2130 = vld [vmem:[%s2110 + $0x4c] sm:$0xf]
        %v2131 = vld [vmem:[%s2110 + $0x50] sm:$0x1]
        %v2132 = vld [vmem:[%s2110 + $0x54] sm:$0xf]
        %v2133 = vld [vmem:[%s2110 + $0x58] sm:$0xf]
        %v2134 = vld [vmem:[%s2110 + $0x5c] sm:$0x1]
        %v2135 = vld [vmem:[%s2110 + $0x60] sm:$0xf]
        %v2136 = vld [vmem:[%s2110 + $0x64] sm:$0xf]
        %v2137 = vld [vmem:[%s2110 + $0x68] sm:$0x1]
        %v2138 = vld [vmem:[%s2110 + $0x6c] sm:$0xf]
        %v2139 = vld [vmem:[%s2110 + $0x70] sm:$0xf]
        %v2140 = vld [vmem:[%s2110 + $0x74] sm:$0x1]
        %v2141 = vld [vmem:[%s2110 + $0x78] sm:$0xf]
        %v2142 = vld [vmem:[%s2110 + $0x7c] sm:$0xf]
        %v2143 = vld [vmem:[%s2110 + $0x80] sm:$0x1]
        %v2144 = vld [vmem:[%s2110 + $0x84] sm:$0xf]
        %v2145 = vld [vmem:[%s2110 + $0x88] sm:$0xf]
        %v2146 = vld [vmem:[%s2110 + $0x8c] sm:$0x1]
        %v2147 = vld [vmem:[%s2110 + $0x90] sm:$0xf]
        %v2148 = vld [vmem:[%s2110 + $0x94] sm:$0xf]
        %v2149 = vld [vmem:[%s2110 + $0x98] sm:$0x1]
        %v2150 = vld [vmem:[%s2110 + $0x9c] sm:$0xf]
        %v2151 = vld [vmem:[%s2110 + $0xa0] sm:$0xf]
        %v2152 = vld [vmem:[%s2110 + $0xa4] sm:$0x1]
        %v2153 = vld [vmem:[%s2110 + $0xa8] sm:$0xf]
        %v2154 = vld [vmem:[%s2110 + $0xac] sm:$0xf]
        %v2155 = vld [vmem:[%s2110 + $0xb0] sm:$0x1]
        %v2156 = vld [vmem:[%s2110 + $0xb4] sm:$0xf]
        %v2157 = vld [vmem:[%s2110 + $0xb8] sm:$0xf]
        %v2158 = vld [vmem:[%s2110 + $0xbc] sm:$0x1]
        %v2191 = vunpack.c.l.b16 %v2111
        %v2192 = vunpack.c.l.b16 %v2112
        %v2193 = vunpack.c.l.b16 %v2114
        %v2194 = vunpack.c.l.b16 %v2115
        %v2195 = vunpack.c.l.b16 %v2117
        %v2196 = vunpack.c.l.b16 %v2118
        %v2197 = vunpack.c.l.b16 %v2120
        %v2198 = vunpack.c.l.b16 %v2121
        %v2199 = vunpack.c.l.b16 %v2123
        %v2200 = vunpack.c.l.b16 %v2124
        %v2201 = vunpack.c.l.b16 %v2126
        %v2202 = vunpack.c.l.b16 %v2127
        %v2203 = vunpack.c.l.b16 %v2129
        %v2204 = vunpack.c.l.b16 %v2130
        %v2205 = vunpack.c.l.b16 %v2132
        %v2206 = vunpack.c.l.b16 %v2133
        %v2207 = vunpack.c.l.b16 %v2135
        %v2208 = vunpack.c.l.b16 %v2136
        %v2209 = vunpack.c.l.b16 %v2138
        %v2210 = vunpack.c.l.b16 %v2139
        %v2211 = vunpack.c.l.b16 %v2141
        %v2212 = vunpack.c.l.b16 %v2142
        %v2213 = vunpack.c.l.b16 %v2144
        %v2214 = vunpack.c.l.b16 %v2145
        %v2215 = vunpack.c.l.b16 %v2147
        %v2216 = vunpack.c.l.b16 %v2148
        %v2217 = vunpack.c.l.b16 %v2150
        %v2218 = vunpack.c.l.b16 %v2151
        %v2219 = vunpack.c.l.b16 %v2153
        %v2220 = vunpack.c.l.b16 %v2154
        %v2221 = vunpack.c.l.b16 %v2156
        %v2222 = vunpack.c.l.b16 %v2157
        %v2223 = vpack.c.b16 %v2192, %v2191
        %v2224 = vpack.c.b16 %v2194, %v2193
        %v2225 = vpack.c.b16 %v2196, %v2195
        %v2226 = vpack.c.b16 %v2198, %v2197
        %v2227 = vpack.c.b16 %v2200, %v2199
        %v2228 = vpack.c.b16 %v2202, %v2201
        %v2229 = vpack.c.b16 %v2204, %v2203
        %v2230 = vpack.c.b16 %v2206, %v2205
        %v2231 = vpack.c.b16 %v2208, %v2207
        %v2232 = vpack.c.b16 %v2210, %v2209
        %v2233 = vpack.c.b16 %v2212, %v2211
        %v2234 = vpack.c.b16 %v2214, %v2213
        %v2235 = vpack.c.b16 %v2216, %v2215
        %v2236 = vpack.c.b16 %v2218, %v2217
        %v2237 = vpack.c.b16 %v2220, %v2219
        %v2238 = vpack.c.b16 %v2222, %v2221
        %v2255 = vunpack.c.l.b16 %v2113
        %v2256 = vunpack.c.l.b16 %v2116
        %v2257 = vunpack.c.l.b16 %v2119
        %v2258 = vunpack.c.l.b16 %v2122
        %v2259 = vunpack.c.l.b16 %v2125
        %v2260 = vunpack.c.l.b16 %v2128
        %v2261 = vunpack.c.l.b16 %v2131
        %v2262 = vunpack.c.l.b16 %v2134
        %v2263 = vunpack.c.l.b16 %v2137
        %v2264 = vunpack.c.l.b16 %v2140
        %v2265 = vunpack.c.l.b16 %v2143
        %v2266 = vunpack.c.l.b16 %v2146
        %v2267 = vunpack.c.l.b16 %v2149
        %v2268 = vunpack.c.l.b16 %v2152
        %v2269 = vunpack.c.l.b16 %v2155
        %v2270 = vunpack.c.l.b16 %v2158
        %v2271 = vpack.c.b16 %v2255, %v2255
        %v2272 = vpack.c.b16 %v2256, %v2256
        %v2273 = vpack.c.b16 %v2257, %v2257
        %v2274 = vpack.c.b16 %v2258, %v2258
        %v2275 = vpack.c.b16 %v2259, %v2259
        %v2276 = vpack.c.b16 %v2260, %v2260
        %v2277 = vpack.c.b16 %v2261, %v2261
        %v2278 = vpack.c.b16 %v2262, %v2262
        %v2279 = vpack.c.b16 %v2263, %v2263
        %v2280 = vpack.c.b16 %v2264, %v2264
        %v2281 = vpack.c.b16 %v2265, %v2265
        %v2282 = vpack.c.b16 %v2266, %v2266
        %v2283 = vpack.c.b16 %v2267, %v2267
        %v2284 = vpack.c.b16 %v2268, %v2268
        %v2285 = vpack.c.b16 %v2269, %v2269
        %v2286 = vpack.c.b16 %v2270, %v2270
        %v2288 = vshrl.u32 %v2223, 16
        %v2290 = vshll.u32 %v2223, 16
        %v2292 = vrot.slane %v2290, 1
        %v2293 = vor.u32 %v2288, %v2292
        %v2295 = vshll.u32 %v2271, 16
        %v2297 = vrot.slane %v2295, 1
        %v2298 = vsel %vm929, %v2293, %v2297
        %v2300 = vshrl.u32 %v2224, 16
        %v2302 = vshll.u32 %v2224, 16
        %v2304 = vrot.slane %v2302, 1
        %v2305 = vor.u32 %v2300, %v2304
        %v2307 = vshll.u32 %v2272, 16
        %v2309 = vrot.slane %v2307, 1
        %v2310 = vsel %vm929, %v2305, %v2309
        %v2312 = vshrl.u32 %v2225, 16
        %v2314 = vshll.u32 %v2225, 16
        %v2316 = vrot.slane %v2314, 1
        %v2317 = vor.u32 %v2312, %v2316
        %v2319 = vshll.u32 %v2273, 16
        %v2321 = vrot.slane %v2319, 1
        %v2322 = vsel %vm929, %v2317, %v2321
        %v2324 = vshrl.u32 %v2226, 16
        %v2326 = vshll.u32 %v2226, 16
        %v2328 = vrot.slane %v2326, 1
        %v2329 = vor.u32 %v2324, %v2328
        %v2331 = vshll.u32 %v2274, 16
        %v2333 = vrot.slane %v2331, 1
        %v2334 = vsel %vm929, %v2329, %v2333
        %v2336 = vshrl.u32 %v2227, 16
        %v2338 = vshll.u32 %v2227, 16
        %v2340 = vrot.slane %v2338, 1
        %v2341 = vor.u32 %v2336, %v2340
        %v2343 = vshll.u32 %v2275, 16
        %v2345 = vrot.slane %v2343, 1
        %v2346 = vsel %vm929, %v2341, %v2345
        %v2348 = vshrl.u32 %v2228, 16
        %v2350 = vshll.u32 %v2228, 16
        %v2352 = vrot.slane %v2350, 1
        %v2353 = vor.u32 %v2348, %v2352
        %v2355 = vshll.u32 %v2276, 16
        %v2357 = vrot.slane %v2355, 1
        %v2358 = vsel %vm929, %v2353, %v2357
        %v2360 = vshrl.u32 %v2229, 16
        %v2362 = vshll.u32 %v2229, 16
        %v2364 = vrot.slane %v2362, 1
        %v2365 = vor.u32 %v2360, %v2364
        %v2367 = vshll.u32 %v2277, 16
        %v2369 = vrot.slane %v2367, 1
        %v2370 = vsel %vm929, %v2365, %v2369
        %v2372 = vshrl.u32 %v2230, 16
        %v2374 = vshll.u32 %v2230, 16
        %v2376 = vrot.slane %v2374, 1
        %v2377 = vor.u32 %v2372, %v2376
        %v2379 = vshll.u32 %v2278, 16
        %v2381 = vrot.slane %v2379, 1
        %v2382 = vsel %vm929, %v2377, %v2381
        %v2384 = vshrl.u32 %v2231, 16
        %v2386 = vshll.u32 %v2231, 16
        %v2388 = vrot.slane %v2386, 1
        %v2389 = vor.u32 %v2384, %v2388
        %v2391 = vshll.u32 %v2279, 16
        %v2393 = vrot.slane %v2391, 1
        %v2394 = vsel %vm929, %v2389, %v2393
        %v2396 = vshrl.u32 %v2232, 16
        %v2398 = vshll.u32 %v2232, 16
        %v2400 = vrot.slane %v2398, 1
        %v2401 = vor.u32 %v2396, %v2400
        %v2403 = vshll.u32 %v2280, 16
        %v2405 = vrot.slane %v2403, 1
        %v2406 = vsel %vm929, %v2401, %v2405
        %v2408 = vshrl.u32 %v2233, 16
        %v2410 = vshll.u32 %v2233, 16
        %v2412 = vrot.slane %v2410, 1
        %v2413 = vor.u32 %v2408, %v2412
        %v2415 = vshll.u32 %v2281, 16
        %v2417 = vrot.slane %v2415, 1
        %v2418 = vsel %vm929, %v2413, %v2417
        %v2420 = vshrl.u32 %v2234, 16
        %v2422 = vshll.u32 %v2234, 16
        %v2424 = vrot.slane %v2422, 1
        %v2425 = vor.u32 %v2420, %v2424
        %v2427 = vshll.u32 %v2282, 16
        %v2429 = vrot.slane %v2427, 1
        %v2430 = vsel %vm929, %v2425, %v2429
        %v2432 = vshrl.u32 %v2235, 16
        %v2434 = vshll.u32 %v2235, 16
        %v2436 = vrot.slane %v2434, 1
        %v2437 = vor.u32 %v2432, %v2436
        %v2439 = vshll.u32 %v2283, 16
        %v2441 = vrot.slane %v2439, 1
        %v2442 = vsel %vm929, %v2437, %v2441
        %v2444 = vshrl.u32 %v2236, 16
        %v2446 = vshll.u32 %v2236, 16
        %v2448 = vrot.slane %v2446, 1
        %v2449 = vor.u32 %v2444, %v2448
        %v2451 = vshll.u32 %v2284, 16
        %v2453 = vrot.slane %v2451, 1
        %v2454 = vsel %vm929, %v2449, %v2453
        %v2456 = vshrl.u32 %v2237, 16
        %v2458 = vshll.u32 %v2237, 16
        %v2460 = vrot.slane %v2458, 1
        %v2461 = vor.u32 %v2456, %v2460
        %v2463 = vshll.u32 %v2285, 16
        %v2465 = vrot.slane %v2463, 1
        %v2466 = vsel %vm929, %v2461, %v2465
        %v2468 = vshrl.u32 %v2238, 16
        %v2470 = vshll.u32 %v2238, 16
        %v2472 = vrot.slane %v2470, 1
        %v2473 = vor.u32 %v2468, %v2472
        %v2475 = vshll.u32 %v2286, 16
        %v2477 = vrot.slane %v2475, 1
        %v2478 = vsel %vm929, %v2473, %v2477
        %2479 = vrot.lane.b32.xlu0 %v2298, 4
        %v2480 = vpop.permute.xlu0 %2479
        %2481 = vrot.lane.b32.xlu0 %v2310, 4
        %v2482 = vpop.permute.xlu0 %2481
        %2483 = vrot.lane.b32.xlu0 %v2322, 4
        %v2484 = vpop.permute.xlu0 %2483
        %2485 = vrot.lane.b32.xlu0 %v2334, 4
        %v2486 = vpop.permute.xlu0 %2485
        %2487 = vrot.lane.b32.xlu0 %v2346, 4
        %v2488 = vpop.permute.xlu0 %2487
        %2489 = vrot.lane.b32.xlu0 %v2358, 4
        %v2490 = vpop.permute.xlu0 %2489
        %2491 = vrot.lane.b32.xlu0 %v2370, 4
        %v2492 = vpop.permute.xlu0 %2491
        %2493 = vrot.lane.b32.xlu0 %v2382, 4
        %v2494 = vpop.permute.xlu0 %2493
        %2495 = vrot.lane.b32.xlu0 %v2394, 4
        %v2496 = vpop.permute.xlu0 %2495
        %2497 = vrot.lane.b32.xlu0 %v2406, 4
        %v2498 = vpop.permute.xlu0 %2497
        %2499 = vrot.lane.b32.xlu0 %v2418, 4
        %v2500 = vpop.permute.xlu0 %2499
        %2501 = vrot.lane.b32.xlu0 %v2430, 4
        %v2502 = vpop.permute.xlu0 %2501
        %2503 = vrot.lane.b32.xlu0 %v2442, 4
        %v2504 = vpop.permute.xlu0 %2503
        %2505 = vrot.lane.b32.xlu0 %v2454, 4
        %v2506 = vpop.permute.xlu0 %2505
        %2507 = vrot.lane.b32.xlu0 %v2466, 4
        %v2508 = vpop.permute.xlu0 %2507
        %2509 = vrot.lane.b32.xlu0 %v2478, 4
        %v2510 = vpop.permute.xlu0 %2509
        %v2511 = vrot.slane %v2223, 1
        %v2512 = vrot.slane %v2271, 1
        %v2513 = vsel %vm1154, %v2511, %v2512
        %v2514 = vrot.slane %v2224, 1
        %v2515 = vrot.slane %v2272, 1
        %v2516 = vsel %vm1154, %v2514, %v2515
        %v2517 = vrot.slane %v2225, 1
        %v2518 = vrot.slane %v2273, 1
        %v2519 = vsel %vm1154, %v2517, %v2518
        %v2520 = vrot.slane %v2226, 1
        %v2521 = vrot.slane %v2274, 1
        %v2522 = vsel %vm1154, %v2520, %v2521
        %v2523 = vrot.slane %v2227, 1
        %v2524 = vrot.slane %v2275, 1
        %v2525 = vsel %vm1154, %v2523, %v2524
        %v2526 = vrot.slane %v2228, 1
        %v2527 = vrot.slane %v2276, 1
        %v2528 = vsel %vm1154, %v2526, %v2527
        %v2529 = vrot.slane %v2229, 1
        %v2530 = vrot.slane %v2277, 1
        %v2531 = vsel %vm1154, %v2529, %v2530
        %v2532 = vrot.slane %v2230, 1
        %v2533 = vrot.slane %v2278, 1
        %v2534 = vsel %vm1154, %v2532, %v2533
        %v2535 = vrot.slane %v2231, 1
        %v2536 = vrot.slane %v2279, 1
        %v2537 = vsel %vm1154, %v2535, %v2536
        %v2538 = vrot.slane %v2232, 1
        %v2539 = vrot.slane %v2280, 1
        %v2540 = vsel %vm1154, %v2538, %v2539
        %v2541 = vrot.slane %v2233, 1
        %v2542 = vrot.slane %v2281, 1
        %v2543 = vsel %vm1154, %v2541, %v2542
        %v2544 = vrot.slane %v2234, 1
        %v2545 = vrot.slane %v2282, 1
        %v2546 = vsel %vm1154, %v2544, %v2545
        %v2547 = vrot.slane %v2235, 1
        %v2548 = vrot.slane %v2283, 1
        %v2549 = vsel %vm1154, %v2547, %v2548
        %v2550 = vrot.slane %v2236, 1
        %v2551 = vrot.slane %v2284, 1
        %v2552 = vsel %vm1154, %v2550, %v2551
        %v2553 = vrot.slane %v2237, 1
        %v2554 = vrot.slane %v2285, 1
        %v2555 = vsel %vm1154, %v2553, %v2554
        %v2556 = vrot.slane %v2238, 1
        %v2557 = vrot.slane %v2286, 1
        %v2558 = vsel %vm1154, %v2556, %v2557
        %2559 = vrot.lane.b32.xlu0 %v2513, 8
        %v2560 = vpop.permute.xlu0 %2559
        %2561 = vrot.lane.b32.xlu0 %v2516, 8
        %v2562 = vpop.permute.xlu0 %2561
        %2563 = vrot.lane.b32.xlu0 %v2519, 8
        %v2564 = vpop.permute.xlu0 %2563
        %2565 = vrot.lane.b32.xlu0 %v2522, 8
        %v2566 = vpop.permute.xlu0 %2565
        %2567 = vrot.lane.b32.xlu0 %v2525, 8
        %v2568 = vpop.permute.xlu0 %2567
        %2569 = vrot.lane.b32.xlu0 %v2528, 8
        %v2570 = vpop.permute.xlu0 %2569
        %2571 = vrot.lane.b32.xlu0 %v2531, 8
        %v2572 = vpop.permute.xlu0 %2571
        %2573 = vrot.lane.b32.xlu0 %v2534, 8
        %v2574 = vpop.permute.xlu0 %2573
        %2575 = vrot.lane.b32.xlu0 %v2537, 8
        %v2576 = vpop.permute.xlu0 %2575
        %2577 = vrot.lane.b32.xlu0 %v2540, 8
        %v2578 = vpop.permute.xlu0 %2577
        %2579 = vrot.lane.b32.xlu0 %v2543, 8
        %v2580 = vpop.permute.xlu0 %2579
        %2581 = vrot.lane.b32.xlu0 %v2546, 8
        %v2582 = vpop.permute.xlu0 %2581
        %2583 = vrot.lane.b32.xlu0 %v2549, 8
        %v2584 = vpop.permute.xlu0 %2583
        %2585 = vrot.lane.b32.xlu0 %v2552, 8
        %v2586 = vpop.permute.xlu0 %2585
        %2587 = vrot.lane.b32.xlu0 %v2555, 8
        %v2588 = vpop.permute.xlu0 %2587
        %2589 = vrot.lane.b32.xlu0 %v2558, 8
        %v2590 = vpop.permute.xlu0 %2589
        %v2592 = vsel %vm1235, %v2223, %v2480
        %v2594 = vsel %vm1235, %v2224, %v2482
        %v2596 = vsel %vm1235, %v2225, %v2484
        %v2598 = vsel %vm1235, %v2226, %v2486
        %v2600 = vsel %vm1235, %v2227, %v2488
        %v2602 = vsel %vm1235, %v2228, %v2490
        %v2604 = vsel %vm1235, %v2229, %v2492
        %v2606 = vsel %vm1235, %v2230, %v2494
        %v2608 = vsel %vm1235, %v2231, %v2496
        %v2610 = vsel %vm1235, %v2232, %v2498
        %v2612 = vsel %vm1235, %v2233, %v2500
        %v2614 = vsel %vm1235, %v2234, %v2502
        %v2616 = vsel %vm1235, %v2235, %v2504
        %v2618 = vsel %vm1235, %v2236, %v2506
        %v2620 = vsel %vm1235, %v2237, %v2508
        %v2622 = vsel %vm1235, %v2238, %v2510
        %v2624 = vsel %vm1268, %v2592, %v2560
        %v2626 = vsel %vm1268, %v2594, %v2562
        %v2628 = vsel %vm1268, %v2596, %v2564
        %v2630 = vsel %vm1268, %v2598, %v2566
        %v2632 = vsel %vm1268, %v2600, %v2568
        %v2634 = vsel %vm1268, %v2602, %v2570
        %v2636 = vsel %vm1268, %v2604, %v2572
        %v2638 = vsel %vm1268, %v2606, %v2574
        %v2640 = vsel %vm1268, %v2608, %v2576
        %v2642 = vsel %vm1268, %v2610, %v2578
        %v2644 = vsel %vm1268, %v2612, %v2580
        %v2646 = vsel %vm1268, %v2614, %v2582
        %v2648 = vsel %vm1268, %v2616, %v2584
        %v2650 = vsel %vm1268, %v2618, %v2586
        %v2652 = vsel %vm1268, %v2620, %v2588
        %v2654 = vsel %vm1268, %v2622, %v2590
        %s2655 = scalar_lea.vmem %s1, 16
        %v2656 = vld [vmem:[%s2655] sm:$0xf]
        %v2657 = vld [vmem:[%s2655 + $0x4] sm:$0x3]
        %v2660 = vunpack.c.l.b16 %v2656
        %v2661 = vunpack.c.l.b16 %v2657
        %v2662 = vpack.c.b16 %v2661, %v2660
        %v2663 = vsel %vm1855, %v2624, 0
        %v2665 = vsel %vm1855, %v2626, 0
        %v2667 = vsel %vm1855, %v2628, 0
        %v2669 = vsel %vm1855, %v2630, 0
        %v2671 = vsel %vm1855, %v2632, 0
        %v2673 = vsel %vm1855, %v2634, 0
        %v2675 = vsel %vm1855, %v2636, 0
        %v2677 = vsel %vm1855, %v2638, 0
        %v2679 = vsel %vm1855, %v2640, 0
        %v2681 = vsel %vm1855, %v2642, 0
        %v2683 = vsel %vm1855, %v2644, 0
        %v2685 = vsel %vm1855, %v2646, 0
        %v2687 = vsel %vm1855, %v2648, 0
        %v2689 = vsel %vm1855, %v2650, 0
        %v2691 = vsel %vm1855, %v2652, 0
        %v2693 = vsel %vm1855, %v2654, 0
        %v2696 = vsel %vm1888, %v2662, 0
        %2698 = vmatpush.bf16.msra.mxu0 0
        %2699 = vmatpush.bf16.msra.mxu0 0
        %2700 = vmatpush.bf16.msra.mxu0 0
        %2701 = vmatpush.bf16.msra.mxu0 0
        %2702 = vmatpush.bf16.msra.mxu0 0
        %2703 = vmatpush.bf16.msra.mxu0 0
        %2704 = vmatpush.bf16.msra.mxu0 0
        %2705 = vmatpush.bf16.msra.mxu0 %v2696
        %2706 = vmatmul.bf16.gmra.mxu0 %v2663
        %v2707 = vpop.f32.mrf.mxu0
        %v2708 = vadd.f32 0.0, %v2707
        %v2709 = vpop.f32.mrf.mxu0
        %v2710 = vadd.f32 0.0, %v2709
        %2711 = vmatmul.bf16.gmra.mxu0 %v2665
        %v2712 = vpop.f32.mrf.mxu0
        %v2713 = vadd.f32 0.0, %v2712
        %v2714 = vpop.f32.mrf.mxu0
        %v2715 = vadd.f32 0.0, %v2714
        %2716 = vmatmul.bf16.gmra.mxu0 %v2667
        %v2717 = vpop.f32.mrf.mxu0
        %v2718 = vadd.f32 0.0, %v2717
        %v2719 = vpop.f32.mrf.mxu0
        %v2720 = vadd.f32 0.0, %v2719
        %2721 = vmatmul.bf16.gmra.mxu0 %v2669
        %v2722 = vpop.f32.mrf.mxu0
        %v2723 = vadd.f32 0.0, %v2722
        %v2724 = vpop.f32.mrf.mxu0
        %v2725 = vadd.f32 0.0, %v2724
        %2726 = vmatmul.bf16.gmra.mxu0 %v2671
        %v2727 = vpop.f32.mrf.mxu0
        %v2728 = vadd.f32 0.0, %v2727
        %v2729 = vpop.f32.mrf.mxu0
        %v2730 = vadd.f32 0.0, %v2729
        %2731 = vmatmul.bf16.gmra.mxu0 %v2673
        %v2732 = vpop.f32.mrf.mxu0
        %v2733 = vadd.f32 0.0, %v2732
        %v2734 = vpop.f32.mrf.mxu0
        %v2735 = vadd.f32 0.0, %v2734
        %2736 = vmatmul.bf16.gmra.mxu0 %v2675
        %v2737 = vpop.f32.mrf.mxu0
        %v2738 = vadd.f32 0.0, %v2737
        %v2739 = vpop.f32.mrf.mxu0
        %v2740 = vadd.f32 0.0, %v2739
        %2741 = vmatmul.bf16.gmra.mxu0 %v2677
        %v2742 = vpop.f32.mrf.mxu0
        %v2743 = vadd.f32 0.0, %v2742
        %v2744 = vpop.f32.mrf.mxu0
        %v2745 = vadd.f32 0.0, %v2744
        %2746 = vmatmul.bf16.gmra.mxu0 %v2679
        %v2747 = vpop.f32.mrf.mxu0
        %v2748 = vadd.f32 0.0, %v2747
        %v2749 = vpop.f32.mrf.mxu0
        %v2750 = vadd.f32 0.0, %v2749
        %2751 = vmatmul.bf16.gmra.mxu0 %v2681
        %v2752 = vpop.f32.mrf.mxu0
        %v2753 = vadd.f32 0.0, %v2752
        %v2754 = vpop.f32.mrf.mxu0
        %v2755 = vadd.f32 0.0, %v2754
        %2756 = vmatmul.bf16.gmra.mxu0 %v2683
        %v2757 = vpop.f32.mrf.mxu0
        %v2758 = vadd.f32 0.0, %v2757
        %v2759 = vpop.f32.mrf.mxu0
        %v2760 = vadd.f32 0.0, %v2759
        %2761 = vmatmul.bf16.gmra.mxu0 %v2685
        %v2762 = vpop.f32.mrf.mxu0
        %v2763 = vadd.f32 0.0, %v2762
        %v2764 = vpop.f32.mrf.mxu0
        %v2765 = vadd.f32 0.0, %v2764
        %2766 = vmatmul.bf16.gmra.mxu0 %v2687
        %v2767 = vpop.f32.mrf.mxu0
        %v2768 = vadd.f32 0.0, %v2767
        %v2769 = vpop.f32.mrf.mxu0
        %v2770 = vadd.f32 0.0, %v2769
        %2771 = vmatmul.bf16.gmra.mxu0 %v2689
        %v2772 = vpop.f32.mrf.mxu0
        %v2773 = vadd.f32 0.0, %v2772
        %v2774 = vpop.f32.mrf.mxu0
        %v2775 = vadd.f32 0.0, %v2774
        %2776 = vmatmul.bf16.gmra.mxu0 %v2691
        %v2777 = vpop.f32.mrf.mxu0
        %v2778 = vadd.f32 0.0, %v2777
        %v2779 = vpop.f32.mrf.mxu0
        %v2780 = vadd.f32 0.0, %v2779
        %2781 = vmatmul.bf16.gmra.mxu0 %v2693
        %v2782 = vpop.f32.mrf.mxu0
        %v2783 = vadd.f32 0.0, %v2782
        %v2784 = vpop.f32.mrf.mxu0
        %v2785 = vadd.f32 0.0, %v2784
        %2786 = vdwg.mxu0
        %v2787 = vadd.f32 %v2031, %v2708
        %v2788 = vadd.f32 %v2033, %v2710
        %v2789 = vadd.f32 %v2036, %v2713
        %v2790 = vadd.f32 %v2038, %v2715
        %v2791 = vadd.f32 %v2041, %v2718
        %v2792 = vadd.f32 %v2043, %v2720
        %v2793 = vadd.f32 %v2046, %v2723
        %v2794 = vadd.f32 %v2048, %v2725
        %v2795 = vadd.f32 %v2051, %v2728
        %v2796 = vadd.f32 %v2053, %v2730
        %v2797 = vadd.f32 %v2056, %v2733
        %v2798 = vadd.f32 %v2058, %v2735
        %v2799 = vadd.f32 %v2061, %v2738
        %v2800 = vadd.f32 %v2063, %v2740
        %v2801 = vadd.f32 %v2066, %v2743
        %v2802 = vadd.f32 %v2068, %v2745
        %v2803 = vadd.f32 %v2071, %v2748
        %v2804 = vadd.f32 %v2073, %v2750
        %v2805 = vadd.f32 %v2076, %v2753
        %v2806 = vadd.f32 %v2078, %v2755
        %v2807 = vadd.f32 %v2081, %v2758
        %v2808 = vadd.f32 %v2083, %v2760
        %v2809 = vadd.f32 %v2086, %v2763
        %v2810 = vadd.f32 %v2088, %v2765
        %v2811 = vadd.f32 %v2091, %v2768
        %v2812 = vadd.f32 %v2093, %v2770
        %v2813 = vadd.f32 %v2096, %v2773
        %v2814 = vadd.f32 %v2098, %v2775
        %v2815 = vadd.f32 %v2101, %v2778
        %v2816 = vadd.f32 %v2103, %v2780
        %v2817 = vadd.f32 %v2106, %v2783
        %v2818 = vadd.f32 %v2108, %v2785
        %v2819 = vld [vmem:[%s2] sm:$0x1]
        %v2821 = vperm.slane %v2819, 0
        %v2823 = vadd.f32 %v2787, %v2821
        %v2824 = vadd.f32 %v2788, %v2821
        %v2825 = vadd.f32 %v2789, %v2821
        %v2826 = vadd.f32 %v2790, %v2821
        %v2827 = vadd.f32 %v2791, %v2821
        %v2828 = vadd.f32 %v2792, %v2821
        %v2829 = vadd.f32 %v2793, %v2821
        %v2830 = vadd.f32 %v2794, %v2821
        %v2831 = vadd.f32 %v2795, %v2821
        %v2832 = vadd.f32 %v2796, %v2821
        %v2833 = vadd.f32 %v2797, %v2821
        %v2834 = vadd.f32 %v2798, %v2821
        %v2835 = vadd.f32 %v2799, %v2821
        %v2836 = vadd.f32 %v2800, %v2821
        %v2837 = vadd.f32 %v2801, %v2821
        %v2838 = vadd.f32 %v2802, %v2821
        %v2839 = vadd.f32 %v2803, %v2821
        %v2840 = vadd.f32 %v2804, %v2821
        %v2841 = vadd.f32 %v2805, %v2821
        %v2842 = vadd.f32 %v2806, %v2821
        %v2843 = vadd.f32 %v2807, %v2821
        %v2844 = vadd.f32 %v2808, %v2821
        %v2845 = vadd.f32 %v2809, %v2821
        %v2846 = vadd.f32 %v2810, %v2821
        %v2847 = vadd.f32 %v2811, %v2821
        %v2848 = vadd.f32 %v2812, %v2821
        %v2849 = vadd.f32 %v2813, %v2821
        %v2850 = vadd.f32 %v2814, %v2821
        %v2851 = vadd.f32 %v2815, %v2821
        %v2852 = vadd.f32 %v2816, %v2821
        %v2853 = vadd.f32 %v2817, %v2821
        %v2854 = vadd.f32 %v2818, %v2821
        %vm2855 = vcmp.ge.f32.partialorder %v2823, 0.0
        %vm2856 = vcmp.ge.f32.partialorder %v2824, 0.0
        %vm2857 = vcmp.ge.f32.partialorder %v2825, 0.0
        %vm2858 = vcmp.ge.f32.partialorder %v2826, 0.0
        %vm2859 = vcmp.ge.f32.partialorder %v2827, 0.0
        %vm2860 = vcmp.ge.f32.partialorder %v2828, 0.0
        %vm2861 = vcmp.ge.f32.partialorder %v2829, 0.0
        %vm2862 = vcmp.ge.f32.partialorder %v2830, 0.0
        %vm2863 = vcmp.ge.f32.partialorder %v2831, 0.0
        %vm2864 = vcmp.ge.f32.partialorder %v2832, 0.0
        %vm2865 = vcmp.ge.f32.partialorder %v2833, 0.0
        %vm2866 = vcmp.ge.f32.partialorder %v2834, 0.0
        %vm2867 = vcmp.ge.f32.partialorder %v2835, 0.0
        %vm2868 = vcmp.ge.f32.partialorder %v2836, 0.0
        %vm2869 = vcmp.ge.f32.partialorder %v2837, 0.0
        %vm2870 = vcmp.ge.f32.partialorder %v2838, 0.0
        %vm2871 = vcmp.ge.f32.partialorder %v2839, 0.0
        %vm2872 = vcmp.ge.f32.partialorder %v2840, 0.0
        %vm2873 = vcmp.ge.f32.partialorder %v2841, 0.0
        %vm2874 = vcmp.ge.f32.partialorder %v2842, 0.0
        %vm2875 = vcmp.ge.f32.partialorder %v2843, 0.0
        %vm2876 = vcmp.ge.f32.partialorder %v2844, 0.0
        %vm2877 = vcmp.ge.f32.partialorder %v2845, 0.0
        %vm2878 = vcmp.ge.f32.partialorder %v2846, 0.0
        %vm2879 = vcmp.ge.f32.partialorder %v2847, 0.0
        %vm2880 = vcmp.ge.f32.partialorder %v2848, 0.0
        %vm2881 = vcmp.ge.f32.partialorder %v2849, 0.0
        %vm2882 = vcmp.ge.f32.partialorder %v2850, 0.0
        %vm2883 = vcmp.ge.f32.partialorder %v2851, 0.0
        %vm2884 = vcmp.ge.f32.partialorder %v2852, 0.0
        %vm2885 = vcmp.ge.f32.partialorder %v2853, 0.0
        %vm2886 = vcmp.ge.f32.partialorder %v2854, 0.0
        %v2887 = vmul.f32 %v2823, 0.2
        %v2888 = vmul.f32 %v2824, 0.2
        %v2889 = vmul.f32 %v2825, 0.2
        %v2890 = vmul.f32 %v2826, 0.2
        %v2891 = vmul.f32 %v2827, 0.2
        %v2892 = vmul.f32 %v2828, 0.2
        %v2893 = vmul.f32 %v2829, 0.2
        %v2894 = vmul.f32 %v2830, 0.2
        %v2895 = vmul.f32 %v2831, 0.2
        %v2896 = vmul.f32 %v2832, 0.2
        %v2897 = vmul.f32 %v2833, 0.2
        %v2898 = vmul.f32 %v2834, 0.2
        %v2899 = vmul.f32 %v2835, 0.2
        %v2900 = vmul.f32 %v2836, 0.2
        %v2901 = vmul.f32 %v2837, 0.2
        %v2902 = vmul.f32 %v2838, 0.2
        %v2903 = vmul.f32 %v2839, 0.2
        %v2904 = vmul.f32 %v2840, 0.2
        %v2905 = vmul.f32 %v2841, 0.2
        %v2906 = vmul.f32 %v2842, 0.2
        %v2907 = vmul.f32 %v2843, 0.2
        %v2908 = vmul.f32 %v2844, 0.2
        %v2909 = vmul.f32 %v2845, 0.2
        %v2910 = vmul.f32 %v2846, 0.2
        %v2911 = vmul.f32 %v2847, 0.2
        %v2912 = vmul.f32 %v2848, 0.2
        %v2913 = vmul.f32 %v2849, 0.2
        %v2914 = vmul.f32 %v2850, 0.2
        %v2915 = vmul.f32 %v2851, 0.2
        %v2916 = vmul.f32 %v2852, 0.2
        %v2917 = vmul.f32 %v2853, 0.2
        %v2918 = vmul.f32 %v2854, 0.2
        %v2919 = vsel %vm2855, %v2823, %v2887
        %v2920 = vsel %vm2856, %v2824, %v2888
        %v2921 = vsel %vm2857, %v2825, %v2889
        %v2922 = vsel %vm2858, %v2826, %v2890
        %v2923 = vsel %vm2859, %v2827, %v2891
        %v2924 = vsel %vm2860, %v2828, %v2892
        %v2925 = vsel %vm2861, %v2829, %v2893
        %v2926 = vsel %vm2862, %v2830, %v2894
        %v2927 = vsel %vm2863, %v2831, %v2895
        %v2928 = vsel %vm2864, %v2832, %v2896
        %v2929 = vsel %vm2865, %v2833, %v2897
        %v2930 = vsel %vm2866, %v2834, %v2898
        %v2931 = vsel %vm2867, %v2835, %v2899
        %v2932 = vsel %vm2868, %v2836, %v2900
        %v2933 = vsel %vm2869, %v2837, %v2901
        %v2934 = vsel %vm2870, %v2838, %v2902
        %v2935 = vsel %vm2871, %v2839, %v2903
        %v2936 = vsel %vm2872, %v2840, %v2904
        %v2937 = vsel %vm2873, %v2841, %v2905
        %v2938 = vsel %vm2874, %v2842, %v2906
        %v2939 = vsel %vm2875, %v2843, %v2907
        %v2940 = vsel %vm2876, %v2844, %v2908
        %v2941 = vsel %vm2877, %v2845, %v2909
        %v2942 = vsel %vm2878, %v2846, %v2910
        %v2943 = vsel %vm2879, %v2847, %v2911
        %v2944 = vsel %vm2880, %v2848, %v2912
        %v2945 = vsel %vm2881, %v2849, %v2913
        %v2946 = vsel %vm2882, %v2850, %v2914
        %v2947 = vsel %vm2883, %v2851, %v2915
        %v2948 = vsel %vm2884, %v2852, %v2916
        %v2949 = vsel %vm2885, %v2853, %v2917
        %v2950 = vsel %vm2886, %v2854, %v2918
        %vm2951 = vcmask 257024
        %2952 = vst.msk [vmem:[#allocation3] sm:$0xf] %vm2951, 0
        %2953 = vst.msk [vmem:[#allocation3 + $0x4] sm:$0xf] %vm2951, 0
        %vm2954 = vcmask 253952
        %2955 = vst.msk [vmem:[#allocation3 + $0x8] sm:$0x1] %vm2954, 0
        %2956 = vst.msk [vmem:[#allocation3 + $0xc] sm:$0xf] %vm2951, 0
        %2957 = vst.msk [vmem:[#allocation3 + $0x10] sm:$0xf] %vm2951, 0
        %2958 = vst.msk [vmem:[#allocation3 + $0x14] sm:$0x1] %vm2954, 0
        %2959 = vst.msk [vmem:[#allocation3 + $0x18] sm:$0xf] %vm2951, 0
        %2960 = vst.msk [vmem:[#allocation3 + $0x1c] sm:$0xf] %vm2951, 0
        %2961 = vst.msk [vmem:[#allocation3 + $0x20] sm:$0x1] %vm2954, 0
        %2962 = vst.msk [vmem:[#allocation3 + $0x24] sm:$0xf] %vm2951, 0
        %2963 = vst.msk [vmem:[#allocation3 + $0x28] sm:$0xf] %vm2951, 0
        %2964 = vst.msk [vmem:[#allocation3 + $0x2c] sm:$0x1] %vm2954, 0
        %2965 = vst.msk [vmem:[#allocation3 + $0x30] sm:$0xf] %vm2951, 0
        %2966 = vst.msk [vmem:[#allocation3 + $0x34] sm:$0xf] %vm2951, 0
        %2967 = vst.msk [vmem:[#allocation3 + $0x38] sm:$0x1] %vm2954, 0
        %2968 = vst.msk [vmem:[#allocation3 + $0x3c] sm:$0xf] %vm2951, 0
        %2969 = vst.msk [vmem:[#allocation3 + $0x40] sm:$0xf] %vm2951, 0
        %2970 = vst.msk [vmem:[#allocation3 + $0x44] sm:$0x1] %vm2954, 0
        %2971 = vst.msk [vmem:[#allocation3 + $0x48] sm:$0xf] %vm2951, 0
        %2972 = vst.msk [vmem:[#allocation3 + $0x4c] sm:$0xf] %vm2951, 0
        %2973 = vst.msk [vmem:[#allocation3 + $0x50] sm:$0x1] %vm2954, 0
        %2974 = vst.msk [vmem:[#allocation3 + $0x54] sm:$0xf] %vm2951, 0
        %2975 = vst.msk [vmem:[#allocation3 + $0x58] sm:$0xf] %vm2951, 0
        %2976 = vst.msk [vmem:[#allocation3 + $0x5c] sm:$0x1] %vm2954, 0
        %2977 = vst.msk [vmem:[#allocation3 + $0x60] sm:$0xf] %vm2951, 0
        %2978 = vst.msk [vmem:[#allocation3 + $0x64] sm:$0xf] %vm2951, 0
        %2979 = vst.msk [vmem:[#allocation3 + $0x68] sm:$0x1] %vm2954, 0
        %2980 = vst.msk [vmem:[#allocation3 + $0x6c] sm:$0xf] %vm2951, 0
        %2981 = vst.msk [vmem:[#allocation3 + $0x70] sm:$0xf] %vm2951, 0
        %2982 = vst.msk [vmem:[#allocation3 + $0x74] sm:$0x1] %vm2954, 0
        %2983 = vst.msk [vmem:[#allocation3 + $0x78] sm:$0xf] %vm2951, 0
        %2984 = vst.msk [vmem:[#allocation3 + $0x7c] sm:$0xf] %vm2951, 0
        %2985 = vst.msk [vmem:[#allocation3 + $0x80] sm:$0x1] %vm2954, 0
        %2986 = vst.msk [vmem:[#allocation3 + $0x84] sm:$0xf] %vm2951, 0
        %2987 = vst.msk [vmem:[#allocation3 + $0x88] sm:$0xf] %vm2951, 0
        %2988 = vst.msk [vmem:[#allocation3 + $0x8c] sm:$0x1] %vm2954, 0
        %2989 = vst.msk [vmem:[#allocation3 + $0x90] sm:$0xf] %vm2951, 0
        %2990 = vst.msk [vmem:[#allocation3 + $0x94] sm:$0xf] %vm2951, 0
        %2991 = vst.msk [vmem:[#allocation3 + $0x98] sm:$0x1] %vm2954, 0
        %2992 = vst.msk [vmem:[#allocation3 + $0x9c] sm:$0xf] %vm2951, 0
        %2993 = vst.msk [vmem:[#allocation3 + $0xa0] sm:$0xf] %vm2951, 0
        %2994 = vst.msk [vmem:[#allocation3 + $0xa4] sm:$0x1] %vm2954, 0
        %2995 = vst.msk [vmem:[#allocation3 + $0xa8] sm:$0xf] %vm2951, 0
        %2996 = vst.msk [vmem:[#allocation3 + $0xac] sm:$0xf] %vm2951, 0
        %2997 = vst.msk [vmem:[#allocation3 + $0xb0] sm:$0x1] %vm2954, 0
        %2998 = vst.msk [vmem:[#allocation3 + $0xb4] sm:$0xf] %vm2951, 0
        %2999 = vst.msk [vmem:[#allocation3 + $0xb8] sm:$0xf] %vm2951, 0
        %3000 = vst.msk [vmem:[#allocation3 + $0xbc] sm:$0x1] %vm2954, 0
        %3001 = vst.msk [vmem:[#allocation3 + $0xc0] sm:$0xf] %vm2951, 0
        %3002 = vst.msk [vmem:[#allocation3 + $0xc4] sm:$0xf] %vm2951, 0
        %3003 = vst.msk [vmem:[#allocation3 + $0xc8] sm:$0x1] %vm2954, 0
        %3004 = vst.msk [vmem:[#allocation3 + $0xcc] sm:$0xf] %vm2951, 0
        %3005 = vst.msk [vmem:[#allocation3 + $0xd0] sm:$0xf] %vm2951, 0
        %3006 = vst.msk [vmem:[#allocation3 + $0xd4] sm:$0x1] %vm2954, 0
        %v3007 = vpack.c.bf16 %v2919, %v2919
        %v3008 = vpack.c.bf16 %v2920, %v2920
        %v3009 = vpack.c.bf16 %v2921, %v2921
        %v3010 = vpack.c.bf16 %v2922, %v2922
        %v3011 = vpack.c.bf16 %v2923, %v2923
        %v3012 = vpack.c.bf16 %v2924, %v2924
        %v3013 = vpack.c.bf16 %v2925, %v2925
        %v3014 = vpack.c.bf16 %v2926, %v2926
        %v3015 = vpack.c.bf16 %v2927, %v2927
        %v3016 = vpack.c.bf16 %v2928, %v2928
        %v3017 = vpack.c.bf16 %v2929, %v2929
        %v3018 = vpack.c.bf16 %v2930, %v2930
        %v3019 = vpack.c.bf16 %v2931, %v2931
        %v3020 = vpack.c.bf16 %v2932, %v2932
        %v3021 = vpack.c.bf16 %v2933, %v2933
        %v3022 = vpack.c.bf16 %v2934, %v2934
        %v3023 = vpack.c.bf16 %v2935, %v2935
        %v3024 = vpack.c.bf16 %v2936, %v2936
        %v3025 = vpack.c.bf16 %v2937, %v2937
        %v3026 = vpack.c.bf16 %v2938, %v2938
        %v3027 = vpack.c.bf16 %v2939, %v2939
        %v3028 = vpack.c.bf16 %v2940, %v2940
        %v3029 = vpack.c.bf16 %v2941, %v2941
        %v3030 = vpack.c.bf16 %v2942, %v2942
        %v3031 = vpack.c.bf16 %v2943, %v2943
        %v3032 = vpack.c.bf16 %v2944, %v2944
        %v3033 = vpack.c.bf16 %v2945, %v2945
        %v3034 = vpack.c.bf16 %v2946, %v2946
        %v3035 = vpack.c.bf16 %v2947, %v2947
        %v3036 = vpack.c.bf16 %v2948, %v2948
        %v3037 = vpack.c.bf16 %v2949, %v2949
        %v3038 = vpack.c.bf16 %v2950, %v2950
        %v3040 = vshrl.u32 %v3007, 16
        %v3042 = vrot.slane %v3040, 7
        %v3043 = vshll.u32 %v3007, 16
        %v3045 = vor.u32 %v3042, %v3043
        %v3046 = vrot.slane %v3042, 4
        %v3048 = vshrl.u32 %v3008, 16
        %v3050 = vrot.slane %v3048, 7
        %v3051 = vshll.u32 %v3008, 16
        %v3053 = vor.u32 %v3050, %v3051
        %v3054 = vsel %vm314, %v3046, %v3053
        %v3055 = vrot.slane %v3050, 4
        %v3057 = vshrl.u32 %v3009, 16
        %v3059 = vrot.slane %v3057, 7
        %v3060 = vshll.u32 %v3009, 16
        %v3062 = vor.u32 %v3059, %v3060
        %v3063 = vrot.slane %v3059, 4
        %v3065 = vshrl.u32 %v3010, 16
        %v3067 = vrot.slane %v3065, 7
        %v3068 = vshll.u32 %v3010, 16
        %v3070 = vor.u32 %v3067, %v3068
        %v3071 = vsel %vm314, %v3063, %v3070
        %v3072 = vrot.slane %v3067, 4
        %v3074 = vshrl.u32 %v3011, 16
        %v3076 = vrot.slane %v3074, 7
        %v3077 = vshll.u32 %v3011, 16
        %v3079 = vor.u32 %v3076, %v3077
        %v3080 = vrot.slane %v3076, 4
        %v3082 = vshrl.u32 %v3012, 16
        %v3084 = vrot.slane %v3082, 7
        %v3085 = vshll.u32 %v3012, 16
        %v3087 = vor.u32 %v3084, %v3085
        %v3088 = vsel %vm314, %v3080, %v3087
        %v3089 = vrot.slane %v3084, 4
        %v3091 = vshrl.u32 %v3013, 16
        %v3093 = vrot.slane %v3091, 7
        %v3094 = vshll.u32 %v3013, 16
        %v3096 = vor.u32 %v3093, %v3094
        %v3097 = vrot.slane %v3093, 4
        %v3099 = vshrl.u32 %v3014, 16
        %v3101 = vrot.slane %v3099, 7
        %v3102 = vshll.u32 %v3014, 16
        %v3104 = vor.u32 %v3101, %v3102
        %v3105 = vsel %vm314, %v3097, %v3104
        %v3106 = vrot.slane %v3101, 4
        %v3108 = vshrl.u32 %v3015, 16
        %v3110 = vrot.slane %v3108, 7
        %v3111 = vshll.u32 %v3015, 16
        %v3113 = vor.u32 %v3110, %v3111
        %v3114 = vrot.slane %v3110, 4
        %v3116 = vshrl.u32 %v3016, 16
        %v3118 = vrot.slane %v3116, 7
        %v3119 = vshll.u32 %v3016, 16
        %v3121 = vor.u32 %v3118, %v3119
        %v3122 = vsel %vm314, %v3114, %v3121
        %v3123 = vrot.slane %v3118, 4
        %v3125 = vshrl.u32 %v3017, 16
        %v3127 = vrot.slane %v3125, 7
        %v3128 = vshll.u32 %v3017, 16
        %v3130 = vor.u32 %v3127, %v3128
        %v3131 = vrot.slane %v3127, 4
        %v3133 = vshrl.u32 %v3018, 16
        %v3135 = vrot.slane %v3133, 7
        %v3136 = vshll.u32 %v3018, 16
        %v3138 = vor.u32 %v3135, %v3136
        %v3139 = vsel %vm314, %v3131, %v3138
        %v3140 = vrot.slane %v3135, 4
        %v3142 = vshrl.u32 %v3019, 16
        %v3144 = vrot.slane %v3142, 7
        %v3145 = vshll.u32 %v3019, 16
        %v3147 = vor.u32 %v3144, %v3145
        %v3148 = vrot.slane %v3144, 4
        %v3150 = vshrl.u32 %v3020, 16
        %v3152 = vrot.slane %v3150, 7
        %v3153 = vshll.u32 %v3020, 16
        %v3155 = vor.u32 %v3152, %v3153
        %v3156 = vsel %vm314, %v3148, %v3155
        %v3157 = vrot.slane %v3152, 4
        %v3159 = vshrl.u32 %v3021, 16
        %v3161 = vrot.slane %v3159, 7
        %v3162 = vshll.u32 %v3021, 16
        %v3164 = vor.u32 %v3161, %v3162
        %v3165 = vrot.slane %v3161, 4
        %v3167 = vshrl.u32 %v3022, 16
        %v3169 = vrot.slane %v3167, 7
        %v3170 = vshll.u32 %v3022, 16
        %v3172 = vor.u32 %v3169, %v3170
        %v3173 = vsel %vm314, %v3165, %v3172
        %v3174 = vrot.slane %v3169, 4
        %v3176 = vshrl.u32 %v3023, 16
        %v3178 = vrot.slane %v3176, 7
        %v3179 = vshll.u32 %v3023, 16
        %v3181 = vor.u32 %v3178, %v3179
        %v3182 = vrot.slane %v3178, 4
        %v3184 = vshrl.u32 %v3024, 16
        %v3186 = vrot.slane %v3184, 7
        %v3187 = vshll.u32 %v3024, 16
        %v3189 = vor.u32 %v3186, %v3187
        %v3190 = vsel %vm314, %v3182, %v3189
        %v3191 = vrot.slane %v3186, 4
        %v3193 = vshrl.u32 %v3025, 16
        %v3195 = vrot.slane %v3193, 7
        %v3196 = vshll.u32 %v3025, 16
        %v3198 = vor.u32 %v3195, %v3196
        %v3199 = vrot.slane %v3195, 4
        %v3201 = vshrl.u32 %v3026, 16
        %v3203 = vrot.slane %v3201, 7
        %v3204 = vshll.u32 %v3026, 16
        %v3206 = vor.u32 %v3203, %v3204
        %v3207 = vsel %vm314, %v3199, %v3206
        %v3208 = vrot.slane %v3203, 4
        %v3210 = vshrl.u32 %v3027, 16
        %v3212 = vrot.slane %v3210, 7
        %v3213 = vshll.u32 %v3027, 16
        %v3215 = vor.u32 %v3212, %v3213
        %v3216 = vrot.slane %v3212, 4
        %v3218 = vshrl.u32 %v3028, 16
        %v3220 = vrot.slane %v3218, 7
        %v3221 = vshll.u32 %v3028, 16
        %v3223 = vor.u32 %v3220, %v3221
        %v3224 = vsel %vm314, %v3216, %v3223
        %v3225 = vrot.slane %v3220, 4
        %v3227 = vshrl.u32 %v3029, 16
        %v3229 = vrot.slane %v3227, 7
        %v3230 = vshll.u32 %v3029, 16
        %v3232 = vor.u32 %v3229, %v3230
        %v3233 = vrot.slane %v3229, 4
        %v3235 = vshrl.u32 %v3030, 16
        %v3237 = vrot.slane %v3235, 7
        %v3238 = vshll.u32 %v3030, 16
        %v3240 = vor.u32 %v3237, %v3238
        %v3241 = vsel %vm314, %v3233, %v3240
        %v3242 = vrot.slane %v3237, 4
        %v3244 = vshrl.u32 %v3031, 16
        %v3246 = vrot.slane %v3244, 7
        %v3247 = vshll.u32 %v3031, 16
        %v3249 = vor.u32 %v3246, %v3247
        %v3250 = vrot.slane %v3246, 4
        %v3252 = vshrl.u32 %v3032, 16
        %v3254 = vrot.slane %v3252, 7
        %v3255 = vshll.u32 %v3032, 16
        %v3257 = vor.u32 %v3254, %v3255
        %v3258 = vsel %vm314, %v3250, %v3257
        %v3259 = vrot.slane %v3254, 4
        %v3261 = vshrl.u32 %v3033, 16
        %v3263 = vrot.slane %v3261, 7
        %v3264 = vshll.u32 %v3033, 16
        %v3266 = vor.u32 %v3263, %v3264
        %v3267 = vrot.slane %v3263, 4
        %v3269 = vshrl.u32 %v3034, 16
        %v3271 = vrot.slane %v3269, 7
        %v3272 = vshll.u32 %v3034, 16
        %v3274 = vor.u32 %v3271, %v3272
        %v3275 = vsel %vm314, %v3267, %v3274
        %v3276 = vrot.slane %v3271, 4
        %v3278 = vshrl.u32 %v3035, 16
        %v3280 = vrot.slane %v3278, 7
        %v3281 = vshll.u32 %v3035, 16
        %v3283 = vor.u32 %v3280, %v3281
        %v3284 = vrot.slane %v3280, 4
        %v3286 = vshrl.u32 %v3036, 16
        %v3288 = vrot.slane %v3286, 7
        %v3289 = vshll.u32 %v3036, 16
        %v3291 = vor.u32 %v3288, %v3289
        %v3292 = vsel %vm314, %v3284, %v3291
        %v3293 = vrot.slane %v3288, 4
        %v3295 = vshrl.u32 %v3037, 16
        %v3297 = vrot.slane %v3295, 7
        %v3298 = vshll.u32 %v3037, 16
        %v3300 = vor.u32 %v3297, %v3298
        %v3301 = vrot.slane %v3297, 4
        %v3303 = vshrl.u32 %v3038, 16
        %v3305 = vrot.slane %v3303, 7
        %v3306 = vshll.u32 %v3038, 16
        %v3308 = vor.u32 %v3305, %v3306
        %v3309 = vsel %vm314, %v3301, %v3308
        %v3310 = vrot.slane %v3305, 4
        %s3359 = scalar_lea.vmem [#allocation3], 12
        %vm3360 = vcmask 257024
        %vm3361 = vmand %vm3360, %vm637
        %v3362 = vld [vmem:[%s3359] sm:$0xf]
        %v3363 = vsel %vm3361, %v3045, %v3362
        %3364 = vst [vmem:[%s3359] sm:$0xf] %v3363
        %3365 = vst.msk [vmem:[%s3359 + $0x4] sm:$0xf] %vm2951, %v3054
        %vm3366 = vcmask 253952
        %vm3367 = vmand %vm3366, %vm312
        %v3368 = vld [vmem:[%s3359 + $0x8] sm:$0x1]
        %v3369 = vsel %vm3367, %v3055, %v3368
        %3370 = vst [vmem:[%s3359 + $0x8] sm:$0x1] %v3369
        %v3371 = vld [vmem:[%s3359 + $0xc] sm:$0xf]
        %v3372 = vsel %vm3361, %v3062, %v3371
        %3373 = vst [vmem:[%s3359 + $0xc] sm:$0xf] %v3372
        %3374 = vst.msk [vmem:[%s3359 + $0x10] sm:$0xf] %vm2951, %v3071
        %v3375 = vld [vmem:[%s3359 + $0x14] sm:$0x1]
        %v3376 = vsel %vm3367, %v3072, %v3375
        %3377 = vst [vmem:[%s3359 + $0x14] sm:$0x1] %v3376
        %v3378 = vld [vmem:[%s3359 + $0x18] sm:$0xf]
        %v3379 = vsel %vm3361, %v3079, %v3378
        %3380 = vst [vmem:[%s3359 + $0x18] sm:$0xf] %v3379
        %3381 = vst.msk [vmem:[%s3359 + $0x1c] sm:$0xf] %vm2951, %v3088
        %v3382 = vld [vmem:[%s3359 + $0x20] sm:$0x1]
        %v3383 = vsel %vm3367, %v3089, %v3382
        %3384 = vst [vmem:[%s3359 + $0x20] sm:$0x1] %v3383
        %v3385 = vld [vmem:[%s3359 + $0x24] sm:$0xf]
        %v3386 = vsel %vm3361, %v3096, %v3385
        %3387 = vst [vmem:[%s3359 + $0x24] sm:$0xf] %v3386
        %3388 = vst.msk [vmem:[%s3359 + $0x28] sm:$0xf] %vm2951, %v3105
        %v3389 = vld [vmem:[%s3359 + $0x2c] sm:$0x1]
        %v3390 = vsel %vm3367, %v3106, %v3389
        %3391 = vst [vmem:[%s3359 + $0x2c] sm:$0x1] %v3390
        %v3392 = vld [vmem:[%s3359 + $0x30] sm:$0xf]
        %v3393 = vsel %vm3361, %v3113, %v3392
        %3394 = vst [vmem:[%s3359 + $0x30] sm:$0xf] %v3393
        %3395 = vst.msk [vmem:[%s3359 + $0x34] sm:$0xf] %vm2951, %v3122
        %v3396 = vld [vmem:[%s3359 + $0x38] sm:$0x1]
        %v3397 = vsel %vm3367, %v3123, %v3396
        %3398 = vst [vmem:[%s3359 + $0x38] sm:$0x1] %v3397
        %v3399 = vld [vmem:[%s3359 + $0x3c] sm:$0xf]
        %v3400 = vsel %vm3361, %v3130, %v3399
        %3401 = vst [vmem:[%s3359 + $0x3c] sm:$0xf] %v3400
        %3402 = vst.msk [vmem:[%s3359 + $0x40] sm:$0xf] %vm2951, %v3139
        %v3403 = vld [vmem:[%s3359 + $0x44] sm:$0x1]
        %v3404 = vsel %vm3367, %v3140, %v3403
        %3405 = vst [vmem:[%s3359 + $0x44] sm:$0x1] %v3404
        %v3406 = vld [vmem:[%s3359 + $0x48] sm:$0xf]
        %v3407 = vsel %vm3361, %v3147, %v3406
        %3408 = vst [vmem:[%s3359 + $0x48] sm:$0xf] %v3407
        %3409 = vst.msk [vmem:[%s3359 + $0x4c] sm:$0xf] %vm2951, %v3156
        %v3410 = vld [vmem:[%s3359 + $0x50] sm:$0x1]
        %v3411 = vsel %vm3367, %v3157, %v3410
        %3412 = vst [vmem:[%s3359 + $0x50] sm:$0x1] %v3411
        %v3413 = vld [vmem:[%s3359 + $0x54] sm:$0xf]
        %v3414 = vsel %vm3361, %v3164, %v3413
        %3415 = vst [vmem:[%s3359 + $0x54] sm:$0xf] %v3414
        %3416 = vst.msk [vmem:[%s3359 + $0x58] sm:$0xf] %vm2951, %v3173
        %v3417 = vld [vmem:[%s3359 + $0x5c] sm:$0x1]
        %v3418 = vsel %vm3367, %v3174, %v3417
        %3419 = vst [vmem:[%s3359 + $0x5c] sm:$0x1] %v3418
        %v3420 = vld [vmem:[%s3359 + $0x60] sm:$0xf]
        %v3421 = vsel %vm3361, %v3181, %v3420
        %3422 = vst [vmem:[%s3359 + $0x60] sm:$0xf] %v3421
        %3423 = vst.msk [vmem:[%s3359 + $0x64] sm:$0xf] %vm2951, %v3190
        %v3424 = vld [vmem:[%s3359 + $0x68] sm:$0x1]
        %v3425 = vsel %vm3367, %v3191, %v3424
        %3426 = vst [vmem:[%s3359 + $0x68] sm:$0x1] %v3425
        %v3427 = vld [vmem:[%s3359 + $0x6c] sm:$0xf]
        %v3428 = vsel %vm3361, %v3198, %v3427
        %3429 = vst [vmem:[%s3359 + $0x6c] sm:$0xf] %v3428
        %3430 = vst.msk [vmem:[%s3359 + $0x70] sm:$0xf] %vm2951, %v3207
        %v3431 = vld [vmem:[%s3359 + $0x74] sm:$0x1]
        %v3432 = vsel %vm3367, %v3208, %v3431
        %3433 = vst [vmem:[%s3359 + $0x74] sm:$0x1] %v3432
        %v3434 = vld [vmem:[%s3359 + $0x78] sm:$0xf]
        %v3435 = vsel %vm3361, %v3215, %v3434
        %3436 = vst [vmem:[%s3359 + $0x78] sm:$0xf] %v3435
        %3437 = vst.msk [vmem:[%s3359 + $0x7c] sm:$0xf] %vm2951, %v3224
        %v3438 = vld [vmem:[%s3359 + $0x80] sm:$0x1]
        %v3439 = vsel %vm3367, %v3225, %v3438
        %3440 = vst [vmem:[%s3359 + $0x80] sm:$0x1] %v3439
        %v3441 = vld [vmem:[%s3359 + $0x84] sm:$0xf]
        %v3442 = vsel %vm3361, %v3232, %v3441
        %3443 = vst [vmem:[%s3359 + $0x84] sm:$0xf] %v3442
        %3444 = vst.msk [vmem:[%s3359 + $0x88] sm:$0xf] %vm2951, %v3241
        %v3445 = vld [vmem:[%s3359 + $0x8c] sm:$0x1]
        %v3446 = vsel %vm3367, %v3242, %v3445
        %3447 = vst [vmem:[%s3359 + $0x8c] sm:$0x1] %v3446
        %v3448 = vld [vmem:[%s3359 + $0x90] sm:$0xf]
        %v3449 = vsel %vm3361, %v3249, %v3448
        %3450 = vst [vmem:[%s3359 + $0x90] sm:$0xf] %v3449
        %3451 = vst.msk [vmem:[%s3359 + $0x94] sm:$0xf] %vm2951, %v3258
        %v3452 = vld [vmem:[%s3359 + $0x98] sm:$0x1]
        %v3453 = vsel %vm3367, %v3259, %v3452
        %3454 = vst [vmem:[%s3359 + $0x98] sm:$0x1] %v3453
        %v3455 = vld [vmem:[%s3359 + $0x9c] sm:$0xf]
        %v3456 = vsel %vm3361, %v3266, %v3455
        %3457 = vst [vmem:[%s3359 + $0x9c] sm:$0xf] %v3456
        %3458 = vst.msk [vmem:[%s3359 + $0xa0] sm:$0xf] %vm2951, %v3275
        %v3459 = vld [vmem:[%s3359 + $0xa4] sm:$0x1]
        %v3460 = vsel %vm3367, %v3276, %v3459
        %3461 = vst [vmem:[%s3359 + $0xa4] sm:$0x1] %v3460
        %v3462 = vld [vmem:[%s3359 + $0xa8] sm:$0xf]
        %v3463 = vsel %vm3361, %v3283, %v3462
        %3464 = vst [vmem:[%s3359 + $0xa8] sm:$0xf] %v3463
        %3465 = vst.msk [vmem:[%s3359 + $0xac] sm:$0xf] %vm2951, %v3292
        %v3466 = vld [vmem:[%s3359 + $0xb0] sm:$0x1]
        %v3467 = vsel %vm3367, %v3293, %v3466
        %3468 = vst [vmem:[%s3359 + $0xb0] sm:$0x1] %v3467
        %v3469 = vld [vmem:[%s3359 + $0xb4] sm:$0xf]
        %v3470 = vsel %vm3361, %v3300, %v3469
        %3471 = vst [vmem:[%s3359 + $0xb4] sm:$0xf] %v3470
        %3472 = vst.msk [vmem:[%s3359 + $0xb8] sm:$0xf] %vm2951, %v3309
        %v3473 = vld [vmem:[%s3359 + $0xbc] sm:$0x1]
        %v3474 = vsel %vm3367, %v3310, %v3473
        %3475 = vst [vmem:[%s3359 + $0xbc] sm:$0x1] %v3474
        %v3476 = vld [vmem:[#allocation3] sm:$0xf]
        %v3477 = vld [vmem:[#allocation3 + $0x4] sm:$0xf]
        %v3478 = vld [vmem:[#allocation3 + $0x8] sm:$0x1]
        %v3479 = vld [vmem:[#allocation3 + $0xc] sm:$0xf]
        %v3480 = vld [vmem:[#allocation3 + $0x10] sm:$0xf]
        %v3481 = vld [vmem:[#allocation3 + $0x14] sm:$0x1]
        %v3482 = vld [vmem:[#allocation3 + $0x18] sm:$0xf]
        %v3483 = vld [vmem:[#allocation3 + $0x1c] sm:$0xf]
        %v3484 = vld [vmem:[#allocation3 + $0x20] sm:$0x1]
        %v3485 = vld [vmem:[#allocation3 + $0x24] sm:$0xf]
        %v3486 = vld [vmem:[#allocation3 + $0x28] sm:$0xf]
        %v3487 = vld [vmem:[#allocation3 + $0x2c] sm:$0x1]
        %v3488 = vld [vmem:[#allocation3 + $0x30] sm:$0xf]
        %v3489 = vld [vmem:[#allocation3 + $0x34] sm:$0xf]
        %v3490 = vld [vmem:[#allocation3 + $0x38] sm:$0x1]
        %v3491 = vld [vmem:[#allocation3 + $0x3c] sm:$0xf]
        %v3492 = vld [vmem:[#allocation3 + $0x40] sm:$0xf]
        %v3493 = vld [vmem:[#allocation3 + $0x44] sm:$0x1]
        %v3494 = vld [vmem:[#allocation3 + $0x48] sm:$0xf]
        %v3495 = vld [vmem:[#allocation3 + $0x4c] sm:$0xf]
        %v3496 = vld [vmem:[#allocation3 + $0x50] sm:$0x1]
        %v3497 = vld [vmem:[#allocation3 + $0x54] sm:$0xf]
        %v3498 = vld [vmem:[#allocation3 + $0x58] sm:$0xf]
        %v3499 = vld [vmem:[#allocation3 + $0x5c] sm:$0x1]
        %v3500 = vld [vmem:[#allocation3 + $0x60] sm:$0xf]
        %v3501 = vld [vmem:[#allocation3 + $0x64] sm:$0xf]
        %v3502 = vld [vmem:[#allocation3 + $0x68] sm:$0x1]
        %v3503 = vld [vmem:[#allocation3 + $0x6c] sm:$0xf]
        %v3504 = vld [vmem:[#allocation3 + $0x70] sm:$0xf]
        %v3505 = vld [vmem:[#allocation3 + $0x74] sm:$0x1]
        %v3506 = vld [vmem:[#allocation3 + $0x78] sm:$0xf]
        %v3507 = vld [vmem:[#allocation3 + $0x7c] sm:$0xf]
        %v3508 = vld [vmem:[#allocation3 + $0x80] sm:$0x1]
        %v3509 = vld [vmem:[#allocation3 + $0x84] sm:$0xf]
        %v3510 = vld [vmem:[#allocation3 + $0x88] sm:$0xf]
        %v3511 = vld [vmem:[#allocation3 + $0x8c] sm:$0x1]
        %v3512 = vld [vmem:[#allocation3 + $0x90] sm:$0xf]
        %v3513 = vld [vmem:[#allocation3 + $0x94] sm:$0xf]
        %v3514 = vld [vmem:[#allocation3 + $0x98] sm:$0x1]
        %v3515 = vld [vmem:[#allocation3 + $0x9c] sm:$0xf]
        %v3516 = vld [vmem:[#allocation3 + $0xa0] sm:$0xf]
        %v3517 = vld [vmem:[#allocation3 + $0xa4] sm:$0x1]
        %v3518 = vld [vmem:[#allocation3 + $0xa8] sm:$0xf]
        %v3519 = vld [vmem:[#allocation3 + $0xac] sm:$0xf]
        %v3520 = vld [vmem:[#allocation3 + $0xb0] sm:$0x1]
        %v3521 = vld [vmem:[#allocation3 + $0xb4] sm:$0xf]
        %v3522 = vld [vmem:[#allocation3 + $0xb8] sm:$0xf]
        %v3523 = vld [vmem:[#allocation3 + $0xbc] sm:$0x1]
        %v3556 = vunpack.c.l.b16 %v3476
        %v3557 = vunpack.c.l.b16 %v3477
        %v3558 = vunpack.c.l.b16 %v3479
        %v3559 = vunpack.c.l.b16 %v3480
        %v3560 = vunpack.c.l.b16 %v3482
        %v3561 = vunpack.c.l.b16 %v3483
        %v3562 = vunpack.c.l.b16 %v3485
        %v3563 = vunpack.c.l.b16 %v3486
        %v3564 = vunpack.c.l.b16 %v3488
        %v3565 = vunpack.c.l.b16 %v3489
        %v3566 = vunpack.c.l.b16 %v3491
        %v3567 = vunpack.c.l.b16 %v3492
        %v3568 = vunpack.c.l.b16 %v3494
        %v3569 = vunpack.c.l.b16 %v3495
        %v3570 = vunpack.c.l.b16 %v3497
        %v3571 = vunpack.c.l.b16 %v3498
        %v3572 = vunpack.c.l.b16 %v3500
        %v3573 = vunpack.c.l.b16 %v3501
        %v3574 = vunpack.c.l.b16 %v3503
        %v3575 = vunpack.c.l.b16 %v3504
        %v3576 = vunpack.c.l.b16 %v3506
        %v3577 = vunpack.c.l.b16 %v3507
        %v3578 = vunpack.c.l.b16 %v3509
        %v3579 = vunpack.c.l.b16 %v3510
        %v3580 = vunpack.c.l.b16 %v3512
        %v3581 = vunpack.c.l.b16 %v3513
        %v3582 = vunpack.c.l.b16 %v3515
        %v3583 = vunpack.c.l.b16 %v3516
        %v3584 = vunpack.c.l.b16 %v3518
        %v3585 = vunpack.c.l.b16 %v3519
        %v3586 = vunpack.c.l.b16 %v3521
        %v3587 = vunpack.c.l.b16 %v3522
        %v3588 = vpack.c.b16 %v3557, %v3556
        %v3589 = vpack.c.b16 %v3559, %v3558
        %v3590 = vpack.c.b16 %v3561, %v3560
        %v3591 = vpack.c.b16 %v3563, %v3562
        %v3592 = vpack.c.b16 %v3565, %v3564
        %v3593 = vpack.c.b16 %v3567, %v3566
        %v3594 = vpack.c.b16 %v3569, %v3568
        %v3595 = vpack.c.b16 %v3571, %v3570
        %v3596 = vpack.c.b16 %v3573, %v3572
        %v3597 = vpack.c.b16 %v3575, %v3574
        %v3598 = vpack.c.b16 %v3577, %v3576
        %v3599 = vpack.c.b16 %v3579, %v3578
        %v3600 = vpack.c.b16 %v3581, %v3580
        %v3601 = vpack.c.b16 %v3583, %v3582
        %v3602 = vpack.c.b16 %v3585, %v3584
        %v3603 = vpack.c.b16 %v3587, %v3586
        %v3620 = vunpack.c.l.b16 %v3478
        %v3621 = vunpack.c.l.b16 %v3481
        %v3622 = vunpack.c.l.b16 %v3484
        %v3623 = vunpack.c.l.b16 %v3487
        %v3624 = vunpack.c.l.b16 %v3490
        %v3625 = vunpack.c.l.b16 %v3493
        %v3626 = vunpack.c.l.b16 %v3496
        %v3627 = vunpack.c.l.b16 %v3499
        %v3628 = vunpack.c.l.b16 %v3502
        %v3629 = vunpack.c.l.b16 %v3505
        %v3630 = vunpack.c.l.b16 %v3508
        %v3631 = vunpack.c.l.b16 %v3511
        %v3632 = vunpack.c.l.b16 %v3514
        %v3633 = vunpack.c.l.b16 %v3517
        %v3634 = vunpack.c.l.b16 %v3520
        %v3635 = vunpack.c.l.b16 %v3523
        %v3636 = vpack.c.b16 %v3620, %v3620
        %v3637 = vpack.c.b16 %v3621, %v3621
        %v3638 = vpack.c.b16 %v3622, %v3622
        %v3639 = vpack.c.b16 %v3623, %v3623
        %v3640 = vpack.c.b16 %v3624, %v3624
        %v3641 = vpack.c.b16 %v3625, %v3625
        %v3642 = vpack.c.b16 %v3626, %v3626
        %v3643 = vpack.c.b16 %v3627, %v3627
        %v3644 = vpack.c.b16 %v3628, %v3628
        %v3645 = vpack.c.b16 %v3629, %v3629
        %v3646 = vpack.c.b16 %v3630, %v3630
        %v3647 = vpack.c.b16 %v3631, %v3631
        %v3648 = vpack.c.b16 %v3632, %v3632
        %v3649 = vpack.c.b16 %v3633, %v3633
        %v3650 = vpack.c.b16 %v3634, %v3634
        %v3651 = vpack.c.b16 %v3635, %v3635
        %v3653 = vshrl.u32 %v3588, 16
        %v3655 = vshll.u32 %v3588, 16
        %v3657 = vrot.slane %v3655, 1
        %v3658 = vor.u32 %v3653, %v3657
        %v3660 = vshll.u32 %v3636, 16
        %v3662 = vrot.slane %v3660, 1
        %v3663 = vsel %vm929, %v3658, %v3662
        %v3665 = vshrl.u32 %v3589, 16
        %v3667 = vshll.u32 %v3589, 16
        %v3669 = vrot.slane %v3667, 1
        %v3670 = vor.u32 %v3665, %v3669
        %v3672 = vshll.u32 %v3637, 16
        %v3674 = vrot.slane %v3672, 1
        %v3675 = vsel %vm929, %v3670, %v3674
        %v3677 = vshrl.u32 %v3590, 16
        %v3679 = vshll.u32 %v3590, 16
        %v3681 = vrot.slane %v3679, 1
        %v3682 = vor.u32 %v3677, %v3681
        %v3684 = vshll.u32 %v3638, 16
        %v3686 = vrot.slane %v3684, 1
        %v3687 = vsel %vm929, %v3682, %v3686
        %v3689 = vshrl.u32 %v3591, 16
        %v3691 = vshll.u32 %v3591, 16
        %v3693 = vrot.slane %v3691, 1
        %v3694 = vor.u32 %v3689, %v3693
        %v3696 = vshll.u32 %v3639, 16
        %v3698 = vrot.slane %v3696, 1
        %v3699 = vsel %vm929, %v3694, %v3698
        %v3701 = vshrl.u32 %v3592, 16
        %v3703 = vshll.u32 %v3592, 16
        %v3705 = vrot.slane %v3703, 1
        %v3706 = vor.u32 %v3701, %v3705
        %v3708 = vshll.u32 %v3640, 16
        %v3710 = vrot.slane %v3708, 1
        %v3711 = vsel %vm929, %v3706, %v3710
        %v3713 = vshrl.u32 %v3593, 16
        %v3715 = vshll.u32 %v3593, 16
        %v3717 = vrot.slane %v3715, 1
        %v3718 = vor.u32 %v3713, %v3717
        %v3720 = vshll.u32 %v3641, 16
        %v3722 = vrot.slane %v3720, 1
        %v3723 = vsel %vm929, %v3718, %v3722
        %v3725 = vshrl.u32 %v3594, 16
        %v3727 = vshll.u32 %v3594, 16
        %v3729 = vrot.slane %v3727, 1
        %v3730 = vor.u32 %v3725, %v3729
        %v3732 = vshll.u32 %v3642, 16
        %v3734 = vrot.slane %v3732, 1
        %v3735 = vsel %vm929, %v3730, %v3734
        %v3737 = vshrl.u32 %v3595, 16
        %v3739 = vshll.u32 %v3595, 16
        %v3741 = vrot.slane %v3739, 1
        %v3742 = vor.u32 %v3737, %v3741
        %v3744 = vshll.u32 %v3643, 16
        %v3746 = vrot.slane %v3744, 1
        %v3747 = vsel %vm929, %v3742, %v3746
        %v3749 = vshrl.u32 %v3596, 16
        %v3751 = vshll.u32 %v3596, 16
        %v3753 = vrot.slane %v3751, 1
        %v3754 = vor.u32 %v3749, %v3753
        %v3756 = vshll.u32 %v3644, 16
        %v3758 = vrot.slane %v3756, 1
        %v3759 = vsel %vm929, %v3754, %v3758
        %v3761 = vshrl.u32 %v3597, 16
        %v3763 = vshll.u32 %v3597, 16
        %v3765 = vrot.slane %v3763, 1
        %v3766 = vor.u32 %v3761, %v3765
        %v3768 = vshll.u32 %v3645, 16
        %v3770 = vrot.slane %v3768, 1
        %v3771 = vsel %vm929, %v3766, %v3770
        %v3773 = vshrl.u32 %v3598, 16
        %v3775 = vshll.u32 %v3598, 16
        %v3777 = vrot.slane %v3775, 1
        %v3778 = vor.u32 %v3773, %v3777
        %v3780 = vshll.u32 %v3646, 16
        %v3782 = vrot.slane %v3780, 1
        %v3783 = vsel %vm929, %v3778, %v3782
        %v3785 = vshrl.u32 %v3599, 16
        %v3787 = vshll.u32 %v3599, 16
        %v3789 = vrot.slane %v3787, 1
        %v3790 = vor.u32 %v3785, %v3789
        %v3792 = vshll.u32 %v3647, 16
        %v3794 = vrot.slane %v3792, 1
        %v3795 = vsel %vm929, %v3790, %v3794
        %v3797 = vshrl.u32 %v3600, 16
        %v3799 = vshll.u32 %v3600, 16
        %v3801 = vrot.slane %v3799, 1
        %v3802 = vor.u32 %v3797, %v3801
        %v3804 = vshll.u32 %v3648, 16
        %v3806 = vrot.slane %v3804, 1
        %v3807 = vsel %vm929, %v3802, %v3806
        %v3809 = vshrl.u32 %v3601, 16
        %v3811 = vshll.u32 %v3601, 16
        %v3813 = vrot.slane %v3811, 1
        %v3814 = vor.u32 %v3809, %v3813
        %v3816 = vshll.u32 %v3649, 16
        %v3818 = vrot.slane %v3816, 1
        %v3819 = vsel %vm929, %v3814, %v3818
        %v3821 = vshrl.u32 %v3602, 16
        %v3823 = vshll.u32 %v3602, 16
        %v3825 = vrot.slane %v3823, 1
        %v3826 = vor.u32 %v3821, %v3825
        %v3828 = vshll.u32 %v3650, 16
        %v3830 = vrot.slane %v3828, 1
        %v3831 = vsel %vm929, %v3826, %v3830
        %v3833 = vshrl.u32 %v3603, 16
        %v3835 = vshll.u32 %v3603, 16
        %v3837 = vrot.slane %v3835, 1
        %v3838 = vor.u32 %v3833, %v3837
        %v3840 = vshll.u32 %v3651, 16
        %v3842 = vrot.slane %v3840, 1
        %v3843 = vsel %vm929, %v3838, %v3842
        %3844 = vrot.lane.b32.xlu0 %v3663, 32
        %v3845 = vpop.permute.xlu0 %3844
        %3846 = vrot.lane.b32.xlu0 %v3675, 32
        %v3847 = vpop.permute.xlu0 %3846
        %3848 = vrot.lane.b32.xlu0 %v3687, 32
        %v3849 = vpop.permute.xlu0 %3848
        %3850 = vrot.lane.b32.xlu0 %v3699, 32
        %v3851 = vpop.permute.xlu0 %3850
        %3852 = vrot.lane.b32.xlu0 %v3711, 32
        %v3853 = vpop.permute.xlu0 %3852
        %3854 = vrot.lane.b32.xlu0 %v3723, 32
        %v3855 = vpop.permute.xlu0 %3854
        %3856 = vrot.lane.b32.xlu0 %v3735, 32
        %v3857 = vpop.permute.xlu0 %3856
        %3858 = vrot.lane.b32.xlu0 %v3747, 32
        %v3859 = vpop.permute.xlu0 %3858
        %3860 = vrot.lane.b32.xlu0 %v3759, 32
        %v3861 = vpop.permute.xlu0 %3860
        %3862 = vrot.lane.b32.xlu0 %v3771, 32
        %v3863 = vpop.permute.xlu0 %3862
        %3864 = vrot.lane.b32.xlu0 %v3783, 32
        %v3865 = vpop.permute.xlu0 %3864
        %3866 = vrot.lane.b32.xlu0 %v3795, 32
        %v3867 = vpop.permute.xlu0 %3866
        %3868 = vrot.lane.b32.xlu0 %v3807, 32
        %v3869 = vpop.permute.xlu0 %3868
        %3870 = vrot.lane.b32.xlu0 %v3819, 32
        %v3871 = vpop.permute.xlu0 %3870
        %3872 = vrot.lane.b32.xlu0 %v3831, 32
        %v3873 = vpop.permute.xlu0 %3872
        %3874 = vrot.lane.b32.xlu0 %v3843, 32
        %v3875 = vpop.permute.xlu0 %3874
        %v3876 = vrot.slane %v3588, 1
        %v3877 = vrot.slane %v3636, 1
        %v3878 = vsel %vm1154, %v3876, %v3877
        %v3879 = vrot.slane %v3589, 1
        %v3880 = vrot.slane %v3637, 1
        %v3881 = vsel %vm1154, %v3879, %v3880
        %v3882 = vrot.slane %v3590, 1
        %v3883 = vrot.slane %v3638, 1
        %v3884 = vsel %vm1154, %v3882, %v3883
        %v3885 = vrot.slane %v3591, 1
        %v3886 = vrot.slane %v3639, 1
        %v3887 = vsel %vm1154, %v3885, %v3886
        %v3888 = vrot.slane %v3592, 1
        %v3889 = vrot.slane %v3640, 1
        %v3890 = vsel %vm1154, %v3888, %v3889
        %v3891 = vrot.slane %v3593, 1
        %v3892 = vrot.slane %v3641, 1
        %v3893 = vsel %vm1154, %v3891, %v3892
        %v3894 = vrot.slane %v3594, 1
        %v3895 = vrot.slane %v3642, 1
        %v3896 = vsel %vm1154, %v3894, %v3895
        %v3897 = vrot.slane %v3595, 1
        %v3898 = vrot.slane %v3643, 1
        %v3899 = vsel %vm1154, %v3897, %v3898
        %v3900 = vrot.slane %v3596, 1
        %v3901 = vrot.slane %v3644, 1
        %v3902 = vsel %vm1154, %v3900, %v3901
        %v3903 = vrot.slane %v3597, 1
        %v3904 = vrot.slane %v3645, 1
        %v3905 = vsel %vm1154, %v3903, %v3904
        %v3906 = vrot.slane %v3598, 1
        %v3907 = vrot.slane %v3646, 1
        %v3908 = vsel %vm1154, %v3906, %v3907
        %v3909 = vrot.slane %v3599, 1
        %v3910 = vrot.slane %v3647, 1
        %v3911 = vsel %vm1154, %v3909, %v3910
        %v3912 = vrot.slane %v3600, 1
        %v3913 = vrot.slane %v3648, 1
        %v3914 = vsel %vm1154, %v3912, %v3913
        %v3915 = vrot.slane %v3601, 1
        %v3916 = vrot.slane %v3649, 1
        %v3917 = vsel %vm1154, %v3915, %v3916
        %v3918 = vrot.slane %v3602, 1
        %v3919 = vrot.slane %v3650, 1
        %v3920 = vsel %vm1154, %v3918, %v3919
        %v3921 = vrot.slane %v3603, 1
        %v3922 = vrot.slane %v3651, 1
        %v3923 = vsel %vm1154, %v3921, %v3922
        %3924 = vrot.lane.b32.xlu0 %v3878, 64
        %v3925 = vpop.permute.xlu0 %3924
        %3926 = vrot.lane.b32.xlu0 %v3881, 64
        %v3927 = vpop.permute.xlu0 %3926
        %3928 = vrot.lane.b32.xlu0 %v3884, 64
        %v3929 = vpop.permute.xlu0 %3928
        %3930 = vrot.lane.b32.xlu0 %v3887, 64
        %v3931 = vpop.permute.xlu0 %3930
        %3932 = vrot.lane.b32.xlu0 %v3890, 64
        %v3933 = vpop.permute.xlu0 %3932
        %3934 = vrot.lane.b32.xlu0 %v3893, 64
        %v3935 = vpop.permute.xlu0 %3934
        %3936 = vrot.lane.b32.xlu0 %v3896, 64
        %v3937 = vpop.permute.xlu0 %3936
        %3938 = vrot.lane.b32.xlu0 %v3899, 64
        %v3939 = vpop.permute.xlu0 %3938
        %3940 = vrot.lane.b32.xlu0 %v3902, 64
        %v3941 = vpop.permute.xlu0 %3940
        %3942 = vrot.lane.b32.xlu0 %v3905, 64
        %v3943 = vpop.permute.xlu0 %3942
        %3944 = vrot.lane.b32.xlu0 %v3908, 64
        %v3945 = vpop.permute.xlu0 %3944
        %3946 = vrot.lane.b32.xlu0 %v3911, 64
        %v3947 = vpop.permute.xlu0 %3946
        %3948 = vrot.lane.b32.xlu0 %v3914, 64
        %v3949 = vpop.permute.xlu0 %3948
        %3950 = vrot.lane.b32.xlu0 %v3917, 64
        %v3951 = vpop.permute.xlu0 %3950
        %3952 = vrot.lane.b32.xlu0 %v3920, 64
        %v3953 = vpop.permute.xlu0 %3952
        %3954 = vrot.lane.b32.xlu0 %v3923, 64
        %v3955 = vpop.permute.xlu0 %3954
        %vm3956 = vcmask 261120
        %v3958 = vsel %vm3956, %v3588, %v3845
        %v3960 = vsel %vm3956, %v3589, %v3847
        %v3962 = vsel %vm3956, %v3590, %v3849
        %v3964 = vsel %vm3956, %v3591, %v3851
        %v3966 = vsel %vm3956, %v3592, %v3853
        %v3968 = vsel %vm3956, %v3593, %v3855
        %v3970 = vsel %vm3956, %v3594, %v3857
        %v3972 = vsel %vm3956, %v3595, %v3859
        %v3974 = vsel %vm3956, %v3596, %v3861
        %v3976 = vsel %vm3956, %v3597, %v3863
        %v3978 = vsel %vm3956, %v3598, %v3865
        %v3980 = vsel %vm3956, %v3599, %v3867
        %v3982 = vsel %vm3956, %v3600, %v3869
        %v3984 = vsel %vm3956, %v3601, %v3871
        %v3986 = vsel %vm3956, %v3602, %v3873
        %v3988 = vsel %vm3956, %v3603, %v3875
        %vm3989 = vcmask 523264
        %v3991 = vsel %vm3989, %v3958, %v3925
        %v3993 = vsel %vm3989, %v3960, %v3927
        %v3995 = vsel %vm3989, %v3962, %v3929
        %v3997 = vsel %vm3989, %v3964, %v3931
        %v3999 = vsel %vm3989, %v3966, %v3933
        %v4001 = vsel %vm3989, %v3968, %v3935
        %v4003 = vsel %vm3989, %v3970, %v3937
        %v4005 = vsel %vm3989, %v3972, %v3939
        %v4007 = vsel %vm3989, %v3974, %v3941
        %v4009 = vsel %vm3989, %v3976, %v3943
        %v4011 = vsel %vm3989, %v3978, %v3945
        %v4013 = vsel %vm3989, %v3980, %v3947
        %v4015 = vsel %vm3989, %v3982, %v3949
        %v4017 = vsel %vm3989, %v3984, %v3951
        %v4019 = vsel %vm3989, %v3986, %v3953
        %v4021 = vsel %vm3989, %v3988, %v3955
        %v4022 = vld [vmem:[%s3] sm:$0xf]
        %v4023 = vld [vmem:[%s3 + $0x4] sm:$0xf]
        %v4024 = vld [vmem:[%s3 + $0x8] sm:$0xf]
        %v4025 = vld [vmem:[%s3 + $0xc] sm:$0xf]
        %v4026 = vld [vmem:[%s3 + $0x10] sm:$0xf]
        %v4027 = vld [vmem:[%s3 + $0x14] sm:$0xf]
        %v4028 = vld [vmem:[%s3 + $0x18] sm:$0xf]
        %v4029 = vld [vmem:[%s3 + $0x1c] sm:$0xf]
        %v4030 = vld [vmem:[%s3 + $0x20] sm:$0xf]
        %v4031 = vld [vmem:[%s3 + $0x24] sm:$0xf]
        %v4032 = vld [vmem:[%s3 + $0x28] sm:$0xf]
        %v4033 = vld [vmem:[%s3 + $0x2c] sm:$0xf]
        %v4034 = vld [vmem:[%s3359] sm:$0xf]
        %v4035 = vld [vmem:[%s3359 + $0x4] sm:$0xf]
        %v4036 = vld [vmem:[%s3359 + $0x8] sm:$0x1]
        %v4037 = vld [vmem:[%s3359 + $0xc] sm:$0xf]
        %v4038 = vld [vmem:[%s3359 + $0x10] sm:$0xf]
        %v4039 = vld [vmem:[%s3359 + $0x14] sm:$0x1]
        %v4040 = vld [vmem:[%s3359 + $0x18] sm:$0xf]
        %v4041 = vld [vmem:[%s3359 + $0x1c] sm:$0xf]
        %v4042 = vld [vmem:[%s3359 + $0x20] sm:$0x1]
        %v4043 = vld [vmem:[%s3359 + $0x24] sm:$0xf]
        %v4044 = vld [vmem:[%s3359 + $0x28] sm:$0xf]
        %v4045 = vld [vmem:[%s3359 + $0x2c] sm:$0x1]
        %v4046 = vld [vmem:[%s3359 + $0x30] sm:$0xf]
        %v4047 = vld [vmem:[%s3359 + $0x34] sm:$0xf]
        %v4048 = vld [vmem:[%s3359 + $0x38] sm:$0x1]
        %v4049 = vld [vmem:[%s3359 + $0x3c] sm:$0xf]
        %v4050 = vld [vmem:[%s3359 + $0x40] sm:$0xf]
        %v4051 = vld [vmem:[%s3359 + $0x44] sm:$0x1]
        %v4052 = vld [vmem:[%s3359 + $0x48] sm:$0xf]
        %v4053 = vld [vmem:[%s3359 + $0x4c] sm:$0xf]
        %v4054 = vld [vmem:[%s3359 + $0x50] sm:$0x1]
        %v4055 = vld [vmem:[%s3359 + $0x54] sm:$0xf]
        %v4056 = vld [vmem:[%s3359 + $0x58] sm:$0xf]
        %v4057 = vld [vmem:[%s3359 + $0x5c] sm:$0x1]
        %v4058 = vld [vmem:[%s3359 + $0x60] sm:$0xf]
        %v4059 = vld [vmem:[%s3359 + $0x64] sm:$0xf]
        %v4060 = vld [vmem:[%s3359 + $0x68] sm:$0x1]
        %v4061 = vld [vmem:[%s3359 + $0x6c] sm:$0xf]
        %v4062 = vld [vmem:[%s3359 + $0x70] sm:$0xf]
        %v4063 = vld [vmem:[%s3359 + $0x74] sm:$0x1]
        %v4064 = vld [vmem:[%s3359 + $0x78] sm:$0xf]
        %v4065 = vld [vmem:[%s3359 + $0x7c] sm:$0xf]
        %v4066 = vld [vmem:[%s3359 + $0x80] sm:$0x1]
        %v4067 = vld [vmem:[%s3359 + $0x84] sm:$0xf]
        %v4068 = vld [vmem:[%s3359 + $0x88] sm:$0xf]
        %v4069 = vld [vmem:[%s3359 + $0x8c] sm:$0x1]
        %v4070 = vld [vmem:[%s3359 + $0x90] sm:$0xf]
        %v4071 = vld [vmem:[%s3359 + $0x94] sm:$0xf]
        %v4072 = vld [vmem:[%s3359 + $0x98] sm:$0x1]
        %v4073 = vld [vmem:[%s3359 + $0x9c] sm:$0xf]
        %v4074 = vld [vmem:[%s3359 + $0xa0] sm:$0xf]
        %v4075 = vld [vmem:[%s3359 + $0xa4] sm:$0x1]
        %v4076 = vld [vmem:[%s3359 + $0xa8] sm:$0xf]
        %v4077 = vld [vmem:[%s3359 + $0xac] sm:$0xf]
        %v4078 = vld [vmem:[%s3359 + $0xb0] sm:$0x1]
        %v4079 = vld [vmem:[%s3359 + $0xb4] sm:$0xf]
        %v4080 = vld [vmem:[%s3359 + $0xb8] sm:$0xf]
        %v4081 = vld [vmem:[%s3359 + $0xbc] sm:$0x1]
        %v4114 = vunpack.c.l.b16 %v4034
        %v4115 = vunpack.c.l.b16 %v4035
        %v4116 = vunpack.c.l.b16 %v4037
        %v4117 = vunpack.c.l.b16 %v4038
        %v4118 = vunpack.c.l.b16 %v4040
        %v4119 = vunpack.c.l.b16 %v4041
        %v4120 = vunpack.c.l.b16 %v4043
        %v4121 = vunpack.c.l.b16 %v4044
        %v4122 = vunpack.c.l.b16 %v4046
        %v4123 = vunpack.c.l.b16 %v4047
        %v4124 = vunpack.c.l.b16 %v4049
        %v4125 = vunpack.c.l.b16 %v4050
        %v4126 = vunpack.c.l.b16 %v4052
        %v4127 = vunpack.c.l.b16 %v4053
        %v4128 = vunpack.c.l.b16 %v4055
        %v4129 = vunpack.c.l.b16 %v4056
        %v4130 = vunpack.c.l.b16 %v4058
        %v4131 = vunpack.c.l.b16 %v4059
        %v4132 = vunpack.c.l.b16 %v4061
        %v4133 = vunpack.c.l.b16 %v4062
        %v4134 = vunpack.c.l.b16 %v4064
        %v4135 = vunpack.c.l.b16 %v4065
        %v4136 = vunpack.c.l.b16 %v4067
        %v4137 = vunpack.c.l.b16 %v4068
        %v4138 = vunpack.c.l.b16 %v4070
        %v4139 = vunpack.c.l.b16 %v4071
        %v4140 = vunpack.c.l.b16 %v4073
        %v4141 = vunpack.c.l.b16 %v4074
        %v4142 = vunpack.c.l.b16 %v4076
        %v4143 = vunpack.c.l.b16 %v4077
        %v4144 = vunpack.c.l.b16 %v4079
        %v4145 = vunpack.c.l.b16 %v4080
        %v4146 = vpack.c.b16 %v4115, %v4114
        %v4147 = vpack.c.b16 %v4117, %v4116
        %v4148 = vpack.c.b16 %v4119, %v4118
        %v4149 = vpack.c.b16 %v4121, %v4120
        %v4150 = vpack.c.b16 %v4123, %v4122
        %v4151 = vpack.c.b16 %v4125, %v4124
        %v4152 = vpack.c.b16 %v4127, %v4126
        %v4153 = vpack.c.b16 %v4129, %v4128
        %v4154 = vpack.c.b16 %v4131, %v4130
        %v4155 = vpack.c.b16 %v4133, %v4132
        %v4156 = vpack.c.b16 %v4135, %v4134
        %v4157 = vpack.c.b16 %v4137, %v4136
        %v4158 = vpack.c.b16 %v4139, %v4138
        %v4159 = vpack.c.b16 %v4141, %v4140
        %v4160 = vpack.c.b16 %v4143, %v4142
        %v4161 = vpack.c.b16 %v4145, %v4144
        %v4178 = vunpack.c.l.b16 %v4036
        %v4179 = vunpack.c.l.b16 %v4039
        %v4180 = vunpack.c.l.b16 %v4042
        %v4181 = vunpack.c.l.b16 %v4045
        %v4182 = vunpack.c.l.b16 %v4048
        %v4183 = vunpack.c.l.b16 %v4051
        %v4184 = vunpack.c.l.b16 %v4054
        %v4185 = vunpack.c.l.b16 %v4057
        %v4186 = vunpack.c.l.b16 %v4060
        %v4187 = vunpack.c.l.b16 %v4063
        %v4188 = vunpack.c.l.b16 %v4066
        %v4189 = vunpack.c.l.b16 %v4069
        %v4190 = vunpack.c.l.b16 %v4072
        %v4191 = vunpack.c.l.b16 %v4075
        %v4192 = vunpack.c.l.b16 %v4078
        %v4193 = vunpack.c.l.b16 %v4081
        %v4194 = vpack.c.b16 %v4178, %v4178
        %v4195 = vpack.c.b16 %v4179, %v4179
        %v4196 = vpack.c.b16 %v4180, %v4180
        %v4197 = vpack.c.b16 %v4181, %v4181
        %v4198 = vpack.c.b16 %v4182, %v4182
        %v4199 = vpack.c.b16 %v4183, %v4183
        %v4200 = vpack.c.b16 %v4184, %v4184
        %v4201 = vpack.c.b16 %v4185, %v4185
        %v4202 = vpack.c.b16 %v4186, %v4186
        %v4203 = vpack.c.b16 %v4187, %v4187
        %v4204 = vpack.c.b16 %v4188, %v4188
        %v4205 = vpack.c.b16 %v4189, %v4189
        %v4206 = vpack.c.b16 %v4190, %v4190
        %v4207 = vpack.c.b16 %v4191, %v4191
        %v4208 = vpack.c.b16 %v4192, %v4192
        %v4209 = vpack.c.b16 %v4193, %v4193
        %v4211 = vshrl.u32 %v4146, 16
        %v4213 = vshll.u32 %v4146, 16
        %v4215 = vrot.slane %v4213, 1
        %v4216 = vor.u32 %v4211, %v4215
        %v4218 = vshll.u32 %v4194, 16
        %v4220 = vrot.slane %v4218, 1
        %v4221 = vsel %vm929, %v4216, %v4220
        %v4223 = vshrl.u32 %v4147, 16
        %v4225 = vshll.u32 %v4147, 16
        %v4227 = vrot.slane %v4225, 1
        %v4228 = vor.u32 %v4223, %v4227
        %v4230 = vshll.u32 %v4195, 16
        %v4232 = vrot.slane %v4230, 1
        %v4233 = vsel %vm929, %v4228, %v4232
        %v4235 = vshrl.u32 %v4148, 16
        %v4237 = vshll.u32 %v4148, 16
        %v4239 = vrot.slane %v4237, 1
        %v4240 = vor.u32 %v4235, %v4239
        %v4242 = vshll.u32 %v4196, 16
        %v4244 = vrot.slane %v4242, 1
        %v4245 = vsel %vm929, %v4240, %v4244
        %v4247 = vshrl.u32 %v4149, 16
        %v4249 = vshll.u32 %v4149, 16
        %v4251 = vrot.slane %v4249, 1
        %v4252 = vor.u32 %v4247, %v4251
        %v4254 = vshll.u32 %v4197, 16
        %v4256 = vrot.slane %v4254, 1
        %v4257 = vsel %vm929, %v4252, %v4256
        %v4259 = vshrl.u32 %v4150, 16
        %v4261 = vshll.u32 %v4150, 16
        %v4263 = vrot.slane %v4261, 1
        %v4264 = vor.u32 %v4259, %v4263
        %v4266 = vshll.u32 %v4198, 16
        %v4268 = vrot.slane %v4266, 1
        %v4269 = vsel %vm929, %v4264, %v4268
        %v4271 = vshrl.u32 %v4151, 16
        %v4273 = vshll.u32 %v4151, 16
        %v4275 = vrot.slane %v4273, 1
        %v4276 = vor.u32 %v4271, %v4275
        %v4278 = vshll.u32 %v4199, 16
        %v4280 = vrot.slane %v4278, 1
        %v4281 = vsel %vm929, %v4276, %v4280
        %v4283 = vshrl.u32 %v4152, 16
        %v4285 = vshll.u32 %v4152, 16
        %v4287 = vrot.slane %v4285, 1
        %v4288 = vor.u32 %v4283, %v4287
        %v4290 = vshll.u32 %v4200, 16
        %v4292 = vrot.slane %v4290, 1
        %v4293 = vsel %vm929, %v4288, %v4292
        %v4295 = vshrl.u32 %v4153, 16
        %v4297 = vshll.u32 %v4153, 16
        %v4299 = vrot.slane %v4297, 1
        %v4300 = vor.u32 %v4295, %v4299
        %v4302 = vshll.u32 %v4201, 16
        %v4304 = vrot.slane %v4302, 1
        %v4305 = vsel %vm929, %v4300, %v4304
        %v4307 = vshrl.u32 %v4154, 16
        %v4309 = vshll.u32 %v4154, 16
        %v4311 = vrot.slane %v4309, 1
        %v4312 = vor.u32 %v4307, %v4311
        %v4314 = vshll.u32 %v4202, 16
        %v4316 = vrot.slane %v4314, 1
        %v4317 = vsel %vm929, %v4312, %v4316
        %v4319 = vshrl.u32 %v4155, 16
        %v4321 = vshll.u32 %v4155, 16
        %v4323 = vrot.slane %v4321, 1
        %v4324 = vor.u32 %v4319, %v4323
        %v4326 = vshll.u32 %v4203, 16
        %v4328 = vrot.slane %v4326, 1
        %v4329 = vsel %vm929, %v4324, %v4328
        %v4331 = vshrl.u32 %v4156, 16
        %v4333 = vshll.u32 %v4156, 16
        %v4335 = vrot.slane %v4333, 1
        %v4336 = vor.u32 %v4331, %v4335
        %v4338 = vshll.u32 %v4204, 16
        %v4340 = vrot.slane %v4338, 1
        %v4341 = vsel %vm929, %v4336, %v4340
        %v4343 = vshrl.u32 %v4157, 16
        %v4345 = vshll.u32 %v4157, 16
        %v4347 = vrot.slane %v4345, 1
        %v4348 = vor.u32 %v4343, %v4347
        %v4350 = vshll.u32 %v4205, 16
        %v4352 = vrot.slane %v4350, 1
        %v4353 = vsel %vm929, %v4348, %v4352
        %v4355 = vshrl.u32 %v4158, 16
        %v4357 = vshll.u32 %v4158, 16
        %v4359 = vrot.slane %v4357, 1
        %v4360 = vor.u32 %v4355, %v4359
        %v4362 = vshll.u32 %v4206, 16
        %v4364 = vrot.slane %v4362, 1
        %v4365 = vsel %vm929, %v4360, %v4364
        %v4367 = vshrl.u32 %v4159, 16
        %v4369 = vshll.u32 %v4159, 16
        %v4371 = vrot.slane %v4369, 1
        %v4372 = vor.u32 %v4367, %v4371
        %v4374 = vshll.u32 %v4207, 16
        %v4376 = vrot.slane %v4374, 1
        %v4377 = vsel %vm929, %v4372, %v4376
        %v4379 = vshrl.u32 %v4160, 16
        %v4381 = vshll.u32 %v4160, 16
        %v4383 = vrot.slane %v4381, 1
        %v4384 = vor.u32 %v4379, %v4383
        %v4386 = vshll.u32 %v4208, 16
        %v4388 = vrot.slane %v4386, 1
        %v4389 = vsel %vm929, %v4384, %v4388
        %v4391 = vshrl.u32 %v4161, 16
        %v4393 = vshll.u32 %v4161, 16
        %v4395 = vrot.slane %v4393, 1
        %v4396 = vor.u32 %v4391, %v4395
        %v4398 = vshll.u32 %v4209, 16
        %v4400 = vrot.slane %v4398, 1
        %v4401 = vsel %vm929, %v4396, %v4400
        %4402 = vrot.lane.b32.xlu0 %v4221, 32
        %v4403 = vpop.permute.xlu0 %4402
        %4404 = vrot.lane.b32.xlu0 %v4233, 32
        %v4405 = vpop.permute.xlu0 %4404
        %4406 = vrot.lane.b32.xlu0 %v4245, 32
        %v4407 = vpop.permute.xlu0 %4406
        %4408 = vrot.lane.b32.xlu0 %v4257, 32
        %v4409 = vpop.permute.xlu0 %4408
        %4410 = vrot.lane.b32.xlu0 %v4269, 32
        %v4411 = vpop.permute.xlu0 %4410
        %4412 = vrot.lane.b32.xlu0 %v4281, 32
        %v4413 = vpop.permute.xlu0 %4412
        %4414 = vrot.lane.b32.xlu0 %v4293, 32
        %v4415 = vpop.permute.xlu0 %4414
        %4416 = vrot.lane.b32.xlu0 %v4305, 32
        %v4417 = vpop.permute.xlu0 %4416
        %4418 = vrot.lane.b32.xlu0 %v4317, 32
        %v4419 = vpop.permute.xlu0 %4418
        %4420 = vrot.lane.b32.xlu0 %v4329, 32
        %v4421 = vpop.permute.xlu0 %4420
        %4422 = vrot.lane.b32.xlu0 %v4341, 32
        %v4423 = vpop.permute.xlu0 %4422
        %4424 = vrot.lane.b32.xlu0 %v4353, 32
        %v4425 = vpop.permute.xlu0 %4424
        %4426 = vrot.lane.b32.xlu0 %v4365, 32
        %v4427 = vpop.permute.xlu0 %4426
        %4428 = vrot.lane.b32.xlu0 %v4377, 32
        %v4429 = vpop.permute.xlu0 %4428
        %4430 = vrot.lane.b32.xlu0 %v4389, 32
        %v4431 = vpop.permute.xlu0 %4430
        %4432 = vrot.lane.b32.xlu0 %v4401, 32
        %v4433 = vpop.permute.xlu0 %4432
        %v4434 = vrot.slane %v4146, 1
        %v4435 = vrot.slane %v4194, 1
        %v4436 = vsel %vm1154, %v4434, %v4435
        %v4437 = vrot.slane %v4147, 1
        %v4438 = vrot.slane %v4195, 1
        %v4439 = vsel %vm1154, %v4437, %v4438
        %v4440 = vrot.slane %v4148, 1
        %v4441 = vrot.slane %v4196, 1
        %v4442 = vsel %vm1154, %v4440, %v4441
        %v4443 = vrot.slane %v4149, 1
        %v4444 = vrot.slane %v4197, 1
        %v4445 = vsel %vm1154, %v4443, %v4444
        %v4446 = vrot.slane %v4150, 1
        %v4447 = vrot.slane %v4198, 1
        %v4448 = vsel %vm1154, %v4446, %v4447
        %v4449 = vrot.slane %v4151, 1
        %v4450 = vrot.slane %v4199, 1
        %v4451 = vsel %vm1154, %v4449, %v4450
        %v4452 = vrot.slane %v4152, 1
        %v4453 = vrot.slane %v4200, 1
        %v4454 = vsel %vm1154, %v4452, %v4453
        %v4455 = vrot.slane %v4153, 1
        %v4456 = vrot.slane %v4201, 1
        %v4457 = vsel %vm1154, %v4455, %v4456
        %v4458 = vrot.slane %v4154, 1
        %v4459 = vrot.slane %v4202, 1
        %v4460 = vsel %vm1154, %v4458, %v4459
        %v4461 = vrot.slane %v4155, 1
        %v4462 = vrot.slane %v4203, 1
        %v4463 = vsel %vm1154, %v4461, %v4462
        %v4464 = vrot.slane %v4156, 1
        %v4465 = vrot.slane %v4204, 1
        %v4466 = vsel %vm1154, %v4464, %v4465
        %v4467 = vrot.slane %v4157, 1
        %v4468 = vrot.slane %v4205, 1
        %v4469 = vsel %vm1154, %v4467, %v4468
        %v4470 = vrot.slane %v4158, 1
        %v4471 = vrot.slane %v4206, 1
        %v4472 = vsel %vm1154, %v4470, %v4471
        %v4473 = vrot.slane %v4159, 1
        %v4474 = vrot.slane %v4207, 1
        %v4475 = vsel %vm1154, %v4473, %v4474
        %v4476 = vrot.slane %v4160, 1
        %v4477 = vrot.slane %v4208, 1
        %v4478 = vsel %vm1154, %v4476, %v4477
        %v4479 = vrot.slane %v4161, 1
        %v4480 = vrot.slane %v4209, 1
        %v4481 = vsel %vm1154, %v4479, %v4480
        %4482 = vrot.lane.b32.xlu0 %v4436, 64
        %v4483 = vpop.permute.xlu0 %4482
        %4484 = vrot.lane.b32.xlu0 %v4439, 64
        %v4485 = vpop.permute.xlu0 %4484
        %4486 = vrot.lane.b32.xlu0 %v4442, 64
        %v4487 = vpop.permute.xlu0 %4486
        %4488 = vrot.lane.b32.xlu0 %v4445, 64
        %v4489 = vpop.permute.xlu0 %4488
        %4490 = vrot.lane.b32.xlu0 %v4448, 64
        %v4491 = vpop.permute.xlu0 %4490
        %4492 = vrot.lane.b32.xlu0 %v4451, 64
        %v4493 = vpop.permute.xlu0 %4492
        %4494 = vrot.lane.b32.xlu0 %v4454, 64
        %v4495 = vpop.permute.xlu0 %4494
        %4496 = vrot.lane.b32.xlu0 %v4457, 64
        %v4497 = vpop.permute.xlu0 %4496
        %4498 = vrot.lane.b32.xlu0 %v4460, 64
        %v4499 = vpop.permute.xlu0 %4498
        %4500 = vrot.lane.b32.xlu0 %v4463, 64
        %v4501 = vpop.permute.xlu0 %4500
        %4502 = vrot.lane.b32.xlu0 %v4466, 64
        %v4503 = vpop.permute.xlu0 %4502
        %4504 = vrot.lane.b32.xlu0 %v4469, 64
        %v4505 = vpop.permute.xlu0 %4504
        %4506 = vrot.lane.b32.xlu0 %v4472, 64
        %v4507 = vpop.permute.xlu0 %4506
        %4508 = vrot.lane.b32.xlu0 %v4475, 64
        %v4509 = vpop.permute.xlu0 %4508
        %4510 = vrot.lane.b32.xlu0 %v4478, 64
        %v4511 = vpop.permute.xlu0 %4510
        %4512 = vrot.lane.b32.xlu0 %v4481, 64
        %v4513 = vpop.permute.xlu0 %4512
        %v4515 = vsel %vm3956, %v4146, %v4403
        %v4517 = vsel %vm3956, %v4147, %v4405
        %v4519 = vsel %vm3956, %v4148, %v4407
        %v4521 = vsel %vm3956, %v4149, %v4409
        %v4523 = vsel %vm3956, %v4150, %v4411
        %v4525 = vsel %vm3956, %v4151, %v4413
        %v4527 = vsel %vm3956, %v4152, %v4415
        %v4529 = vsel %vm3956, %v4153, %v4417
        %v4531 = vsel %vm3956, %v4154, %v4419
        %v4533 = vsel %vm3956, %v4155, %v4421
        %v4535 = vsel %vm3956, %v4156, %v4423
        %v4537 = vsel %vm3956, %v4157, %v4425
        %v4539 = vsel %vm3956, %v4158, %v4427
        %v4541 = vsel %vm3956, %v4159, %v4429
        %v4543 = vsel %vm3956, %v4160, %v4431
        %v4545 = vsel %vm3956, %v4161, %v4433
        %v4547 = vsel %vm3989, %v4515, %v4483
        %v4549 = vsel %vm3989, %v4517, %v4485
        %v4551 = vsel %vm3989, %v4519, %v4487
        %v4553 = vsel %vm3989, %v4521, %v4489
        %v4555 = vsel %vm3989, %v4523, %v4491
        %v4557 = vsel %vm3989, %v4525, %v4493
        %v4559 = vsel %vm3989, %v4527, %v4495
        %v4561 = vsel %vm3989, %v4529, %v4497
        %v4563 = vsel %vm3989, %v4531, %v4499
        %v4565 = vsel %vm3989, %v4533, %v4501
        %v4567 = vsel %vm3989, %v4535, %v4503
        %v4569 = vsel %vm3989, %v4537, %v4505
        %v4571 = vsel %vm3989, %v4539, %v4507
        %v4573 = vsel %vm3989, %v4541, %v4509
        %v4575 = vsel %vm3989, %v4543, %v4511
        %v4577 = vsel %vm3989, %v4545, %v4513
        %s4578 = scalar_lea.vmem %s3, 48
        %v4579 = vld [vmem:[%s4578] sm:$0xf]
        %v4580 = vld [vmem:[%s4578 + $0x4] sm:$0xf]
        %v4581 = vld [vmem:[%s4578 + $0x8] sm:$0xf]
        %v4582 = vld [vmem:[%s4578 + $0xc] sm:$0xf]
        %v4583 = vld [vmem:[%s4578 + $0x10] sm:$0xf]
        %v4584 = vld [vmem:[%s4578 + $0x14] sm:$0xf]
        %v4585 = vld [vmem:[%s4578 + $0x18] sm:$0xf]
        %v4586 = vld [vmem:[%s4578 + $0x1c] sm:$0xf]
        %v4587 = vld [vmem:[%s4578 + $0x20] sm:$0xf]
        %v4588 = vld [vmem:[%s4578 + $0x24] sm:$0xf]
        %v4589 = vld [vmem:[%s4578 + $0x28] sm:$0xf]
        %v4590 = vld [vmem:[%s4578 + $0x2c] sm:$0xf]
        %v4603 = vunpack.c.l.b16 %v4579
        %v4604 = vunpack.c.l.b16 %v4580
        %v4605 = vunpack.c.l.b16 %v4581
        %v4606 = vunpack.c.l.b16 %v4582
        %v4607 = vunpack.c.l.b16 %v4583
        %v4608 = vunpack.c.l.b16 %v4584
        %v4609 = vunpack.c.l.b16 %v4585
        %v4610 = vunpack.c.l.b16 %v4586
        %v4611 = vunpack.c.l.b16 %v4587
        %v4612 = vunpack.c.l.b16 %v4588
        %v4613 = vunpack.c.l.b16 %v4589
        %v4614 = vunpack.c.l.b16 %v4590
        %v4615 = vpack.c.b16 %v4604, %v4603
        %v4616 = vpack.c.b16 %v4606, %v4605
        %v4617 = vpack.c.b16 %v4608, %v4607
        %v4618 = vpack.c.b16 %v4610, %v4609
        %v4619 = vpack.c.b16 %v4612, %v4611
        %v4620 = vpack.c.b16 %v4614, %v4613
        %vm4627 = vcmask 785408
        %v4628 = vsel %vm4627, %v4547, 0
        %v4630 = vsel %vm4627, %v4549, 0
        %v4632 = vsel %vm4627, %v4551, 0
        %v4634 = vsel %vm4627, %v4553, 0
        %v4636 = vsel %vm4627, %v4555, 0
        %v4638 = vsel %vm4627, %v4557, 0
        %v4640 = vsel %vm4627, %v4559, 0
        %v4642 = vsel %vm4627, %v4561, 0
        %v4644 = vsel %vm4627, %v4563, 0
        %v4646 = vsel %vm4627, %v4565, 0
        %v4648 = vsel %vm4627, %v4567, 0
        %v4650 = vsel %vm4627, %v4569, 0
        %v4652 = vsel %vm4627, %v4571, 0
        %v4654 = vsel %vm4627, %v4573, 0
        %v4656 = vsel %vm4627, %v4575, 0
        %v4658 = vsel %vm4627, %v4577, 0
        %4660 = vmatpush.bf16.msra.mxu0 0
        %4661 = vmatpush.bf16.msra.mxu0 0
        %4662 = vmatpush.bf16.msra.mxu0 %v4620
        %4663 = vmatpush.bf16.msra.mxu0 %v4619
        %4664 = vmatpush.bf16.msra.mxu0 %v4618
        %4665 = vmatpush.bf16.msra.mxu0 %v4617
        %4666 = vmatpush.bf16.msra.mxu0 %v4616
        %4667 = vmatpush.bf16.msra.mxu0 %v4615
        %4668 = vmatmul.bf16.gmra.mxu0 %v4628
        %v4669 = vpop.f32.mrf.mxu0
        %v4670 = vadd.f32 0.0, %v4669
        %v4671 = vpop.f32.mrf.mxu0
        %v4672 = vadd.f32 0.0, %v4671
        %4673 = vmatmul.bf16.gmra.mxu0 %v4630
        %v4674 = vpop.f32.mrf.mxu0
        %v4675 = vadd.f32 0.0, %v4674
        %v4676 = vpop.f32.mrf.mxu0
        %v4677 = vadd.f32 0.0, %v4676
        %4678 = vmatmul.bf16.gmra.mxu0 %v4632
        %v4679 = vpop.f32.mrf.mxu0
        %v4680 = vadd.f32 0.0, %v4679
        %v4681 = vpop.f32.mrf.mxu0
        %v4682 = vadd.f32 0.0, %v4681
        %4683 = vmatmul.bf16.gmra.mxu0 %v4634
        %v4684 = vpop.f32.mrf.mxu0
        %v4685 = vadd.f32 0.0, %v4684
        %v4686 = vpop.f32.mrf.mxu0
        %v4687 = vadd.f32 0.0, %v4686
        %4688 = vmatmul.bf16.gmra.mxu0 %v4636
        %v4689 = vpop.f32.mrf.mxu0
        %v4690 = vadd.f32 0.0, %v4689
        %v4691 = vpop.f32.mrf.mxu0
        %v4692 = vadd.f32 0.0, %v4691
        %4693 = vmatmul.bf16.gmra.mxu0 %v4638
        %v4694 = vpop.f32.mrf.mxu0
        %v4695 = vadd.f32 0.0, %v4694
        %v4696 = vpop.f32.mrf.mxu0
        %v4697 = vadd.f32 0.0, %v4696
        %4698 = vmatmul.bf16.gmra.mxu0 %v4640
        %v4699 = vpop.f32.mrf.mxu0
        %v4700 = vadd.f32 0.0, %v4699
        %v4701 = vpop.f32.mrf.mxu0
        %v4702 = vadd.f32 0.0, %v4701
        %4703 = vmatmul.bf16.gmra.mxu0 %v4642
        %v4704 = vpop.f32.mrf.mxu0
        %v4705 = vadd.f32 0.0, %v4704
        %v4706 = vpop.f32.mrf.mxu0
        %v4707 = vadd.f32 0.0, %v4706
        %4708 = vmatmul.bf16.gmra.mxu0 %v4644
        %v4709 = vpop.f32.mrf.mxu0
        %v4710 = vadd.f32 0.0, %v4709
        %v4711 = vpop.f32.mrf.mxu0
        %v4712 = vadd.f32 0.0, %v4711
        %4713 = vmatmul.bf16.gmra.mxu0 %v4646
        %v4714 = vpop.f32.mrf.mxu0
        %v4715 = vadd.f32 0.0, %v4714
        %v4716 = vpop.f32.mrf.mxu0
        %v4717 = vadd.f32 0.0, %v4716
        %4718 = vmatmul.bf16.gmra.mxu0 %v4648
        %v4719 = vpop.f32.mrf.mxu0
        %v4720 = vadd.f32 0.0, %v4719
        %v4721 = vpop.f32.mrf.mxu0
        %v4722 = vadd.f32 0.0, %v4721
        %4723 = vmatmul.bf16.gmra.mxu0 %v4650
        %v4724 = vpop.f32.mrf.mxu0
        %v4725 = vadd.f32 0.0, %v4724
        %v4726 = vpop.f32.mrf.mxu0
        %v4727 = vadd.f32 0.0, %v4726
        %4728 = vmatmul.bf16.gmra.mxu0 %v4652
        %v4729 = vpop.f32.mrf.mxu0
        %v4730 = vadd.f32 0.0, %v4729
        %v4731 = vpop.f32.mrf.mxu0
        %v4732 = vadd.f32 0.0, %v4731
        %4733 = vmatmul.bf16.gmra.mxu0 %v4654
        %v4734 = vpop.f32.mrf.mxu0
        %v4735 = vadd.f32 0.0, %v4734
        %v4736 = vpop.f32.mrf.mxu0
        %v4737 = vadd.f32 0.0, %v4736
        %4738 = vmatmul.bf16.gmra.mxu0 %v4656
        %v4739 = vpop.f32.mrf.mxu0
        %v4740 = vadd.f32 0.0, %v4739
        %v4741 = vpop.f32.mrf.mxu0
        %v4742 = vadd.f32 0.0, %v4741
        %4743 = vmatmul.bf16.gmra.mxu0 %v4658
        %v4744 = vpop.f32.mrf.mxu0
        %v4745 = vadd.f32 0.0, %v4744
        %v4746 = vpop.f32.mrf.mxu0
        %v4747 = vadd.f32 0.0, %v4746
        %4748 = vdwg.mxu0
        %v4761 = vunpack.c.l.b16 %v4022
        %v4762 = vunpack.c.l.b16 %v4023
        %v4763 = vunpack.c.l.b16 %v4024
        %v4764 = vunpack.c.l.b16 %v4025
        %v4765 = vunpack.c.l.b16 %v4026
        %v4766 = vunpack.c.l.b16 %v4027
        %v4767 = vunpack.c.l.b16 %v4028
        %v4768 = vunpack.c.l.b16 %v4029
        %v4769 = vunpack.c.l.b16 %v4030
        %v4770 = vunpack.c.l.b16 %v4031
        %v4771 = vunpack.c.l.b16 %v4032
        %v4772 = vunpack.c.l.b16 %v4033
        %v4773 = vpack.c.b16 %v4762, %v4761
        %v4774 = vpack.c.b16 %v4764, %v4763
        %v4775 = vpack.c.b16 %v4766, %v4765
        %v4776 = vpack.c.b16 %v4768, %v4767
        %v4777 = vpack.c.b16 %v4770, %v4769
        %v4778 = vpack.c.b16 %v4772, %v4771
        %v4785 = vsel %vm4627, %v3991, 0
        %v4787 = vsel %vm4627, %v3993, 0
        %v4789 = vsel %vm4627, %v3995, 0
        %v4791 = vsel %vm4627, %v3997, 0
        %v4793 = vsel %vm4627, %v3999, 0
        %v4795 = vsel %vm4627, %v4001, 0
        %v4797 = vsel %vm4627, %v4003, 0
        %v4799 = vsel %vm4627, %v4005, 0
        %v4801 = vsel %vm4627, %v4007, 0
        %v4803 = vsel %vm4627, %v4009, 0
        %v4805 = vsel %vm4627, %v4011, 0
        %v4807 = vsel %vm4627, %v4013, 0
        %v4809 = vsel %vm4627, %v4015, 0
        %v4811 = vsel %vm4627, %v4017, 0
        %v4813 = vsel %vm4627, %v4019, 0
        %v4815 = vsel %vm4627, %v4021, 0
        %4817 = vmatpush.bf16.msra.mxu0 0
        %4818 = vmatpush.bf16.msra.mxu0 0
        %4819 = vmatpush.bf16.msra.mxu0 %v4778
        %4820 = vmatpush.bf16.msra.mxu0 %v4777
        %4821 = vmatpush.bf16.msra.mxu0 %v4776
        %4822 = vmatpush.bf16.msra.mxu0 %v4775
        %4823 = vmatpush.bf16.msra.mxu0 %v4774
        %4824 = vmatpush.bf16.msra.mxu0 %v4773
        %4825 = vmatmul.bf16.gmra.mxu0 %v4785
        %v4826 = vpop.f32.mrf.mxu0
        %v4827 = vadd.f32 %v4670, %v4826
        %v4828 = vpop.f32.mrf.mxu0
        %v4829 = vadd.f32 %v4672, %v4828
        %4830 = vmatmul.bf16.gmra.mxu0 %v4787
        %v4831 = vpop.f32.mrf.mxu0
        %v4832 = vadd.f32 %v4675, %v4831
        %v4833 = vpop.f32.mrf.mxu0
        %v4834 = vadd.f32 %v4677, %v4833
        %4835 = vmatmul.bf16.gmra.mxu0 %v4789
        %v4836 = vpop.f32.mrf.mxu0
        %v4837 = vadd.f32 %v4680, %v4836
        %v4838 = vpop.f32.mrf.mxu0
        %v4839 = vadd.f32 %v4682, %v4838
        %4840 = vmatmul.bf16.gmra.mxu0 %v4791
        %v4841 = vpop.f32.mrf.mxu0
        %v4842 = vadd.f32 %v4685, %v4841
        %v4843 = vpop.f32.mrf.mxu0
        %v4844 = vadd.f32 %v4687, %v4843
        %4845 = vmatmul.bf16.gmra.mxu0 %v4793
        %v4846 = vpop.f32.mrf.mxu0
        %v4847 = vadd.f32 %v4690, %v4846
        %v4848 = vpop.f32.mrf.mxu0
        %v4849 = vadd.f32 %v4692, %v4848
        %4850 = vmatmul.bf16.gmra.mxu0 %v4795
        %v4851 = vpop.f32.mrf.mxu0
        %v4852 = vadd.f32 %v4695, %v4851
        %v4853 = vpop.f32.mrf.mxu0
        %v4854 = vadd.f32 %v4697, %v4853
        %4855 = vmatmul.bf16.gmra.mxu0 %v4797
        %v4856 = vpop.f32.mrf.mxu0
        %v4857 = vadd.f32 %v4700, %v4856
        %v4858 = vpop.f32.mrf.mxu0
        %v4859 = vadd.f32 %v4702, %v4858
        %4860 = vmatmul.bf16.gmra.mxu0 %v4799
        %v4861 = vpop.f32.mrf.mxu0
        %v4862 = vadd.f32 %v4705, %v4861
        %v4863 = vpop.f32.mrf.mxu0
        %v4864 = vadd.f32 %v4707, %v4863
        %4865 = vmatmul.bf16.gmra.mxu0 %v4801
        %v4866 = vpop.f32.mrf.mxu0
        %v4867 = vadd.f32 %v4710, %v4866
        %v4868 = vpop.f32.mrf.mxu0
        %v4869 = vadd.f32 %v4712, %v4868
        %4870 = vmatmul.bf16.gmra.mxu0 %v4803
        %v4871 = vpop.f32.mrf.mxu0
        %v4872 = vadd.f32 %v4715, %v4871
        %v4873 = vpop.f32.mrf.mxu0
        %v4874 = vadd.f32 %v4717, %v4873
        %4875 = vmatmul.bf16.gmra.mxu0 %v4805
        %v4876 = vpop.f32.mrf.mxu0
        %v4877 = vadd.f32 %v4720, %v4876
        %v4878 = vpop.f32.mrf.mxu0
        %v4879 = vadd.f32 %v4722, %v4878
        %4880 = vmatmul.bf16.gmra.mxu0 %v4807
        %v4881 = vpop.f32.mrf.mxu0
        %v4882 = vadd.f32 %v4725, %v4881
        %v4883 = vpop.f32.mrf.mxu0
        %v4884 = vadd.f32 %v4727, %v4883
        %4885 = vmatmul.bf16.gmra.mxu0 %v4809
        %v4886 = vpop.f32.mrf.mxu0
        %v4887 = vadd.f32 %v4730, %v4886
        %v4888 = vpop.f32.mrf.mxu0
        %v4889 = vadd.f32 %v4732, %v4888
        %4890 = vmatmul.bf16.gmra.mxu0 %v4811
        %v4891 = vpop.f32.mrf.mxu0
        %v4892 = vadd.f32 %v4735, %v4891
        %v4893 = vpop.f32.mrf.mxu0
        %v4894 = vadd.f32 %v4737, %v4893
        %4895 = vmatmul.bf16.gmra.mxu0 %v4813
        %v4896 = vpop.f32.mrf.mxu0
        %v4897 = vadd.f32 %v4740, %v4896
        %v4898 = vpop.f32.mrf.mxu0
        %v4899 = vadd.f32 %v4742, %v4898
        %4900 = vmatmul.bf16.gmra.mxu0 %v4815
        %v4901 = vpop.f32.mrf.mxu0
        %v4902 = vadd.f32 %v4745, %v4901
        %v4903 = vpop.f32.mrf.mxu0
        %v4904 = vadd.f32 %v4747, %v4903
        %4905 = vdwg.mxu0
        %s4906 = scalar_lea.vmem [#allocation3], 24
        %v4907 = vld [vmem:[%s4906] sm:$0xf]
        %v4908 = vld [vmem:[%s4906 + $0x4] sm:$0xf]
        %v4909 = vld [vmem:[%s4906 + $0x8] sm:$0x1]
        %v4910 = vld [vmem:[%s4906 + $0xc] sm:$0xf]
        %v4911 = vld [vmem:[%s4906 + $0x10] sm:$0xf]
        %v4912 = vld [vmem:[%s4906 + $0x14] sm:$0x1]
        %v4913 = vld [vmem:[%s4906 + $0x18] sm:$0xf]
        %v4914 = vld [vmem:[%s4906 + $0x1c] sm:$0xf]
        %v4915 = vld [vmem:[%s4906 + $0x20] sm:$0x1]
        %v4916 = vld [vmem:[%s4906 + $0x24] sm:$0xf]
        %v4917 = vld [vmem:[%s4906 + $0x28] sm:$0xf]
        %v4918 = vld [vmem:[%s4906 + $0x2c] sm:$0x1]
        %v4919 = vld [vmem:[%s4906 + $0x30] sm:$0xf]
        %v4920 = vld [vmem:[%s4906 + $0x34] sm:$0xf]
        %v4921 = vld [vmem:[%s4906 + $0x38] sm:$0x1]
        %v4922 = vld [vmem:[%s4906 + $0x3c] sm:$0xf]
        %v4923 = vld [vmem:[%s4906 + $0x40] sm:$0xf]
        %v4924 = vld [vmem:[%s4906 + $0x44] sm:$0x1]
        %v4925 = vld [vmem:[%s4906 + $0x48] sm:$0xf]
        %v4926 = vld [vmem:[%s4906 + $0x4c] sm:$0xf]
        %v4927 = vld [vmem:[%s4906 + $0x50] sm:$0x1]
        %v4928 = vld [vmem:[%s4906 + $0x54] sm:$0xf]
        %v4929 = vld [vmem:[%s4906 + $0x58] sm:$0xf]
        %v4930 = vld [vmem:[%s4906 + $0x5c] sm:$0x1]
        %v4931 = vld [vmem:[%s4906 + $0x60] sm:$0xf]
        %v4932 = vld [vmem:[%s4906 + $0x64] sm:$0xf]
        %v4933 = vld [vmem:[%s4906 + $0x68] sm:$0x1]
        %v4934 = vld [vmem:[%s4906 + $0x6c] sm:$0xf]
        %v4935 = vld [vmem:[%s4906 + $0x70] sm:$0xf]
        %v4936 = vld [vmem:[%s4906 + $0x74] sm:$0x1]
        %v4937 = vld [vmem:[%s4906 + $0x78] sm:$0xf]
        %v4938 = vld [vmem:[%s4906 + $0x7c] sm:$0xf]
        %v4939 = vld [vmem:[%s4906 + $0x80] sm:$0x1]
        %v4940 = vld [vmem:[%s4906 + $0x84] sm:$0xf]
        %v4941 = vld [vmem:[%s4906 + $0x88] sm:$0xf]
        %v4942 = vld [vmem:[%s4906 + $0x8c] sm:$0x1]
        %v4943 = vld [vmem:[%s4906 + $0x90] sm:$0xf]
        %v4944 = vld [vmem:[%s4906 + $0x94] sm:$0xf]
        %v4945 = vld [vmem:[%s4906 + $0x98] sm:$0x1]
        %v4946 = vld [vmem:[%s4906 + $0x9c] sm:$0xf]
        %v4947 = vld [vmem:[%s4906 + $0xa0] sm:$0xf]
        %v4948 = vld [vmem:[%s4906 + $0xa4] sm:$0x1]
        %v4949 = vld [vmem:[%s4906 + $0xa8] sm:$0xf]
        %v4950 = vld [vmem:[%s4906 + $0xac] sm:$0xf]
        %v4951 = vld [vmem:[%s4906 + $0xb0] sm:$0x1]
        %v4952 = vld [vmem:[%s4906 + $0xb4] sm:$0xf]
        %v4953 = vld [vmem:[%s4906 + $0xb8] sm:$0xf]
        %v4954 = vld [vmem:[%s4906 + $0xbc] sm:$0x1]
        %v4987 = vunpack.c.l.b16 %v4907
        %v4988 = vunpack.c.l.b16 %v4908
        %v4989 = vunpack.c.l.b16 %v4910
        %v4990 = vunpack.c.l.b16 %v4911
        %v4991 = vunpack.c.l.b16 %v4913
        %v4992 = vunpack.c.l.b16 %v4914
        %v4993 = vunpack.c.l.b16 %v4916
        %v4994 = vunpack.c.l.b16 %v4917
        %v4995 = vunpack.c.l.b16 %v4919
        %v4996 = vunpack.c.l.b16 %v4920
        %v4997 = vunpack.c.l.b16 %v4922
        %v4998 = vunpack.c.l.b16 %v4923
        %v4999 = vunpack.c.l.b16 %v4925
        %v5000 = vunpack.c.l.b16 %v4926
        %v5001 = vunpack.c.l.b16 %v4928
        %v5002 = vunpack.c.l.b16 %v4929
        %v5003 = vunpack.c.l.b16 %v4931
        %v5004 = vunpack.c.l.b16 %v4932
        %v5005 = vunpack.c.l.b16 %v4934
        %v5006 = vunpack.c.l.b16 %v4935
        %v5007 = vunpack.c.l.b16 %v4937
        %v5008 = vunpack.c.l.b16 %v4938
        %v5009 = vunpack.c.l.b16 %v4940
        %v5010 = vunpack.c.l.b16 %v4941
        %v5011 = vunpack.c.l.b16 %v4943
        %v5012 = vunpack.c.l.b16 %v4944
        %v5013 = vunpack.c.l.b16 %v4946
        %v5014 = vunpack.c.l.b16 %v4947
        %v5015 = vunpack.c.l.b16 %v4949
        %v5016 = vunpack.c.l.b16 %v4950
        %v5017 = vunpack.c.l.b16 %v4952
        %v5018 = vunpack.c.l.b16 %v4953
        %v5019 = vpack.c.b16 %v4988, %v4987
        %v5020 = vpack.c.b16 %v4990, %v4989
        %v5021 = vpack.c.b16 %v4992, %v4991
        %v5022 = vpack.c.b16 %v4994, %v4993
        %v5023 = vpack.c.b16 %v4996, %v4995
        %v5024 = vpack.c.b16 %v4998, %v4997
        %v5025 = vpack.c.b16 %v5000, %v4999
        %v5026 = vpack.c.b16 %v5002, %v5001
        %v5027 = vpack.c.b16 %v5004, %v5003
        %v5028 = vpack.c.b16 %v5006, %v5005
        %v5029 = vpack.c.b16 %v5008, %v5007
        %v5030 = vpack.c.b16 %v5010, %v5009
        %v5031 = vpack.c.b16 %v5012, %v5011
        %v5032 = vpack.c.b16 %v5014, %v5013
        %v5033 = vpack.c.b16 %v5016, %v5015
        %v5034 = vpack.c.b16 %v5018, %v5017
        %v5051 = vunpack.c.l.b16 %v4909
        %v5052 = vunpack.c.l.b16 %v4912
        %v5053 = vunpack.c.l.b16 %v4915
        %v5054 = vunpack.c.l.b16 %v4918
        %v5055 = vunpack.c.l.b16 %v4921
        %v5056 = vunpack.c.l.b16 %v4924
        %v5057 = vunpack.c.l.b16 %v4927
        %v5058 = vunpack.c.l.b16 %v4930
        %v5059 = vunpack.c.l.b16 %v4933
        %v5060 = vunpack.c.l.b16 %v4936
        %v5061 = vunpack.c.l.b16 %v4939
        %v5062 = vunpack.c.l.b16 %v4942
        %v5063 = vunpack.c.l.b16 %v4945
        %v5064 = vunpack.c.l.b16 %v4948
        %v5065 = vunpack.c.l.b16 %v4951
        %v5066 = vunpack.c.l.b16 %v4954
        %v5067 = vpack.c.b16 %v5051, %v5051
        %v5068 = vpack.c.b16 %v5052, %v5052
        %v5069 = vpack.c.b16 %v5053, %v5053
        %v5070 = vpack.c.b16 %v5054, %v5054
        %v5071 = vpack.c.b16 %v5055, %v5055
        %v5072 = vpack.c.b16 %v5056, %v5056
        %v5073 = vpack.c.b16 %v5057, %v5057
        %v5074 = vpack.c.b16 %v5058, %v5058
        %v5075 = vpack.c.b16 %v5059, %v5059
        %v5076 = vpack.c.b16 %v5060, %v5060
        %v5077 = vpack.c.b16 %v5061, %v5061
        %v5078 = vpack.c.b16 %v5062, %v5062
        %v5079 = vpack.c.b16 %v5063, %v5063
        %v5080 = vpack.c.b16 %v5064, %v5064
        %v5081 = vpack.c.b16 %v5065, %v5065
        %v5082 = vpack.c.b16 %v5066, %v5066
        %v5084 = vshrl.u32 %v5019, 16
        %v5086 = vshll.u32 %v5019, 16
        %v5088 = vrot.slane %v5086, 1
        %v5089 = vor.u32 %v5084, %v5088
        %v5091 = vshll.u32 %v5067, 16
        %v5093 = vrot.slane %v5091, 1
        %v5094 = vsel %vm929, %v5089, %v5093
        %v5096 = vshrl.u32 %v5020, 16
        %v5098 = vshll.u32 %v5020, 16
        %v5100 = vrot.slane %v5098, 1
        %v5101 = vor.u32 %v5096, %v5100
        %v5103 = vshll.u32 %v5068, 16
        %v5105 = vrot.slane %v5103, 1
        %v5106 = vsel %vm929, %v5101, %v5105
        %v5108 = vshrl.u32 %v5021, 16
        %v5110 = vshll.u32 %v5021, 16
        %v5112 = vrot.slane %v5110, 1
        %v5113 = vor.u32 %v5108, %v5112
        %v5115 = vshll.u32 %v5069, 16
        %v5117 = vrot.slane %v5115, 1
        %v5118 = vsel %vm929, %v5113, %v5117
        %v5120 = vshrl.u32 %v5022, 16
        %v5122 = vshll.u32 %v5022, 16
        %v5124 = vrot.slane %v5122, 1
        %v5125 = vor.u32 %v5120, %v5124
        %v5127 = vshll.u32 %v5070, 16
        %v5129 = vrot.slane %v5127, 1
        %v5130 = vsel %vm929, %v5125, %v5129
        %v5132 = vshrl.u32 %v5023, 16
        %v5134 = vshll.u32 %v5023, 16
        %v5136 = vrot.slane %v5134, 1
        %v5137 = vor.u32 %v5132, %v5136
        %v5139 = vshll.u32 %v5071, 16
        %v5141 = vrot.slane %v5139, 1
        %v5142 = vsel %vm929, %v5137, %v5141
        %v5144 = vshrl.u32 %v5024, 16
        %v5146 = vshll.u32 %v5024, 16
        %v5148 = vrot.slane %v5146, 1
        %v5149 = vor.u32 %v5144, %v5148
        %v5151 = vshll.u32 %v5072, 16
        %v5153 = vrot.slane %v5151, 1
        %v5154 = vsel %vm929, %v5149, %v5153
        %v5156 = vshrl.u32 %v5025, 16
        %v5158 = vshll.u32 %v5025, 16
        %v5160 = vrot.slane %v5158, 1
        %v5161 = vor.u32 %v5156, %v5160
        %v5163 = vshll.u32 %v5073, 16
        %v5165 = vrot.slane %v5163, 1
        %v5166 = vsel %vm929, %v5161, %v5165
        %v5168 = vshrl.u32 %v5026, 16
        %v5170 = vshll.u32 %v5026, 16
        %v5172 = vrot.slane %v5170, 1
        %v5173 = vor.u32 %v5168, %v5172
        %v5175 = vshll.u32 %v5074, 16
        %v5177 = vrot.slane %v5175, 1
        %v5178 = vsel %vm929, %v5173, %v5177
        %v5180 = vshrl.u32 %v5027, 16
        %v5182 = vshll.u32 %v5027, 16
        %v5184 = vrot.slane %v5182, 1
        %v5185 = vor.u32 %v5180, %v5184
        %v5187 = vshll.u32 %v5075, 16
        %v5189 = vrot.slane %v5187, 1
        %v5190 = vsel %vm929, %v5185, %v5189
        %v5192 = vshrl.u32 %v5028, 16
        %v5194 = vshll.u32 %v5028, 16
        %v5196 = vrot.slane %v5194, 1
        %v5197 = vor.u32 %v5192, %v5196
        %v5199 = vshll.u32 %v5076, 16
        %v5201 = vrot.slane %v5199, 1
        %v5202 = vsel %vm929, %v5197, %v5201
        %v5204 = vshrl.u32 %v5029, 16
        %v5206 = vshll.u32 %v5029, 16
        %v5208 = vrot.slane %v5206, 1
        %v5209 = vor.u32 %v5204, %v5208
        %v5211 = vshll.u32 %v5077, 16
        %v5213 = vrot.slane %v5211, 1
        %v5214 = vsel %vm929, %v5209, %v5213
        %v5216 = vshrl.u32 %v5030, 16
        %v5218 = vshll.u32 %v5030, 16
        %v5220 = vrot.slane %v5218, 1
        %v5221 = vor.u32 %v5216, %v5220
        %v5223 = vshll.u32 %v5078, 16
        %v5225 = vrot.slane %v5223, 1
        %v5226 = vsel %vm929, %v5221, %v5225
        %v5228 = vshrl.u32 %v5031, 16
        %v5230 = vshll.u32 %v5031, 16
        %v5232 = vrot.slane %v5230, 1
        %v5233 = vor.u32 %v5228, %v5232
        %v5235 = vshll.u32 %v5079, 16
        %v5237 = vrot.slane %v5235, 1
        %v5238 = vsel %vm929, %v5233, %v5237
        %v5240 = vshrl.u32 %v5032, 16
        %v5242 = vshll.u32 %v5032, 16
        %v5244 = vrot.slane %v5242, 1
        %v5245 = vor.u32 %v5240, %v5244
        %v5247 = vshll.u32 %v5080, 16
        %v5249 = vrot.slane %v5247, 1
        %v5250 = vsel %vm929, %v5245, %v5249
        %v5252 = vshrl.u32 %v5033, 16
        %v5254 = vshll.u32 %v5033, 16
        %v5256 = vrot.slane %v5254, 1
        %v5257 = vor.u32 %v5252, %v5256
        %v5259 = vshll.u32 %v5081, 16
        %v5261 = vrot.slane %v5259, 1
        %v5262 = vsel %vm929, %v5257, %v5261
        %v5264 = vshrl.u32 %v5034, 16
        %v5266 = vshll.u32 %v5034, 16
        %v5268 = vrot.slane %v5266, 1
        %v5269 = vor.u32 %v5264, %v5268
        %v5271 = vshll.u32 %v5082, 16
        %v5273 = vrot.slane %v5271, 1
        %v5274 = vsel %vm929, %v5269, %v5273
        %5275 = vrot.lane.b32.xlu0 %v5094, 32
        %v5276 = vpop.permute.xlu0 %5275
        %5277 = vrot.lane.b32.xlu0 %v5106, 32
        %v5278 = vpop.permute.xlu0 %5277
        %5279 = vrot.lane.b32.xlu0 %v5118, 32
        %v5280 = vpop.permute.xlu0 %5279
        %5281 = vrot.lane.b32.xlu0 %v5130, 32
        %v5282 = vpop.permute.xlu0 %5281
        %5283 = vrot.lane.b32.xlu0 %v5142, 32
        %v5284 = vpop.permute.xlu0 %5283
        %5285 = vrot.lane.b32.xlu0 %v5154, 32
        %v5286 = vpop.permute.xlu0 %5285
        %5287 = vrot.lane.b32.xlu0 %v5166, 32
        %v5288 = vpop.permute.xlu0 %5287
        %5289 = vrot.lane.b32.xlu0 %v5178, 32
        %v5290 = vpop.permute.xlu0 %5289
        %5291 = vrot.lane.b32.xlu0 %v5190, 32
        %v5292 = vpop.permute.xlu0 %5291
        %5293 = vrot.lane.b32.xlu0 %v5202, 32
        %v5294 = vpop.permute.xlu0 %5293
        %5295 = vrot.lane.b32.xlu0 %v5214, 32
        %v5296 = vpop.permute.xlu0 %5295
        %5297 = vrot.lane.b32.xlu0 %v5226, 32
        %v5298 = vpop.permute.xlu0 %5297
        %5299 = vrot.lane.b32.xlu0 %v5238, 32
        %v5300 = vpop.permute.xlu0 %5299
        %5301 = vrot.lane.b32.xlu0 %v5250, 32
        %v5302 = vpop.permute.xlu0 %5301
        %5303 = vrot.lane.b32.xlu0 %v5262, 32
        %v5304 = vpop.permute.xlu0 %5303
        %5305 = vrot.lane.b32.xlu0 %v5274, 32
        %v5306 = vpop.permute.xlu0 %5305
        %v5307 = vrot.slane %v5019, 1
        %v5308 = vrot.slane %v5067, 1
        %v5309 = vsel %vm1154, %v5307, %v5308
        %v5310 = vrot.slane %v5020, 1
        %v5311 = vrot.slane %v5068, 1
        %v5312 = vsel %vm1154, %v5310, %v5311
        %v5313 = vrot.slane %v5021, 1
        %v5314 = vrot.slane %v5069, 1
        %v5315 = vsel %vm1154, %v5313, %v5314
        %v5316 = vrot.slane %v5022, 1
        %v5317 = vrot.slane %v5070, 1
        %v5318 = vsel %vm1154, %v5316, %v5317
        %v5319 = vrot.slane %v5023, 1
        %v5320 = vrot.slane %v5071, 1
        %v5321 = vsel %vm1154, %v5319, %v5320
        %v5322 = vrot.slane %v5024, 1
        %v5323 = vrot.slane %v5072, 1
        %v5324 = vsel %vm1154, %v5322, %v5323
        %v5325 = vrot.slane %v5025, 1
        %v5326 = vrot.slane %v5073, 1
        %v5327 = vsel %vm1154, %v5325, %v5326
        %v5328 = vrot.slane %v5026, 1
        %v5329 = vrot.slane %v5074, 1
        %v5330 = vsel %vm1154, %v5328, %v5329
        %v5331 = vrot.slane %v5027, 1
        %v5332 = vrot.slane %v5075, 1
        %v5333 = vsel %vm1154, %v5331, %v5332
        %v5334 = vrot.slane %v5028, 1
        %v5335 = vrot.slane %v5076, 1
        %v5336 = vsel %vm1154, %v5334, %v5335
        %v5337 = vrot.slane %v5029, 1
        %v5338 = vrot.slane %v5077, 1
        %v5339 = vsel %vm1154, %v5337, %v5338
        %v5340 = vrot.slane %v5030, 1
        %v5341 = vrot.slane %v5078, 1
        %v5342 = vsel %vm1154, %v5340, %v5341
        %v5343 = vrot.slane %v5031, 1
        %v5344 = vrot.slane %v5079, 1
        %v5345 = vsel %vm1154, %v5343, %v5344
        %v5346 = vrot.slane %v5032, 1
        %v5347 = vrot.slane %v5080, 1
        %v5348 = vsel %vm1154, %v5346, %v5347
        %v5349 = vrot.slane %v5033, 1
        %v5350 = vrot.slane %v5081, 1
        %v5351 = vsel %vm1154, %v5349, %v5350
        %v5352 = vrot.slane %v5034, 1
        %v5353 = vrot.slane %v5082, 1
        %v5354 = vsel %vm1154, %v5352, %v5353
        %5355 = vrot.lane.b32.xlu0 %v5309, 64
        %v5356 = vpop.permute.xlu0 %5355
        %5357 = vrot.lane.b32.xlu0 %v5312, 64
        %v5358 = vpop.permute.xlu0 %5357
        %5359 = vrot.lane.b32.xlu0 %v5315, 64
        %v5360 = vpop.permute.xlu0 %5359
        %5361 = vrot.lane.b32.xlu0 %v5318, 64
        %v5362 = vpop.permute.xlu0 %5361
        %5363 = vrot.lane.b32.xlu0 %v5321, 64
        %v5364 = vpop.permute.xlu0 %5363
        %5365 = vrot.lane.b32.xlu0 %v5324, 64
        %v5366 = vpop.permute.xlu0 %5365
        %5367 = vrot.lane.b32.xlu0 %v5327, 64
        %v5368 = vpop.permute.xlu0 %5367
        %5369 = vrot.lane.b32.xlu0 %v5330, 64
        %v5370 = vpop.permute.xlu0 %5369
        %5371 = vrot.lane.b32.xlu0 %v5333, 64
        %v5372 = vpop.permute.xlu0 %5371
        %5373 = vrot.lane.b32.xlu0 %v5336, 64
        %v5374 = vpop.permute.xlu0 %5373
        %5375 = vrot.lane.b32.xlu0 %v5339, 64
        %v5376 = vpop.permute.xlu0 %5375
        %5377 = vrot.lane.b32.xlu0 %v5342, 64
        %v5378 = vpop.permute.xlu0 %5377
        %5379 = vrot.lane.b32.xlu0 %v5345, 64
        %v5380 = vpop.permute.xlu0 %5379
        %5381 = vrot.lane.b32.xlu0 %v5348, 64
        %v5382 = vpop.permute.xlu0 %5381
        %5383 = vrot.lane.b32.xlu0 %v5351, 64
        %v5384 = vpop.permute.xlu0 %5383
        %5385 = vrot.lane.b32.xlu0 %v5354, 64
        %v5386 = vpop.permute.xlu0 %5385
        %v5388 = vsel %vm3956, %v5019, %v5276
        %v5390 = vsel %vm3956, %v5020, %v5278
        %v5392 = vsel %vm3956, %v5021, %v5280
        %v5394 = vsel %vm3956, %v5022, %v5282
        %v5396 = vsel %vm3956, %v5023, %v5284
        %v5398 = vsel %vm3956, %v5024, %v5286
        %v5400 = vsel %vm3956, %v5025, %v5288
        %v5402 = vsel %vm3956, %v5026, %v5290
        %v5404 = vsel %vm3956, %v5027, %v5292
        %v5406 = vsel %vm3956, %v5028, %v5294
        %v5408 = vsel %vm3956, %v5029, %v5296
        %v5410 = vsel %vm3956, %v5030, %v5298
        %v5412 = vsel %vm3956, %v5031, %v5300
        %v5414 = vsel %vm3956, %v5032, %v5302
        %v5416 = vsel %vm3956, %v5033, %v5304
        %v5418 = vsel %vm3956, %v5034, %v5306
        %v5420 = vsel %vm3989, %v5388, %v5356
        %v5422 = vsel %vm3989, %v5390, %v5358
        %v5424 = vsel %vm3989, %v5392, %v5360
        %v5426 = vsel %vm3989, %v5394, %v5362
        %v5428 = vsel %vm3989, %v5396, %v5364
        %v5430 = vsel %vm3989, %v5398, %v5366
        %v5432 = vsel %vm3989, %v5400, %v5368
        %v5434 = vsel %vm3989, %v5402, %v5370
        %v5436 = vsel %vm3989, %v5404, %v5372
        %v5438 = vsel %vm3989, %v5406, %v5374
        %v5440 = vsel %vm3989, %v5408, %v5376
        %v5442 = vsel %vm3989, %v5410, %v5378
        %v5444 = vsel %vm3989, %v5412, %v5380
        %v5446 = vsel %vm3989, %v5414, %v5382
        %v5448 = vsel %vm3989, %v5416, %v5384
        %v5450 = vsel %vm3989, %v5418, %v5386
        %s5451 = scalar_lea.vmem %s3, 96
        %v5452 = vld [vmem:[%s5451] sm:$0xf]
        %v5453 = vld [vmem:[%s5451 + $0x4] sm:$0xf]
        %v5454 = vld [vmem:[%s5451 + $0x8] sm:$0xf]
        %v5455 = vld [vmem:[%s5451 + $0xc] sm:$0xf]
        %v5456 = vld [vmem:[%s5451 + $0x10] sm:$0xf]
        %v5457 = vld [vmem:[%s5451 + $0x14] sm:$0xf]
        %v5458 = vld [vmem:[%s5451 + $0x18] sm:$0xf]
        %v5459 = vld [vmem:[%s5451 + $0x1c] sm:$0xf]
        %v5460 = vld [vmem:[%s5451 + $0x20] sm:$0xf]
        %v5461 = vld [vmem:[%s5451 + $0x24] sm:$0xf]
        %v5462 = vld [vmem:[%s5451 + $0x28] sm:$0xf]
        %v5463 = vld [vmem:[%s5451 + $0x2c] sm:$0xf]
        %v5476 = vunpack.c.l.b16 %v5452
        %v5477 = vunpack.c.l.b16 %v5453
        %v5478 = vunpack.c.l.b16 %v5454
        %v5479 = vunpack.c.l.b16 %v5455
        %v5480 = vunpack.c.l.b16 %v5456
        %v5481 = vunpack.c.l.b16 %v5457
        %v5482 = vunpack.c.l.b16 %v5458
        %v5483 = vunpack.c.l.b16 %v5459
        %v5484 = vunpack.c.l.b16 %v5460
        %v5485 = vunpack.c.l.b16 %v5461
        %v5486 = vunpack.c.l.b16 %v5462
        %v5487 = vunpack.c.l.b16 %v5463
        %v5488 = vpack.c.b16 %v5477, %v5476
        %v5489 = vpack.c.b16 %v5479, %v5478
        %v5490 = vpack.c.b16 %v5481, %v5480
        %v5491 = vpack.c.b16 %v5483, %v5482
        %v5492 = vpack.c.b16 %v5485, %v5484
        %v5493 = vpack.c.b16 %v5487, %v5486
        %v5500 = vsel %vm4627, %v5420, 0
        %v5502 = vsel %vm4627, %v5422, 0
        %v5504 = vsel %vm4627, %v5424, 0
        %v5506 = vsel %vm4627, %v5426, 0
        %v5508 = vsel %vm4627, %v5428, 0
        %v5510 = vsel %vm4627, %v5430, 0
        %v5512 = vsel %vm4627, %v5432, 0
        %v5514 = vsel %vm4627, %v5434, 0
        %v5516 = vsel %vm4627, %v5436, 0
        %v5518 = vsel %vm4627, %v5438, 0
        %v5520 = vsel %vm4627, %v5440, 0
        %v5522 = vsel %vm4627, %v5442, 0
        %v5524 = vsel %vm4627, %v5444, 0
        %v5526 = vsel %vm4627, %v5446, 0
        %v5528 = vsel %vm4627, %v5448, 0
        %v5530 = vsel %vm4627, %v5450, 0
        %5532 = vmatpush.bf16.msra.mxu0 0
        %5533 = vmatpush.bf16.msra.mxu0 0
        %5534 = vmatpush.bf16.msra.mxu0 %v5493
        %5535 = vmatpush.bf16.msra.mxu0 %v5492
        %5536 = vmatpush.bf16.msra.mxu0 %v5491
        %5537 = vmatpush.bf16.msra.mxu0 %v5490
        %5538 = vmatpush.bf16.msra.mxu0 %v5489
        %5539 = vmatpush.bf16.msra.mxu0 %v5488
        %5540 = vmatmul.bf16.gmra.mxu0 %v5500
        %v5541 = vpop.f32.mrf.mxu0
        %v5542 = vadd.f32 0.0, %v5541
        %v5543 = vpop.f32.mrf.mxu0
        %v5544 = vadd.f32 0.0, %v5543
        %5545 = vmatmul.bf16.gmra.mxu0 %v5502
        %v5546 = vpop.f32.mrf.mxu0
        %v5547 = vadd.f32 0.0, %v5546
        %v5548 = vpop.f32.mrf.mxu0
        %v5549 = vadd.f32 0.0, %v5548
        %5550 = vmatmul.bf16.gmra.mxu0 %v5504
        %v5551 = vpop.f32.mrf.mxu0
        %v5552 = vadd.f32 0.0, %v5551
        %v5553 = vpop.f32.mrf.mxu0
        %v5554 = vadd.f32 0.0, %v5553
        %5555 = vmatmul.bf16.gmra.mxu0 %v5506
        %v5556 = vpop.f32.mrf.mxu0
        %v5557 = vadd.f32 0.0, %v5556
        %v5558 = vpop.f32.mrf.mxu0
        %v5559 = vadd.f32 0.0, %v5558
        %5560 = vmatmul.bf16.gmra.mxu0 %v5508
        %v5561 = vpop.f32.mrf.mxu0
        %v5562 = vadd.f32 0.0, %v5561
        %v5563 = vpop.f32.mrf.mxu0
        %v5564 = vadd.f32 0.0, %v5563
        %5565 = vmatmul.bf16.gmra.mxu0 %v5510
        %v5566 = vpop.f32.mrf.mxu0
        %v5567 = vadd.f32 0.0, %v5566
        %v5568 = vpop.f32.mrf.mxu0
        %v5569 = vadd.f32 0.0, %v5568
        %5570 = vmatmul.bf16.gmra.mxu0 %v5512
        %v5571 = vpop.f32.mrf.mxu0
        %v5572 = vadd.f32 0.0, %v5571
        %v5573 = vpop.f32.mrf.mxu0
        %v5574 = vadd.f32 0.0, %v5573
        %5575 = vmatmul.bf16.gmra.mxu0 %v5514
        %v5576 = vpop.f32.mrf.mxu0
        %v5577 = vadd.f32 0.0, %v5576
        %v5578 = vpop.f32.mrf.mxu0
        %v5579 = vadd.f32 0.0, %v5578
        %5580 = vmatmul.bf16.gmra.mxu0 %v5516
        %v5581 = vpop.f32.mrf.mxu0
        %v5582 = vadd.f32 0.0, %v5581
        %v5583 = vpop.f32.mrf.mxu0
        %v5584 = vadd.f32 0.0, %v5583
        %5585 = vmatmul.bf16.gmra.mxu0 %v5518
        %v5586 = vpop.f32.mrf.mxu0
        %v5587 = vadd.f32 0.0, %v5586
        %v5588 = vpop.f32.mrf.mxu0
        %v5589 = vadd.f32 0.0, %v5588
        %5590 = vmatmul.bf16.gmra.mxu0 %v5520
        %v5591 = vpop.f32.mrf.mxu0
        %v5592 = vadd.f32 0.0, %v5591
        %v5593 = vpop.f32.mrf.mxu0
        %v5594 = vadd.f32 0.0, %v5593
        %5595 = vmatmul.bf16.gmra.mxu0 %v5522
        %v5596 = vpop.f32.mrf.mxu0
        %v5597 = vadd.f32 0.0, %v5596
        %v5598 = vpop.f32.mrf.mxu0
        %v5599 = vadd.f32 0.0, %v5598
        %5600 = vmatmul.bf16.gmra.mxu0 %v5524
        %v5601 = vpop.f32.mrf.mxu0
        %v5602 = vadd.f32 0.0, %v5601
        %v5603 = vpop.f32.mrf.mxu0
        %v5604 = vadd.f32 0.0, %v5603
        %5605 = vmatmul.bf16.gmra.mxu0 %v5526
        %v5606 = vpop.f32.mrf.mxu0
        %v5607 = vadd.f32 0.0, %v5606
        %v5608 = vpop.f32.mrf.mxu0
        %v5609 = vadd.f32 0.0, %v5608
        %5610 = vmatmul.bf16.gmra.mxu0 %v5528
        %v5611 = vpop.f32.mrf.mxu0
        %v5612 = vadd.f32 0.0, %v5611
        %v5613 = vpop.f32.mrf.mxu0
        %v5614 = vadd.f32 0.0, %v5613
        %5615 = vmatmul.bf16.gmra.mxu0 %v5530
        %v5616 = vpop.f32.mrf.mxu0
        %v5617 = vadd.f32 0.0, %v5616
        %v5618 = vpop.f32.mrf.mxu0
        %v5619 = vadd.f32 0.0, %v5618
        %5620 = vdwg.mxu0
        %v5621 = vadd.f32 %v4827, %v5542
        %v5622 = vadd.f32 %v4829, %v5544
        %v5623 = vadd.f32 %v4832, %v5547
        %v5624 = vadd.f32 %v4834, %v5549
        %v5625 = vadd.f32 %v4837, %v5552
        %v5626 = vadd.f32 %v4839, %v5554
        %v5627 = vadd.f32 %v4842, %v5557
        %v5628 = vadd.f32 %v4844, %v5559
        %v5629 = vadd.f32 %v4847, %v5562
        %v5630 = vadd.f32 %v4849, %v5564
        %v5631 = vadd.f32 %v4852, %v5567
        %v5632 = vadd.f32 %v4854, %v5569
        %v5633 = vadd.f32 %v4857, %v5572
        %v5634 = vadd.f32 %v4859, %v5574
        %v5635 = vadd.f32 %v4862, %v5577
        %v5636 = vadd.f32 %v4864, %v5579
        %v5637 = vadd.f32 %v4867, %v5582
        %v5638 = vadd.f32 %v4869, %v5584
        %v5639 = vadd.f32 %v4872, %v5587
        %v5640 = vadd.f32 %v4874, %v5589
        %v5641 = vadd.f32 %v4877, %v5592
        %v5642 = vadd.f32 %v4879, %v5594
        %v5643 = vadd.f32 %v4882, %v5597
        %v5644 = vadd.f32 %v4884, %v5599
        %v5645 = vadd.f32 %v4887, %v5602
        %v5646 = vadd.f32 %v4889, %v5604
        %v5647 = vadd.f32 %v4892, %v5607
        %v5648 = vadd.f32 %v4894, %v5609
        %v5649 = vadd.f32 %v4897, %v5612
        %v5650 = vadd.f32 %v4899, %v5614
        %v5651 = vadd.f32 %v4902, %v5617
        %v5652 = vadd.f32 %v4904, %v5619
        %v5653 = vld [vmem:[%s4] sm:$0x1]
        %v5655 = vperm.slane %v5653, 0
        %v5657 = vadd.f32 %v5621, %v5655
        %v5658 = vadd.f32 %v5622, %v5655
        %v5659 = vadd.f32 %v5623, %v5655
        %v5660 = vadd.f32 %v5624, %v5655
        %v5661 = vadd.f32 %v5625, %v5655
        %v5662 = vadd.f32 %v5626, %v5655
        %v5663 = vadd.f32 %v5627, %v5655
        %v5664 = vadd.f32 %v5628, %v5655
        %v5665 = vadd.f32 %v5629, %v5655
        %v5666 = vadd.f32 %v5630, %v5655
        %v5667 = vadd.f32 %v5631, %v5655
        %v5668 = vadd.f32 %v5632, %v5655
        %v5669 = vadd.f32 %v5633, %v5655
        %v5670 = vadd.f32 %v5634, %v5655
        %v5671 = vadd.f32 %v5635, %v5655
        %v5672 = vadd.f32 %v5636, %v5655
        %v5673 = vadd.f32 %v5637, %v5655
        %v5674 = vadd.f32 %v5638, %v5655
        %v5675 = vadd.f32 %v5639, %v5655
        %v5676 = vadd.f32 %v5640, %v5655
        %v5677 = vadd.f32 %v5641, %v5655
        %v5678 = vadd.f32 %v5642, %v5655
        %v5679 = vadd.f32 %v5643, %v5655
        %v5680 = vadd.f32 %v5644, %v5655
        %v5681 = vadd.f32 %v5645, %v5655
        %v5682 = vadd.f32 %v5646, %v5655
        %v5683 = vadd.f32 %v5647, %v5655
        %v5684 = vadd.f32 %v5648, %v5655
        %v5685 = vadd.f32 %v5649, %v5655
        %v5686 = vadd.f32 %v5650, %v5655
        %v5687 = vadd.f32 %v5651, %v5655
        %v5688 = vadd.f32 %v5652, %v5655
        %vm5689 = vcmp.ge.f32.partialorder %v5657, 0.0
        %vm5690 = vcmp.ge.f32.partialorder %v5658, 0.0
        %vm5691 = vcmp.ge.f32.partialorder %v5659, 0.0
        %vm5692 = vcmp.ge.f32.partialorder %v5660, 0.0
        %vm5693 = vcmp.ge.f32.partialorder %v5661, 0.0
        %vm5694 = vcmp.ge.f32.partialorder %v5662, 0.0
        %vm5695 = vcmp.ge.f32.partialorder %v5663, 0.0
        %vm5696 = vcmp.ge.f32.partialorder %v5664, 0.0
        %vm5697 = vcmp.ge.f32.partialorder %v5665, 0.0
        %vm5698 = vcmp.ge.f32.partialorder %v5666, 0.0
        %vm5699 = vcmp.ge.f32.partialorder %v5667, 0.0
        %vm5700 = vcmp.ge.f32.partialorder %v5668, 0.0
        %vm5701 = vcmp.ge.f32.partialorder %v5669, 0.0
        %vm5702 = vcmp.ge.f32.partialorder %v5670, 0.0
        %vm5703 = vcmp.ge.f32.partialorder %v5671, 0.0
        %vm5704 = vcmp.ge.f32.partialorder %v5672, 0.0
        %vm5705 = vcmp.ge.f32.partialorder %v5673, 0.0
        %vm5706 = vcmp.ge.f32.partialorder %v5674, 0.0
        %vm5707 = vcmp.ge.f32.partialorder %v5675, 0.0
        %vm5708 = vcmp.ge.f32.partialorder %v5676, 0.0
        %vm5709 = vcmp.ge.f32.partialorder %v5677, 0.0
        %vm5710 = vcmp.ge.f32.partialorder %v5678, 0.0
        %vm5711 = vcmp.ge.f32.partialorder %v5679, 0.0
        %vm5712 = vcmp.ge.f32.partialorder %v5680, 0.0
        %vm5713 = vcmp.ge.f32.partialorder %v5681, 0.0
        %vm5714 = vcmp.ge.f32.partialorder %v5682, 0.0
        %vm5715 = vcmp.ge.f32.partialorder %v5683, 0.0
        %vm5716 = vcmp.ge.f32.partialorder %v5684, 0.0
        %vm5717 = vcmp.ge.f32.partialorder %v5685, 0.0
        %vm5718 = vcmp.ge.f32.partialorder %v5686, 0.0
        %vm5719 = vcmp.ge.f32.partialorder %v5687, 0.0
        %vm5720 = vcmp.ge.f32.partialorder %v5688, 0.0
        %v5721 = vmul.f32 %v5657, 0.2
        %v5722 = vmul.f32 %v5658, 0.2
        %v5723 = vmul.f32 %v5659, 0.2
        %v5724 = vmul.f32 %v5660, 0.2
        %v5725 = vmul.f32 %v5661, 0.2
        %v5726 = vmul.f32 %v5662, 0.2
        %v5727 = vmul.f32 %v5663, 0.2
        %v5728 = vmul.f32 %v5664, 0.2
        %v5729 = vmul.f32 %v5665, 0.2
        %v5730 = vmul.f32 %v5666, 0.2
        %v5731 = vmul.f32 %v5667, 0.2
        %v5732 = vmul.f32 %v5668, 0.2
        %v5733 = vmul.f32 %v5669, 0.2
        %v5734 = vmul.f32 %v5670, 0.2
        %v5735 = vmul.f32 %v5671, 0.2
        %v5736 = vmul.f32 %v5672, 0.2
        %v5737 = vmul.f32 %v5673, 0.2
        %v5738 = vmul.f32 %v5674, 0.2
        %v5739 = vmul.f32 %v5675, 0.2
        %v5740 = vmul.f32 %v5676, 0.2
        %v5741 = vmul.f32 %v5677, 0.2
        %v5742 = vmul.f32 %v5678, 0.2
        %v5743 = vmul.f32 %v5679, 0.2
        %v5744 = vmul.f32 %v5680, 0.2
        %v5745 = vmul.f32 %v5681, 0.2
        %v5746 = vmul.f32 %v5682, 0.2
        %v5747 = vmul.f32 %v5683, 0.2
        %v5748 = vmul.f32 %v5684, 0.2
        %v5749 = vmul.f32 %v5685, 0.2
        %v5750 = vmul.f32 %v5686, 0.2
        %v5751 = vmul.f32 %v5687, 0.2
        %v5752 = vmul.f32 %v5688, 0.2
        %v5753 = vsel %vm5689, %v5657, %v5721
        %v5754 = vsel %vm5690, %v5658, %v5722
        %v5755 = vsel %vm5691, %v5659, %v5723
        %v5756 = vsel %vm5692, %v5660, %v5724
        %v5757 = vsel %vm5693, %v5661, %v5725
        %v5758 = vsel %vm5694, %v5662, %v5726
        %v5759 = vsel %vm5695, %v5663, %v5727
        %v5760 = vsel %vm5696, %v5664, %v5728
        %v5761 = vsel %vm5697, %v5665, %v5729
        %v5762 = vsel %vm5698, %v5666, %v5730
        %v5763 = vsel %vm5699, %v5667, %v5731
        %v5764 = vsel %vm5700, %v5668, %v5732
        %v5765 = vsel %vm5701, %v5669, %v5733
        %v5766 = vsel %vm5702, %v5670, %v5734
        %v5767 = vsel %vm5703, %v5671, %v5735
        %v5768 = vsel %vm5704, %v5672, %v5736
        %v5769 = vsel %vm5705, %v5673, %v5737
        %v5770 = vsel %vm5706, %v5674, %v5738
        %v5771 = vsel %vm5707, %v5675, %v5739
        %v5772 = vsel %vm5708, %v5676, %v5740
        %v5773 = vsel %vm5709, %v5677, %v5741
        %v5774 = vsel %vm5710, %v5678, %v5742
        %v5775 = vsel %vm5711, %v5679, %v5743
        %v5776 = vsel %vm5712, %v5680, %v5744
        %v5777 = vsel %vm5713, %v5681, %v5745
        %v5778 = vsel %vm5714, %v5682, %v5746
        %v5779 = vsel %vm5715, %v5683, %v5747
        %v5780 = vsel %vm5716, %v5684, %v5748
        %v5781 = vsel %vm5717, %v5685, %v5749
        %v5782 = vsel %vm5718, %v5686, %v5750
        %v5783 = vsel %vm5719, %v5687, %v5751
        %v5784 = vsel %vm5720, %v5688, %v5752
        %v5817 = vrot.slane %v5753, 2
        %v5818 = vrot.slane %v5753, 4
        %v5819 = vrot.slane %v5753, 6
        %v5820 = vrot.slane %v5754, 2
        %v5821 = vrot.slane %v5754, 4
        %v5822 = vrot.slane %v5754, 6
        %v5823 = vrot.slane %v5755, 2
        %v5824 = vrot.slane %v5755, 4
        %v5825 = vrot.slane %v5755, 6
        %v5826 = vrot.slane %v5756, 2
        %v5827 = vrot.slane %v5756, 4
        %v5828 = vrot.slane %v5756, 6
        %v5829 = vrot.slane %v5757, 2
        %v5830 = vrot.slane %v5757, 4
        %v5831 = vrot.slane %v5757, 6
        %v5832 = vrot.slane %v5758, 2
        %v5833 = vrot.slane %v5758, 4
        %v5834 = vrot.slane %v5758, 6
        %v5835 = vrot.slane %v5759, 2
        %v5836 = vrot.slane %v5759, 4
        %v5837 = vrot.slane %v5759, 6
        %v5838 = vrot.slane %v5760, 2
        %v5839 = vrot.slane %v5760, 4
        %v5840 = vrot.slane %v5760, 6
        %v5841 = vrot.slane %v5761, 2
        %v5842 = vrot.slane %v5761, 4
        %v5843 = vrot.slane %v5761, 6
        %v5844 = vrot.slane %v5762, 2
        %v5845 = vrot.slane %v5762, 4
        %v5846 = vrot.slane %v5762, 6
        %v5847 = vrot.slane %v5763, 2
        %v5848 = vrot.slane %v5763, 4
        %v5849 = vrot.slane %v5763, 6
        %v5850 = vrot.slane %v5764, 2
        %v5851 = vrot.slane %v5764, 4
        %v5852 = vrot.slane %v5764, 6
        %v5853 = vrot.slane %v5765, 2
        %v5854 = vrot.slane %v5765, 4
        %v5855 = vrot.slane %v5765, 6
        %v5856 = vrot.slane %v5766, 2
        %v5857 = vrot.slane %v5766, 4
        %v5858 = vrot.slane %v5766, 6
        %v5859 = vrot.slane %v5767, 2
        %v5860 = vrot.slane %v5767, 4
        %v5861 = vrot.slane %v5767, 6
        %v5862 = vrot.slane %v5768, 2
        %v5863 = vrot.slane %v5768, 4
        %v5864 = vrot.slane %v5768, 6
        %v5865 = vrot.slane %v5769, 2
        %v5866 = vrot.slane %v5769, 4
        %v5867 = vrot.slane %v5769, 6
        %v5868 = vrot.slane %v5770, 2
        %v5869 = vrot.slane %v5770, 4
        %v5870 = vrot.slane %v5770, 6
        %v5871 = vrot.slane %v5771, 2
        %v5872 = vrot.slane %v5771, 4
        %v5873 = vrot.slane %v5771, 6
        %v5874 = vrot.slane %v5772, 2
        %v5875 = vrot.slane %v5772, 4
        %v5876 = vrot.slane %v5772, 6
        %v5877 = vrot.slane %v5773, 2
        %v5878 = vrot.slane %v5773, 4
        %v5879 = vrot.slane %v5773, 6
        %v5880 = vrot.slane %v5774, 2
        %v5881 = vrot.slane %v5774, 4
        %v5882 = vrot.slane %v5774, 6
        %v5883 = vrot.slane %v5775, 2
        %v5884 = vrot.slane %v5775, 4
        %v5885 = vrot.slane %v5775, 6
        %v5886 = vrot.slane %v5776, 2
        %v5887 = vrot.slane %v5776, 4
        %v5888 = vrot.slane %v5776, 6
        %v5889 = vrot.slane %v5777, 2
        %v5890 = vrot.slane %v5777, 4
        %v5891 = vrot.slane %v5777, 6
        %v5892 = vrot.slane %v5778, 2
        %v5893 = vrot.slane %v5778, 4
        %v5894 = vrot.slane %v5778, 6
        %v5895 = vrot.slane %v5779, 2
        %v5896 = vrot.slane %v5779, 4
        %v5897 = vrot.slane %v5779, 6
        %v5898 = vrot.slane %v5780, 2
        %v5899 = vrot.slane %v5780, 4
        %v5900 = vrot.slane %v5780, 6
        %v5901 = vrot.slane %v5781, 2
        %v5902 = vrot.slane %v5781, 4
        %v5903 = vrot.slane %v5781, 6
        %v5904 = vrot.slane %v5782, 2
        %v5905 = vrot.slane %v5782, 4
        %v5906 = vrot.slane %v5782, 6
        %v5907 = vrot.slane %v5783, 2
        %v5908 = vrot.slane %v5783, 4
        %v5909 = vrot.slane %v5783, 6
        %v5910 = vrot.slane %v5784, 2
        %v5911 = vrot.slane %v5784, 4
        %v5912 = vrot.slane %v5784, 6
        %vm6009 = vcmask 254976
        %v6010 = vsel %vm6009, %v5753, -inf
        %v6011 = vrot.slane %v6010, 4
        %v6012 = vmax.f32 %v6010, %v6011
        %v6013 = vrot.slane %v6012, 2
        %v6014 = vmax.f32 %v6012, %v6013
        %v6015 = vrot.slane %v6014, 1
        %v6016 = vmax.f32 %v6014, %v6015
        %v6017 = vsel %vm6009, %v5817, -inf
        %v6018 = vrot.slane %v6017, 4
        %v6019 = vmax.f32 %v6017, %v6018
        %v6020 = vrot.slane %v6019, 2
        %v6021 = vmax.f32 %v6019, %v6020
        %v6022 = vrot.slane %v6021, 1
        %v6023 = vmax.f32 %v6021, %v6022
        %v6024 = vsel %vm6009, %v5818, -inf
        %v6025 = vrot.slane %v6024, 4
        %v6026 = vmax.f32 %v6024, %v6025
        %v6027 = vrot.slane %v6026, 2
        %v6028 = vmax.f32 %v6026, %v6027
        %v6029 = vrot.slane %v6028, 1
        %v6030 = vmax.f32 %v6028, %v6029
        %v6031 = vsel %vm6009, %v5819, -inf
        %v6032 = vrot.slane %v6031, 4
        %v6033 = vmax.f32 %v6031, %v6032
        %v6034 = vrot.slane %v6033, 2
        %v6035 = vmax.f32 %v6033, %v6034
        %v6036 = vrot.slane %v6035, 1
        %v6037 = vmax.f32 %v6035, %v6036
        %v6038 = vsel %vm6009, %v5754, -inf
        %v6039 = vrot.slane %v6038, 4
        %v6040 = vmax.f32 %v6038, %v6039
        %v6041 = vrot.slane %v6040, 2
        %v6042 = vmax.f32 %v6040, %v6041
        %v6043 = vrot.slane %v6042, 1
        %v6044 = vmax.f32 %v6042, %v6043
        %v6045 = vsel %vm6009, %v5820, -inf
        %v6046 = vrot.slane %v6045, 4
        %v6047 = vmax.f32 %v6045, %v6046
        %v6048 = vrot.slane %v6047, 2
        %v6049 = vmax.f32 %v6047, %v6048
        %v6050 = vrot.slane %v6049, 1
        %v6051 = vmax.f32 %v6049, %v6050
        %v6052 = vsel %vm6009, %v5821, -inf
        %v6053 = vrot.slane %v6052, 4
        %v6054 = vmax.f32 %v6052, %v6053
        %v6055 = vrot.slane %v6054, 2
        %v6056 = vmax.f32 %v6054, %v6055
        %v6057 = vrot.slane %v6056, 1
        %v6058 = vmax.f32 %v6056, %v6057
        %v6059 = vsel %vm6009, %v5822, -inf
        %v6060 = vrot.slane %v6059, 4
        %v6061 = vmax.f32 %v6059, %v6060
        %v6062 = vrot.slane %v6061, 2
        %v6063 = vmax.f32 %v6061, %v6062
        %v6064 = vrot.slane %v6063, 1
        %v6065 = vmax.f32 %v6063, %v6064
        %v6066 = vsel %vm6009, %v5755, -inf
        %v6067 = vrot.slane %v6066, 4
        %v6068 = vmax.f32 %v6066, %v6067
        %v6069 = vrot.slane %v6068, 2
        %v6070 = vmax.f32 %v6068, %v6069
        %v6071 = vrot.slane %v6070, 1
        %v6072 = vmax.f32 %v6070, %v6071
        %v6073 = vsel %vm6009, %v5823, -inf
        %v6074 = vrot.slane %v6073, 4
        %v6075 = vmax.f32 %v6073, %v6074
        %v6076 = vrot.slane %v6075, 2
        %v6077 = vmax.f32 %v6075, %v6076
        %v6078 = vrot.slane %v6077, 1
        %v6079 = vmax.f32 %v6077, %v6078
        %v6080 = vsel %vm6009, %v5824, -inf
        %v6081 = vrot.slane %v6080, 4
        %v6082 = vmax.f32 %v6080, %v6081
        %v6083 = vrot.slane %v6082, 2
        %v6084 = vmax.f32 %v6082, %v6083
        %v6085 = vrot.slane %v6084, 1
        %v6086 = vmax.f32 %v6084, %v6085
        %v6087 = vsel %vm6009, %v5825, -inf
        %v6088 = vrot.slane %v6087, 4
        %v6089 = vmax.f32 %v6087, %v6088
        %v6090 = vrot.slane %v6089, 2
        %v6091 = vmax.f32 %v6089, %v6090
        %v6092 = vrot.slane %v6091, 1
        %v6093 = vmax.f32 %v6091, %v6092
        %v6094 = vsel %vm6009, %v5756, -inf
        %v6095 = vrot.slane %v6094, 4
        %v6096 = vmax.f32 %v6094, %v6095
        %v6097 = vrot.slane %v6096, 2
        %v6098 = vmax.f32 %v6096, %v6097
        %v6099 = vrot.slane %v6098, 1
        %v6100 = vmax.f32 %v6098, %v6099
        %v6101 = vsel %vm6009, %v5826, -inf
        %v6102 = vrot.slane %v6101, 4
        %v6103 = vmax.f32 %v6101, %v6102
        %v6104 = vrot.slane %v6103, 2
        %v6105 = vmax.f32 %v6103, %v6104
        %v6106 = vrot.slane %v6105, 1
        %v6107 = vmax.f32 %v6105, %v6106
        %v6108 = vsel %vm6009, %v5827, -inf
        %v6109 = vrot.slane %v6108, 4
        %v6110 = vmax.f32 %v6108, %v6109
        %v6111 = vrot.slane %v6110, 2
        %v6112 = vmax.f32 %v6110, %v6111
        %v6113 = vrot.slane %v6112, 1
        %v6114 = vmax.f32 %v6112, %v6113
        %v6115 = vsel %vm6009, %v5828, -inf
        %v6116 = vrot.slane %v6115, 4
        %v6117 = vmax.f32 %v6115, %v6116
        %v6118 = vrot.slane %v6117, 2
        %v6119 = vmax.f32 %v6117, %v6118
        %v6120 = vrot.slane %v6119, 1
        %v6121 = vmax.f32 %v6119, %v6120
        %v6122 = vsel %vm6009, %v5757, -inf
        %v6123 = vrot.slane %v6122, 4
        %v6124 = vmax.f32 %v6122, %v6123
        %v6125 = vrot.slane %v6124, 2
        %v6126 = vmax.f32 %v6124, %v6125
        %v6127 = vrot.slane %v6126, 1
        %v6128 = vmax.f32 %v6126, %v6127
        %v6129 = vsel %vm6009, %v5829, -inf
        %v6130 = vrot.slane %v6129, 4
        %v6131 = vmax.f32 %v6129, %v6130
        %v6132 = vrot.slane %v6131, 2
        %v6133 = vmax.f32 %v6131, %v6132
        %v6134 = vrot.slane %v6133, 1
        %v6135 = vmax.f32 %v6133, %v6134
        %v6136 = vsel %vm6009, %v5830, -inf
        %v6137 = vrot.slane %v6136, 4
        %v6138 = vmax.f32 %v6136, %v6137
        %v6139 = vrot.slane %v6138, 2
        %v6140 = vmax.f32 %v6138, %v6139
        %v6141 = vrot.slane %v6140, 1
        %v6142 = vmax.f32 %v6140, %v6141
        %v6143 = vsel %vm6009, %v5831, -inf
        %v6144 = vrot.slane %v6143, 4
        %v6145 = vmax.f32 %v6143, %v6144
        %v6146 = vrot.slane %v6145, 2
        %v6147 = vmax.f32 %v6145, %v6146
        %v6148 = vrot.slane %v6147, 1
        %v6149 = vmax.f32 %v6147, %v6148
        %v6150 = vsel %vm6009, %v5758, -inf
        %v6151 = vrot.slane %v6150, 4
        %v6152 = vmax.f32 %v6150, %v6151
        %v6153 = vrot.slane %v6152, 2
        %v6154 = vmax.f32 %v6152, %v6153
        %v6155 = vrot.slane %v6154, 1
        %v6156 = vmax.f32 %v6154, %v6155
        %v6157 = vsel %vm6009, %v5832, -inf
        %v6158 = vrot.slane %v6157, 4
        %v6159 = vmax.f32 %v6157, %v6158
        %v6160 = vrot.slane %v6159, 2
        %v6161 = vmax.f32 %v6159, %v6160
        %v6162 = vrot.slane %v6161, 1
        %v6163 = vmax.f32 %v6161, %v6162
        %v6164 = vsel %vm6009, %v5833, -inf
        %v6165 = vrot.slane %v6164, 4
        %v6166 = vmax.f32 %v6164, %v6165
        %v6167 = vrot.slane %v6166, 2
        %v6168 = vmax.f32 %v6166, %v6167
        %v6169 = vrot.slane %v6168, 1
        %v6170 = vmax.f32 %v6168, %v6169
        %v6171 = vsel %vm6009, %v5834, -inf
        %v6172 = vrot.slane %v6171, 4
        %v6173 = vmax.f32 %v6171, %v6172
        %v6174 = vrot.slane %v6173, 2
        %v6175 = vmax.f32 %v6173, %v6174
        %v6176 = vrot.slane %v6175, 1
        %v6177 = vmax.f32 %v6175, %v6176
        %v6178 = vsel %vm6009, %v5759, -inf
        %v6179 = vrot.slane %v6178, 4
        %v6180 = vmax.f32 %v6178, %v6179
        %v6181 = vrot.slane %v6180, 2
        %v6182 = vmax.f32 %v6180, %v6181
        %v6183 = vrot.slane %v6182, 1
        %v6184 = vmax.f32 %v6182, %v6183
        %v6185 = vsel %vm6009, %v5835, -inf
        %v6186 = vrot.slane %v6185, 4
        %v6187 = vmax.f32 %v6185, %v6186
        %v6188 = vrot.slane %v6187, 2
        %v6189 = vmax.f32 %v6187, %v6188
        %v6190 = vrot.slane %v6189, 1
        %v6191 = vmax.f32 %v6189, %v6190
        %v6192 = vsel %vm6009, %v5836, -inf
        %v6193 = vrot.slane %v6192, 4
        %v6194 = vmax.f32 %v6192, %v6193
        %v6195 = vrot.slane %v6194, 2
        %v6196 = vmax.f32 %v6194, %v6195
        %v6197 = vrot.slane %v6196, 1
        %v6198 = vmax.f32 %v6196, %v6197
        %v6199 = vsel %vm6009, %v5837, -inf
        %v6200 = vrot.slane %v6199, 4
        %v6201 = vmax.f32 %v6199, %v6200
        %v6202 = vrot.slane %v6201, 2
        %v6203 = vmax.f32 %v6201, %v6202
        %v6204 = vrot.slane %v6203, 1
        %v6205 = vmax.f32 %v6203, %v6204
        %v6206 = vsel %vm6009, %v5760, -inf
        %v6207 = vrot.slane %v6206, 4
        %v6208 = vmax.f32 %v6206, %v6207
        %v6209 = vrot.slane %v6208, 2
        %v6210 = vmax.f32 %v6208, %v6209
        %v6211 = vrot.slane %v6210, 1
        %v6212 = vmax.f32 %v6210, %v6211
        %v6213 = vsel %vm6009, %v5838, -inf
        %v6214 = vrot.slane %v6213, 4
        %v6215 = vmax.f32 %v6213, %v6214
        %v6216 = vrot.slane %v6215, 2
        %v6217 = vmax.f32 %v6215, %v6216
        %v6218 = vrot.slane %v6217, 1
        %v6219 = vmax.f32 %v6217, %v6218
        %v6220 = vsel %vm6009, %v5839, -inf
        %v6221 = vrot.slane %v6220, 4
        %v6222 = vmax.f32 %v6220, %v6221
        %v6223 = vrot.slane %v6222, 2
        %v6224 = vmax.f32 %v6222, %v6223
        %v6225 = vrot.slane %v6224, 1
        %v6226 = vmax.f32 %v6224, %v6225
        %v6227 = vsel %vm6009, %v5840, -inf
        %v6228 = vrot.slane %v6227, 4
        %v6229 = vmax.f32 %v6227, %v6228
        %v6230 = vrot.slane %v6229, 2
        %v6231 = vmax.f32 %v6229, %v6230
        %v6232 = vrot.slane %v6231, 1
        %v6233 = vmax.f32 %v6231, %v6232
        %v6234 = vsel %vm6009, %v5761, -inf
        %v6235 = vrot.slane %v6234, 4
        %v6236 = vmax.f32 %v6234, %v6235
        %v6237 = vrot.slane %v6236, 2
        %v6238 = vmax.f32 %v6236, %v6237
        %v6239 = vrot.slane %v6238, 1
        %v6240 = vmax.f32 %v6238, %v6239
        %v6241 = vsel %vm6009, %v5841, -inf
        %v6242 = vrot.slane %v6241, 4
        %v6243 = vmax.f32 %v6241, %v6242
        %v6244 = vrot.slane %v6243, 2
        %v6245 = vmax.f32 %v6243, %v6244
        %v6246 = vrot.slane %v6245, 1
        %v6247 = vmax.f32 %v6245, %v6246
        %v6248 = vsel %vm6009, %v5842, -inf
        %v6249 = vrot.slane %v6248, 4
        %v6250 = vmax.f32 %v6248, %v6249
        %v6251 = vrot.slane %v6250, 2
        %v6252 = vmax.f32 %v6250, %v6251
        %v6253 = vrot.slane %v6252, 1
        %v6254 = vmax.f32 %v6252, %v6253
        %v6255 = vsel %vm6009, %v5843, -inf
        %v6256 = vrot.slane %v6255, 4
        %v6257 = vmax.f32 %v6255, %v6256
        %v6258 = vrot.slane %v6257, 2
        %v6259 = vmax.f32 %v6257, %v6258
        %v6260 = vrot.slane %v6259, 1
        %v6261 = vmax.f32 %v6259, %v6260
        %v6262 = vsel %vm6009, %v5762, -inf
        %v6263 = vrot.slane %v6262, 4
        %v6264 = vmax.f32 %v6262, %v6263
        %v6265 = vrot.slane %v6264, 2
        %v6266 = vmax.f32 %v6264, %v6265
        %v6267 = vrot.slane %v6266, 1
        %v6268 = vmax.f32 %v6266, %v6267
        %v6269 = vsel %vm6009, %v5844, -inf
        %v6270 = vrot.slane %v6269, 4
        %v6271 = vmax.f32 %v6269, %v6270
        %v6272 = vrot.slane %v6271, 2
        %v6273 = vmax.f32 %v6271, %v6272
        %v6274 = vrot.slane %v6273, 1
        %v6275 = vmax.f32 %v6273, %v6274
        %v6276 = vsel %vm6009, %v5845, -inf
        %v6277 = vrot.slane %v6276, 4
        %v6278 = vmax.f32 %v6276, %v6277
        %v6279 = vrot.slane %v6278, 2
        %v6280 = vmax.f32 %v6278, %v6279
        %v6281 = vrot.slane %v6280, 1
        %v6282 = vmax.f32 %v6280, %v6281
        %v6283 = vsel %vm6009, %v5846, -inf
        %v6284 = vrot.slane %v6283, 4
        %v6285 = vmax.f32 %v6283, %v6284
        %v6286 = vrot.slane %v6285, 2
        %v6287 = vmax.f32 %v6285, %v6286
        %v6288 = vrot.slane %v6287, 1
        %v6289 = vmax.f32 %v6287, %v6288
        %v6290 = vsel %vm6009, %v5763, -inf
        %v6291 = vrot.slane %v6290, 4
        %v6292 = vmax.f32 %v6290, %v6291
        %v6293 = vrot.slane %v6292, 2
        %v6294 = vmax.f32 %v6292, %v6293
        %v6295 = vrot.slane %v6294, 1
        %v6296 = vmax.f32 %v6294, %v6295
        %v6297 = vsel %vm6009, %v5847, -inf
        %v6298 = vrot.slane %v6297, 4
        %v6299 = vmax.f32 %v6297, %v6298
        %v6300 = vrot.slane %v6299, 2
        %v6301 = vmax.f32 %v6299, %v6300
        %v6302 = vrot.slane %v6301, 1
        %v6303 = vmax.f32 %v6301, %v6302
        %v6304 = vsel %vm6009, %v5848, -inf
        %v6305 = vrot.slane %v6304, 4
        %v6306 = vmax.f32 %v6304, %v6305
        %v6307 = vrot.slane %v6306, 2
        %v6308 = vmax.f32 %v6306, %v6307
        %v6309 = vrot.slane %v6308, 1
        %v6310 = vmax.f32 %v6308, %v6309
        %v6311 = vsel %vm6009, %v5849, -inf
        %v6312 = vrot.slane %v6311, 4
        %v6313 = vmax.f32 %v6311, %v6312
        %v6314 = vrot.slane %v6313, 2
        %v6315 = vmax.f32 %v6313, %v6314
        %v6316 = vrot.slane %v6315, 1
        %v6317 = vmax.f32 %v6315, %v6316
        %v6318 = vsel %vm6009, %v5764, -inf
        %v6319 = vrot.slane %v6318, 4
        %v6320 = vmax.f32 %v6318, %v6319
        %v6321 = vrot.slane %v6320, 2
        %v6322 = vmax.f32 %v6320, %v6321
        %v6323 = vrot.slane %v6322, 1
        %v6324 = vmax.f32 %v6322, %v6323
        %v6325 = vsel %vm6009, %v5850, -inf
        %v6326 = vrot.slane %v6325, 4
        %v6327 = vmax.f32 %v6325, %v6326
        %v6328 = vrot.slane %v6327, 2
        %v6329 = vmax.f32 %v6327, %v6328
        %v6330 = vrot.slane %v6329, 1
        %v6331 = vmax.f32 %v6329, %v6330
        %v6332 = vsel %vm6009, %v5851, -inf
        %v6333 = vrot.slane %v6332, 4
        %v6334 = vmax.f32 %v6332, %v6333
        %v6335 = vrot.slane %v6334, 2
        %v6336 = vmax.f32 %v6334, %v6335
        %v6337 = vrot.slane %v6336, 1
        %v6338 = vmax.f32 %v6336, %v6337
        %v6339 = vsel %vm6009, %v5852, -inf
        %v6340 = vrot.slane %v6339, 4
        %v6341 = vmax.f32 %v6339, %v6340
        %v6342 = vrot.slane %v6341, 2
        %v6343 = vmax.f32 %v6341, %v6342
        %v6344 = vrot.slane %v6343, 1
        %v6345 = vmax.f32 %v6343, %v6344
        %v6346 = vsel %vm6009, %v5765, -inf
        %v6347 = vrot.slane %v6346, 4
        %v6348 = vmax.f32 %v6346, %v6347
        %v6349 = vrot.slane %v6348, 2
        %v6350 = vmax.f32 %v6348, %v6349
        %v6351 = vrot.slane %v6350, 1
        %v6352 = vmax.f32 %v6350, %v6351
        %v6353 = vsel %vm6009, %v5853, -inf
        %v6354 = vrot.slane %v6353, 4
        %v6355 = vmax.f32 %v6353, %v6354
        %v6356 = vrot.slane %v6355, 2
        %v6357 = vmax.f32 %v6355, %v6356
        %v6358 = vrot.slane %v6357, 1
        %v6359 = vmax.f32 %v6357, %v6358
        %v6360 = vsel %vm6009, %v5854, -inf
        %v6361 = vrot.slane %v6360, 4
        %v6362 = vmax.f32 %v6360, %v6361
        %v6363 = vrot.slane %v6362, 2
        %v6364 = vmax.f32 %v6362, %v6363
        %v6365 = vrot.slane %v6364, 1
        %v6366 = vmax.f32 %v6364, %v6365
        %v6367 = vsel %vm6009, %v5855, -inf
        %v6368 = vrot.slane %v6367, 4
        %v6369 = vmax.f32 %v6367, %v6368
        %v6370 = vrot.slane %v6369, 2
        %v6371 = vmax.f32 %v6369, %v6370
        %v6372 = vrot.slane %v6371, 1
        %v6373 = vmax.f32 %v6371, %v6372
        %v6374 = vsel %vm6009, %v5766, -inf
        %v6375 = vrot.slane %v6374, 4
        %v6376 = vmax.f32 %v6374, %v6375
        %v6377 = vrot.slane %v6376, 2
        %v6378 = vmax.f32 %v6376, %v6377
        %v6379 = vrot.slane %v6378, 1
        %v6380 = vmax.f32 %v6378, %v6379
        %v6381 = vsel %vm6009, %v5856, -inf
        %v6382 = vrot.slane %v6381, 4
        %v6383 = vmax.f32 %v6381, %v6382
        %v6384 = vrot.slane %v6383, 2
        %v6385 = vmax.f32 %v6383, %v6384
        %v6386 = vrot.slane %v6385, 1
        %v6387 = vmax.f32 %v6385, %v6386
        %v6388 = vsel %vm6009, %v5857, -inf
        %v6389 = vrot.slane %v6388, 4
        %v6390 = vmax.f32 %v6388, %v6389
        %v6391 = vrot.slane %v6390, 2
        %v6392 = vmax.f32 %v6390, %v6391
        %v6393 = vrot.slane %v6392, 1
        %v6394 = vmax.f32 %v6392, %v6393
        %v6395 = vsel %vm6009, %v5858, -inf
        %v6396 = vrot.slane %v6395, 4
        %v6397 = vmax.f32 %v6395, %v6396
        %v6398 = vrot.slane %v6397, 2
        %v6399 = vmax.f32 %v6397, %v6398
        %v6400 = vrot.slane %v6399, 1
        %v6401 = vmax.f32 %v6399, %v6400
        %v6402 = vsel %vm6009, %v5767, -inf
        %v6403 = vrot.slane %v6402, 4
        %v6404 = vmax.f32 %v6402, %v6403
        %v6405 = vrot.slane %v6404, 2
        %v6406 = vmax.f32 %v6404, %v6405
        %v6407 = vrot.slane %v6406, 1
        %v6408 = vmax.f32 %v6406, %v6407
        %v6409 = vsel %vm6009, %v5859, -inf
        %v6410 = vrot.slane %v6409, 4
        %v6411 = vmax.f32 %v6409, %v6410
        %v6412 = vrot.slane %v6411, 2
        %v6413 = vmax.f32 %v6411, %v6412
        %v6414 = vrot.slane %v6413, 1
        %v6415 = vmax.f32 %v6413, %v6414
        %v6416 = vsel %vm6009, %v5860, -inf
        %v6417 = vrot.slane %v6416, 4
        %v6418 = vmax.f32 %v6416, %v6417
        %v6419 = vrot.slane %v6418, 2
        %v6420 = vmax.f32 %v6418, %v6419
        %v6421 = vrot.slane %v6420, 1
        %v6422 = vmax.f32 %v6420, %v6421
        %v6423 = vsel %vm6009, %v5861, -inf
        %v6424 = vrot.slane %v6423, 4
        %v6425 = vmax.f32 %v6423, %v6424
        %v6426 = vrot.slane %v6425, 2
        %v6427 = vmax.f32 %v6425, %v6426
        %v6428 = vrot.slane %v6427, 1
        %v6429 = vmax.f32 %v6427, %v6428
        %v6430 = vsel %vm6009, %v5768, -inf
        %v6431 = vrot.slane %v6430, 4
        %v6432 = vmax.f32 %v6430, %v6431
        %v6433 = vrot.slane %v6432, 2
        %v6434 = vmax.f32 %v6432, %v6433
        %v6435 = vrot.slane %v6434, 1
        %v6436 = vmax.f32 %v6434, %v6435
        %v6437 = vsel %vm6009, %v5862, -inf
        %v6438 = vrot.slane %v6437, 4
        %v6439 = vmax.f32 %v6437, %v6438
        %v6440 = vrot.slane %v6439, 2
        %v6441 = vmax.f32 %v6439, %v6440
        %v6442 = vrot.slane %v6441, 1
        %v6443 = vmax.f32 %v6441, %v6442
        %v6444 = vsel %vm6009, %v5863, -inf
        %v6445 = vrot.slane %v6444, 4
        %v6446 = vmax.f32 %v6444, %v6445
        %v6447 = vrot.slane %v6446, 2
        %v6448 = vmax.f32 %v6446, %v6447
        %v6449 = vrot.slane %v6448, 1
        %v6450 = vmax.f32 %v6448, %v6449
        %v6451 = vsel %vm6009, %v5864, -inf
        %v6452 = vrot.slane %v6451, 4
        %v6453 = vmax.f32 %v6451, %v6452
        %v6454 = vrot.slane %v6453, 2
        %v6455 = vmax.f32 %v6453, %v6454
        %v6456 = vrot.slane %v6455, 1
        %v6457 = vmax.f32 %v6455, %v6456
        %v6458 = vsel %vm6009, %v5769, -inf
        %v6459 = vrot.slane %v6458, 4
        %v6460 = vmax.f32 %v6458, %v6459
        %v6461 = vrot.slane %v6460, 2
        %v6462 = vmax.f32 %v6460, %v6461
        %v6463 = vrot.slane %v6462, 1
        %v6464 = vmax.f32 %v6462, %v6463
        %v6465 = vsel %vm6009, %v5865, -inf
        %v6466 = vrot.slane %v6465, 4
        %v6467 = vmax.f32 %v6465, %v6466
        %v6468 = vrot.slane %v6467, 2
        %v6469 = vmax.f32 %v6467, %v6468
        %v6470 = vrot.slane %v6469, 1
        %v6471 = vmax.f32 %v6469, %v6470
        %v6472 = vsel %vm6009, %v5866, -inf
        %v6473 = vrot.slane %v6472, 4
        %v6474 = vmax.f32 %v6472, %v6473
        %v6475 = vrot.slane %v6474, 2
        %v6476 = vmax.f32 %v6474, %v6475
        %v6477 = vrot.slane %v6476, 1
        %v6478 = vmax.f32 %v6476, %v6477
        %v6479 = vsel %vm6009, %v5867, -inf
        %v6480 = vrot.slane %v6479, 4
        %v6481 = vmax.f32 %v6479, %v6480
        %v6482 = vrot.slane %v6481, 2
        %v6483 = vmax.f32 %v6481, %v6482
        %v6484 = vrot.slane %v6483, 1
        %v6485 = vmax.f32 %v6483, %v6484
        %v6486 = vsel %vm6009, %v5770, -inf
        %v6487 = vrot.slane %v6486, 4
        %v6488 = vmax.f32 %v6486, %v6487
        %v6489 = vrot.slane %v6488, 2
        %v6490 = vmax.f32 %v6488, %v6489
        %v6491 = vrot.slane %v6490, 1
        %v6492 = vmax.f32 %v6490, %v6491
        %v6493 = vsel %vm6009, %v5868, -inf
        %v6494 = vrot.slane %v6493, 4
        %v6495 = vmax.f32 %v6493, %v6494
        %v6496 = vrot.slane %v6495, 2
        %v6497 = vmax.f32 %v6495, %v6496
        %v6498 = vrot.slane %v6497, 1
        %v6499 = vmax.f32 %v6497, %v6498
        %v6500 = vsel %vm6009, %v5869, -inf
        %v6501 = vrot.slane %v6500, 4
        %v6502 = vmax.f32 %v6500, %v6501
        %v6503 = vrot.slane %v6502, 2
        %v6504 = vmax.f32 %v6502, %v6503
        %v6505 = vrot.slane %v6504, 1
        %v6506 = vmax.f32 %v6504, %v6505
        %v6507 = vsel %vm6009, %v5870, -inf
        %v6508 = vrot.slane %v6507, 4
        %v6509 = vmax.f32 %v6507, %v6508
        %v6510 = vrot.slane %v6509, 2
        %v6511 = vmax.f32 %v6509, %v6510
        %v6512 = vrot.slane %v6511, 1
        %v6513 = vmax.f32 %v6511, %v6512
        %v6514 = vsel %vm6009, %v5771, -inf
        %v6515 = vrot.slane %v6514, 4
        %v6516 = vmax.f32 %v6514, %v6515
        %v6517 = vrot.slane %v6516, 2
        %v6518 = vmax.f32 %v6516, %v6517
        %v6519 = vrot.slane %v6518, 1
        %v6520 = vmax.f32 %v6518, %v6519
        %v6521 = vsel %vm6009, %v5871, -inf
        %v6522 = vrot.slane %v6521, 4
        %v6523 = vmax.f32 %v6521, %v6522
        %v6524 = vrot.slane %v6523, 2
        %v6525 = vmax.f32 %v6523, %v6524
        %v6526 = vrot.slane %v6525, 1
        %v6527 = vmax.f32 %v6525, %v6526
        %v6528 = vsel %vm6009, %v5872, -inf
        %v6529 = vrot.slane %v6528, 4
        %v6530 = vmax.f32 %v6528, %v6529
        %v6531 = vrot.slane %v6530, 2
        %v6532 = vmax.f32 %v6530, %v6531
        %v6533 = vrot.slane %v6532, 1
        %v6534 = vmax.f32 %v6532, %v6533
        %v6535 = vsel %vm6009, %v5873, -inf
        %v6536 = vrot.slane %v6535, 4
        %v6537 = vmax.f32 %v6535, %v6536
        %v6538 = vrot.slane %v6537, 2
        %v6539 = vmax.f32 %v6537, %v6538
        %v6540 = vrot.slane %v6539, 1
        %v6541 = vmax.f32 %v6539, %v6540
        %v6542 = vsel %vm6009, %v5772, -inf
        %v6543 = vrot.slane %v6542, 4
        %v6544 = vmax.f32 %v6542, %v6543
        %v6545 = vrot.slane %v6544, 2
        %v6546 = vmax.f32 %v6544, %v6545
        %v6547 = vrot.slane %v6546, 1
        %v6548 = vmax.f32 %v6546, %v6547
        %v6549 = vsel %vm6009, %v5874, -inf
        %v6550 = vrot.slane %v6549, 4
        %v6551 = vmax.f32 %v6549, %v6550
        %v6552 = vrot.slane %v6551, 2
        %v6553 = vmax.f32 %v6551, %v6552
        %v6554 = vrot.slane %v6553, 1
        %v6555 = vmax.f32 %v6553, %v6554
        %v6556 = vsel %vm6009, %v5875, -inf
        %v6557 = vrot.slane %v6556, 4
        %v6558 = vmax.f32 %v6556, %v6557
        %v6559 = vrot.slane %v6558, 2
        %v6560 = vmax.f32 %v6558, %v6559
        %v6561 = vrot.slane %v6560, 1
        %v6562 = vmax.f32 %v6560, %v6561
        %v6563 = vsel %vm6009, %v5876, -inf
        %v6564 = vrot.slane %v6563, 4
        %v6565 = vmax.f32 %v6563, %v6564
        %v6566 = vrot.slane %v6565, 2
        %v6567 = vmax.f32 %v6565, %v6566
        %v6568 = vrot.slane %v6567, 1
        %v6569 = vmax.f32 %v6567, %v6568
        %v6570 = vsel %vm6009, %v5773, -inf
        %v6571 = vrot.slane %v6570, 4
        %v6572 = vmax.f32 %v6570, %v6571
        %v6573 = vrot.slane %v6572, 2
        %v6574 = vmax.f32 %v6572, %v6573
        %v6575 = vrot.slane %v6574, 1
        %v6576 = vmax.f32 %v6574, %v6575
        %v6577 = vsel %vm6009, %v5877, -inf
        %v6578 = vrot.slane %v6577, 4
        %v6579 = vmax.f32 %v6577, %v6578
        %v6580 = vrot.slane %v6579, 2
        %v6581 = vmax.f32 %v6579, %v6580
        %v6582 = vrot.slane %v6581, 1
        %v6583 = vmax.f32 %v6581, %v6582
        %v6584 = vsel %vm6009, %v5878, -inf
        %v6585 = vrot.slane %v6584, 4
        %v6586 = vmax.f32 %v6584, %v6585
        %v6587 = vrot.slane %v6586, 2
        %v6588 = vmax.f32 %v6586, %v6587
        %v6589 = vrot.slane %v6588, 1
        %v6590 = vmax.f32 %v6588, %v6589
        %v6591 = vsel %vm6009, %v5879, -inf
        %v6592 = vrot.slane %v6591, 4
        %v6593 = vmax.f32 %v6591, %v6592
        %v6594 = vrot.slane %v6593, 2
        %v6595 = vmax.f32 %v6593, %v6594
        %v6596 = vrot.slane %v6595, 1
        %v6597 = vmax.f32 %v6595, %v6596
        %v6598 = vsel %vm6009, %v5774, -inf
        %v6599 = vrot.slane %v6598, 4
        %v6600 = vmax.f32 %v6598, %v6599
        %v6601 = vrot.slane %v6600, 2
        %v6602 = vmax.f32 %v6600, %v6601
        %v6603 = vrot.slane %v6602, 1
        %v6604 = vmax.f32 %v6602, %v6603
        %v6605 = vsel %vm6009, %v5880, -inf
        %v6606 = vrot.slane %v6605, 4
        %v6607 = vmax.f32 %v6605, %v6606
        %v6608 = vrot.slane %v6607, 2
        %v6609 = vmax.f32 %v6607, %v6608
        %v6610 = vrot.slane %v6609, 1
        %v6611 = vmax.f32 %v6609, %v6610
        %v6612 = vsel %vm6009, %v5881, -inf
        %v6613 = vrot.slane %v6612, 4
        %v6614 = vmax.f32 %v6612, %v6613
        %v6615 = vrot.slane %v6614, 2
        %v6616 = vmax.f32 %v6614, %v6615
        %v6617 = vrot.slane %v6616, 1
        %v6618 = vmax.f32 %v6616, %v6617
        %v6619 = vsel %vm6009, %v5882, -inf
        %v6620 = vrot.slane %v6619, 4
        %v6621 = vmax.f32 %v6619, %v6620
        %v6622 = vrot.slane %v6621, 2
        %v6623 = vmax.f32 %v6621, %v6622
        %v6624 = vrot.slane %v6623, 1
        %v6625 = vmax.f32 %v6623, %v6624
        %v6626 = vsel %vm6009, %v5775, -inf
        %v6627 = vrot.slane %v6626, 4
        %v6628 = vmax.f32 %v6626, %v6627
        %v6629 = vrot.slane %v6628, 2
        %v6630 = vmax.f32 %v6628, %v6629
        %v6631 = vrot.slane %v6630, 1
        %v6632 = vmax.f32 %v6630, %v6631
        %v6633 = vsel %vm6009, %v5883, -inf
        %v6634 = vrot.slane %v6633, 4
        %v6635 = vmax.f32 %v6633, %v6634
        %v6636 = vrot.slane %v6635, 2
        %v6637 = vmax.f32 %v6635, %v6636
        %v6638 = vrot.slane %v6637, 1
        %v6639 = vmax.f32 %v6637, %v6638
        %v6640 = vsel %vm6009, %v5884, -inf
        %v6641 = vrot.slane %v6640, 4
        %v6642 = vmax.f32 %v6640, %v6641
        %v6643 = vrot.slane %v6642, 2
        %v6644 = vmax.f32 %v6642, %v6643
        %v6645 = vrot.slane %v6644, 1
        %v6646 = vmax.f32 %v6644, %v6645
        %v6647 = vsel %vm6009, %v5885, -inf
        %v6648 = vrot.slane %v6647, 4
        %v6649 = vmax.f32 %v6647, %v6648
        %v6650 = vrot.slane %v6649, 2
        %v6651 = vmax.f32 %v6649, %v6650
        %v6652 = vrot.slane %v6651, 1
        %v6653 = vmax.f32 %v6651, %v6652
        %v6654 = vsel %vm6009, %v5776, -inf
        %v6655 = vrot.slane %v6654, 4
        %v6656 = vmax.f32 %v6654, %v6655
        %v6657 = vrot.slane %v6656, 2
        %v6658 = vmax.f32 %v6656, %v6657
        %v6659 = vrot.slane %v6658, 1
        %v6660 = vmax.f32 %v6658, %v6659
        %v6661 = vsel %vm6009, %v5886, -inf
        %v6662 = vrot.slane %v6661, 4
        %v6663 = vmax.f32 %v6661, %v6662
        %v6664 = vrot.slane %v6663, 2
        %v6665 = vmax.f32 %v6663, %v6664
        %v6666 = vrot.slane %v6665, 1
        %v6667 = vmax.f32 %v6665, %v6666
        %v6668 = vsel %vm6009, %v5887, -inf
        %v6669 = vrot.slane %v6668, 4
        %v6670 = vmax.f32 %v6668, %v6669
        %v6671 = vrot.slane %v6670, 2
        %v6672 = vmax.f32 %v6670, %v6671
        %v6673 = vrot.slane %v6672, 1
        %v6674 = vmax.f32 %v6672, %v6673
        %v6675 = vsel %vm6009, %v5888, -inf
        %v6676 = vrot.slane %v6675, 4
        %v6677 = vmax.f32 %v6675, %v6676
        %v6678 = vrot.slane %v6677, 2
        %v6679 = vmax.f32 %v6677, %v6678
        %v6680 = vrot.slane %v6679, 1
        %v6681 = vmax.f32 %v6679, %v6680
        %v6682 = vsel %vm6009, %v5777, -inf
        %v6683 = vrot.slane %v6682, 4
        %v6684 = vmax.f32 %v6682, %v6683
        %v6685 = vrot.slane %v6684, 2
        %v6686 = vmax.f32 %v6684, %v6685
        %v6687 = vrot.slane %v6686, 1
        %v6688 = vmax.f32 %v6686, %v6687
        %v6689 = vsel %vm6009, %v5889, -inf
        %v6690 = vrot.slane %v6689, 4
        %v6691 = vmax.f32 %v6689, %v6690
        %v6692 = vrot.slane %v6691, 2
        %v6693 = vmax.f32 %v6691, %v6692
        %v6694 = vrot.slane %v6693, 1
        %v6695 = vmax.f32 %v6693, %v6694
        %v6696 = vsel %vm6009, %v5890, -inf
        %v6697 = vrot.slane %v6696, 4
        %v6698 = vmax.f32 %v6696, %v6697
        %v6699 = vrot.slane %v6698, 2
        %v6700 = vmax.f32 %v6698, %v6699
        %v6701 = vrot.slane %v6700, 1
        %v6702 = vmax.f32 %v6700, %v6701
        %v6703 = vsel %vm6009, %v5891, -inf
        %v6704 = vrot.slane %v6703, 4
        %v6705 = vmax.f32 %v6703, %v6704
        %v6706 = vrot.slane %v6705, 2
        %v6707 = vmax.f32 %v6705, %v6706
        %v6708 = vrot.slane %v6707, 1
        %v6709 = vmax.f32 %v6707, %v6708
        %v6710 = vsel %vm6009, %v5778, -inf
        %v6711 = vrot.slane %v6710, 4
        %v6712 = vmax.f32 %v6710, %v6711
        %v6713 = vrot.slane %v6712, 2
        %v6714 = vmax.f32 %v6712, %v6713
        %v6715 = vrot.slane %v6714, 1
        %v6716 = vmax.f32 %v6714, %v6715
        %v6717 = vsel %vm6009, %v5892, -inf
        %v6718 = vrot.slane %v6717, 4
        %v6719 = vmax.f32 %v6717, %v6718
        %v6720 = vrot.slane %v6719, 2
        %v6721 = vmax.f32 %v6719, %v6720
        %v6722 = vrot.slane %v6721, 1
        %v6723 = vmax.f32 %v6721, %v6722
        %v6724 = vsel %vm6009, %v5893, -inf
        %v6725 = vrot.slane %v6724, 4
        %v6726 = vmax.f32 %v6724, %v6725
        %v6727 = vrot.slane %v6726, 2
        %v6728 = vmax.f32 %v6726, %v6727
        %v6729 = vrot.slane %v6728, 1
        %v6730 = vmax.f32 %v6728, %v6729
        %v6731 = vsel %vm6009, %v5894, -inf
        %v6732 = vrot.slane %v6731, 4
        %v6733 = vmax.f32 %v6731, %v6732
        %v6734 = vrot.slane %v6733, 2
        %v6735 = vmax.f32 %v6733, %v6734
        %v6736 = vrot.slane %v6735, 1
        %v6737 = vmax.f32 %v6735, %v6736
        %v6738 = vsel %vm6009, %v5779, -inf
        %v6739 = vrot.slane %v6738, 4
        %v6740 = vmax.f32 %v6738, %v6739
        %v6741 = vrot.slane %v6740, 2
        %v6742 = vmax.f32 %v6740, %v6741
        %v6743 = vrot.slane %v6742, 1
        %v6744 = vmax.f32 %v6742, %v6743
        %v6745 = vsel %vm6009, %v5895, -inf
        %v6746 = vrot.slane %v6745, 4
        %v6747 = vmax.f32 %v6745, %v6746
        %v6748 = vrot.slane %v6747, 2
        %v6749 = vmax.f32 %v6747, %v6748
        %v6750 = vrot.slane %v6749, 1
        %v6751 = vmax.f32 %v6749, %v6750
        %v6752 = vsel %vm6009, %v5896, -inf
        %v6753 = vrot.slane %v6752, 4
        %v6754 = vmax.f32 %v6752, %v6753
        %v6755 = vrot.slane %v6754, 2
        %v6756 = vmax.f32 %v6754, %v6755
        %v6757 = vrot.slane %v6756, 1
        %v6758 = vmax.f32 %v6756, %v6757
        %v6759 = vsel %vm6009, %v5897, -inf
        %v6760 = vrot.slane %v6759, 4
        %v6761 = vmax.f32 %v6759, %v6760
        %v6762 = vrot.slane %v6761, 2
        %v6763 = vmax.f32 %v6761, %v6762
        %v6764 = vrot.slane %v6763, 1
        %v6765 = vmax.f32 %v6763, %v6764
        %v6766 = vsel %vm6009, %v5780, -inf
        %v6767 = vrot.slane %v6766, 4
        %v6768 = vmax.f32 %v6766, %v6767
        %v6769 = vrot.slane %v6768, 2
        %v6770 = vmax.f32 %v6768, %v6769
        %v6771 = vrot.slane %v6770, 1
        %v6772 = vmax.f32 %v6770, %v6771
        %v6773 = vsel %vm6009, %v5898, -inf
        %v6774 = vrot.slane %v6773, 4
        %v6775 = vmax.f32 %v6773, %v6774
        %v6776 = vrot.slane %v6775, 2
        %v6777 = vmax.f32 %v6775, %v6776
        %v6778 = vrot.slane %v6777, 1
        %v6779 = vmax.f32 %v6777, %v6778
        %v6780 = vsel %vm6009, %v5899, -inf
        %v6781 = vrot.slane %v6780, 4
        %v6782 = vmax.f32 %v6780, %v6781
        %v6783 = vrot.slane %v6782, 2
        %v6784 = vmax.f32 %v6782, %v6783
        %v6785 = vrot.slane %v6784, 1
        %v6786 = vmax.f32 %v6784, %v6785
        %v6787 = vsel %vm6009, %v5900, -inf
        %v6788 = vrot.slane %v6787, 4
        %v6789 = vmax.f32 %v6787, %v6788
        %v6790 = vrot.slane %v6789, 2
        %v6791 = vmax.f32 %v6789, %v6790
        %v6792 = vrot.slane %v6791, 1
        %v6793 = vmax.f32 %v6791, %v6792
        %v6794 = vsel %vm6009, %v5781, -inf
        %v6795 = vrot.slane %v6794, 4
        %v6796 = vmax.f32 %v6794, %v6795
        %v6797 = vrot.slane %v6796, 2
        %v6798 = vmax.f32 %v6796, %v6797
        %v6799 = vrot.slane %v6798, 1
        %v6800 = vmax.f32 %v6798, %v6799
        %v6801 = vsel %vm6009, %v5901, -inf
        %v6802 = vrot.slane %v6801, 4
        %v6803 = vmax.f32 %v6801, %v6802
        %v6804 = vrot.slane %v6803, 2
        %v6805 = vmax.f32 %v6803, %v6804
        %v6806 = vrot.slane %v6805, 1
        %v6807 = vmax.f32 %v6805, %v6806
        %v6808 = vsel %vm6009, %v5902, -inf
        %v6809 = vrot.slane %v6808, 4
        %v6810 = vmax.f32 %v6808, %v6809
        %v6811 = vrot.slane %v6810, 2
        %v6812 = vmax.f32 %v6810, %v6811
        %v6813 = vrot.slane %v6812, 1
        %v6814 = vmax.f32 %v6812, %v6813
        %v6815 = vsel %vm6009, %v5903, -inf
        %v6816 = vrot.slane %v6815, 4
        %v6817 = vmax.f32 %v6815, %v6816
        %v6818 = vrot.slane %v6817, 2
        %v6819 = vmax.f32 %v6817, %v6818
        %v6820 = vrot.slane %v6819, 1
        %v6821 = vmax.f32 %v6819, %v6820
        %v6822 = vsel %vm6009, %v5782, -inf
        %v6823 = vrot.slane %v6822, 4
        %v6824 = vmax.f32 %v6822, %v6823
        %v6825 = vrot.slane %v6824, 2
        %v6826 = vmax.f32 %v6824, %v6825
        %v6827 = vrot.slane %v6826, 1
        %v6828 = vmax.f32 %v6826, %v6827
        %v6829 = vsel %vm6009, %v5904, -inf
        %v6830 = vrot.slane %v6829, 4
        %v6831 = vmax.f32 %v6829, %v6830
        %v6832 = vrot.slane %v6831, 2
        %v6833 = vmax.f32 %v6831, %v6832
        %v6834 = vrot.slane %v6833, 1
        %v6835 = vmax.f32 %v6833, %v6834
        %v6836 = vsel %vm6009, %v5905, -inf
        %v6837 = vrot.slane %v6836, 4
        %v6838 = vmax.f32 %v6836, %v6837
        %v6839 = vrot.slane %v6838, 2
        %v6840 = vmax.f32 %v6838, %v6839
        %v6841 = vrot.slane %v6840, 1
        %v6842 = vmax.f32 %v6840, %v6841
        %v6843 = vsel %vm6009, %v5906, -inf
        %v6844 = vrot.slane %v6843, 4
        %v6845 = vmax.f32 %v6843, %v6844
        %v6846 = vrot.slane %v6845, 2
        %v6847 = vmax.f32 %v6845, %v6846
        %v6848 = vrot.slane %v6847, 1
        %v6849 = vmax.f32 %v6847, %v6848
        %v6850 = vsel %vm6009, %v5783, -inf
        %v6851 = vrot.slane %v6850, 4
        %v6852 = vmax.f32 %v6850, %v6851
        %v6853 = vrot.slane %v6852, 2
        %v6854 = vmax.f32 %v6852, %v6853
        %v6855 = vrot.slane %v6854, 1
        %v6856 = vmax.f32 %v6854, %v6855
        %v6857 = vsel %vm6009, %v5907, -inf
        %v6858 = vrot.slane %v6857, 4
        %v6859 = vmax.f32 %v6857, %v6858
        %v6860 = vrot.slane %v6859, 2
        %v6861 = vmax.f32 %v6859, %v6860
        %v6862 = vrot.slane %v6861, 1
        %v6863 = vmax.f32 %v6861, %v6862
        %v6864 = vsel %vm6009, %v5908, -inf
        %v6865 = vrot.slane %v6864, 4
        %v6866 = vmax.f32 %v6864, %v6865
        %v6867 = vrot.slane %v6866, 2
        %v6868 = vmax.f32 %v6866, %v6867
        %v6869 = vrot.slane %v6868, 1
        %v6870 = vmax.f32 %v6868, %v6869
        %v6871 = vsel %vm6009, %v5909, -inf
        %v6872 = vrot.slane %v6871, 4
        %v6873 = vmax.f32 %v6871, %v6872
        %v6874 = vrot.slane %v6873, 2
        %v6875 = vmax.f32 %v6873, %v6874
        %v6876 = vrot.slane %v6875, 1
        %v6877 = vmax.f32 %v6875, %v6876
        %v6878 = vsel %vm6009, %v5784, -inf
        %v6879 = vrot.slane %v6878, 4
        %v6880 = vmax.f32 %v6878, %v6879
        %v6881 = vrot.slane %v6880, 2
        %v6882 = vmax.f32 %v6880, %v6881
        %v6883 = vrot.slane %v6882, 1
        %v6884 = vmax.f32 %v6882, %v6883
        %v6885 = vsel %vm6009, %v5910, -inf
        %v6886 = vrot.slane %v6885, 4
        %v6887 = vmax.f32 %v6885, %v6886
        %v6888 = vrot.slane %v6887, 2
        %v6889 = vmax.f32 %v6887, %v6888
        %v6890 = vrot.slane %v6889, 1
        %v6891 = vmax.f32 %v6889, %v6890
        %v6892 = vsel %vm6009, %v5911, -inf
        %v6893 = vrot.slane %v6892, 4
        %v6894 = vmax.f32 %v6892, %v6893
        %v6895 = vrot.slane %v6894, 2
        %v6896 = vmax.f32 %v6894, %v6895
        %v6897 = vrot.slane %v6896, 1
        %v6898 = vmax.f32 %v6896, %v6897
        %v6899 = vsel %vm6009, %v5912, -inf
        %v6900 = vrot.slane %v6899, 4
        %v6901 = vmax.f32 %v6899, %v6900
        %v6902 = vrot.slane %v6901, 2
        %v6903 = vmax.f32 %v6901, %v6902
        %v6904 = vrot.slane %v6903, 1
        %v6905 = vmax.f32 %v6903, %v6904
        %v6906 = vsel %vm3956, %v6016, -inf
        %v6907 = vsel %vm3956, %v6072, -inf
        %v6908 = vmax.f32 %v6906, %v6907
        %v6909 = vsel %vm3956, %v6023, -inf
        %v6910 = vsel %vm3956, %v6079, -inf
        %v6911 = vmax.f32 %v6909, %v6910
        %v6912 = vsel %vm3956, %v6030, -inf
        %v6913 = vsel %vm3956, %v6086, -inf
        %v6914 = vmax.f32 %v6912, %v6913
        %v6915 = vsel %vm3956, %v6037, -inf
        %v6916 = vsel %vm3956, %v6093, -inf
        %v6917 = vmax.f32 %v6915, %v6916
        %v6918 = vsel %vm3956, %v6044, -inf
        %v6919 = vsel %vm3956, %v6100, -inf
        %v6920 = vmax.f32 %v6918, %v6919
        %v6921 = vsel %vm3956, %v6051, -inf
        %v6922 = vsel %vm3956, %v6107, -inf
        %v6923 = vmax.f32 %v6921, %v6922
        %v6924 = vsel %vm3956, %v6058, -inf
        %v6925 = vsel %vm3956, %v6114, -inf
        %v6926 = vmax.f32 %v6924, %v6925
        %v6927 = vsel %vm3956, %v6065, -inf
        %v6928 = vsel %vm3956, %v6121, -inf
        %v6929 = vmax.f32 %v6927, %v6928
        %v6930 = vsel %vm3956, %v6128, -inf
        %v6931 = vsel %vm3956, %v6184, -inf
        %v6932 = vmax.f32 %v6930, %v6931
        %v6933 = vsel %vm3956, %v6135, -inf
        %v6934 = vsel %vm3956, %v6191, -inf
        %v6935 = vmax.f32 %v6933, %v6934
        %v6936 = vsel %vm3956, %v6142, -inf
        %v6937 = vsel %vm3956, %v6198, -inf
        %v6938 = vmax.f32 %v6936, %v6937
        %v6939 = vsel %vm3956, %v6149, -inf
        %v6940 = vsel %vm3956, %v6205, -inf
        %v6941 = vmax.f32 %v6939, %v6940
        %v6942 = vsel %vm3956, %v6156, -inf
        %v6943 = vsel %vm3956, %v6212, -inf
        %v6944 = vmax.f32 %v6942, %v6943
        %v6945 = vsel %vm3956, %v6163, -inf
        %v6946 = vsel %vm3956, %v6219, -inf
        %v6947 = vmax.f32 %v6945, %v6946
        %v6948 = vsel %vm3956, %v6170, -inf
        %v6949 = vsel %vm3956, %v6226, -inf
        %v6950 = vmax.f32 %v6948, %v6949
        %v6951 = vsel %vm3956, %v6177, -inf
        %v6952 = vsel %vm3956, %v6233, -inf
        %v6953 = vmax.f32 %v6951, %v6952
        %v6954 = vsel %vm3956, %v6240, -inf
        %v6955 = vsel %vm3956, %v6296, -inf
        %v6956 = vmax.f32 %v6954, %v6955
        %v6957 = vsel %vm3956, %v6247, -inf
        %v6958 = vsel %vm3956, %v6303, -inf
        %v6959 = vmax.f32 %v6957, %v6958
        %v6960 = vsel %vm3956, %v6254, -inf
        %v6961 = vsel %vm3956, %v6310, -inf
        %v6962 = vmax.f32 %v6960, %v6961
        %v6963 = vsel %vm3956, %v6261, -inf
        %v6964 = vsel %vm3956, %v6317, -inf
        %v6965 = vmax.f32 %v6963, %v6964
        %v6966 = vsel %vm3956, %v6268, -inf
        %v6967 = vsel %vm3956, %v6324, -inf
        %v6968 = vmax.f32 %v6966, %v6967
        %v6969 = vsel %vm3956, %v6275, -inf
        %v6970 = vsel %vm3956, %v6331, -inf
        %v6971 = vmax.f32 %v6969, %v6970
        %v6972 = vsel %vm3956, %v6282, -inf
        %v6973 = vsel %vm3956, %v6338, -inf
        %v6974 = vmax.f32 %v6972, %v6973
        %v6975 = vsel %vm3956, %v6289, -inf
        %v6976 = vsel %vm3956, %v6345, -inf
        %v6977 = vmax.f32 %v6975, %v6976
        %v6978 = vsel %vm3956, %v6352, -inf
        %v6979 = vsel %vm3956, %v6408, -inf
        %v6980 = vmax.f32 %v6978, %v6979
        %v6981 = vsel %vm3956, %v6359, -inf
        %v6982 = vsel %vm3956, %v6415, -inf
        %v6983 = vmax.f32 %v6981, %v6982
        %v6984 = vsel %vm3956, %v6366, -inf
        %v6985 = vsel %vm3956, %v6422, -inf
        %v6986 = vmax.f32 %v6984, %v6985
        %v6987 = vsel %vm3956, %v6373, -inf
        %v6988 = vsel %vm3956, %v6429, -inf
        %v6989 = vmax.f32 %v6987, %v6988
        %v6990 = vsel %vm3956, %v6380, -inf
        %v6991 = vsel %vm3956, %v6436, -inf
        %v6992 = vmax.f32 %v6990, %v6991
        %v6993 = vsel %vm3956, %v6387, -inf
        %v6994 = vsel %vm3956, %v6443, -inf
        %v6995 = vmax.f32 %v6993, %v6994
        %v6996 = vsel %vm3956, %v6394, -inf
        %v6997 = vsel %vm3956, %v6450, -inf
        %v6998 = vmax.f32 %v6996, %v6997
        %v6999 = vsel %vm3956, %v6401, -inf
        %v7000 = vsel %vm3956, %v6457, -inf
        %v7001 = vmax.f32 %v6999, %v7000
        %v7002 = vsel %vm3956, %v6464, -inf
        %v7003 = vsel %vm3956, %v6520, -inf
        %v7004 = vmax.f32 %v7002, %v7003
        %v7005 = vsel %vm3956, %v6471, -inf
        %v7006 = vsel %vm3956, %v6527, -inf
        %v7007 = vmax.f32 %v7005, %v7006
        %v7008 = vsel %vm3956, %v6478, -inf
        %v7009 = vsel %vm3956, %v6534, -inf
        %v7010 = vmax.f32 %v7008, %v7009
        %v7011 = vsel %vm3956, %v6485, -inf
        %v7012 = vsel %vm3956, %v6541, -inf
        %v7013 = vmax.f32 %v7011, %v7012
        %v7014 = vsel %vm3956, %v6492, -inf
        %v7015 = vsel %vm3956, %v6548, -inf
        %v7016 = vmax.f32 %v7014, %v7015
        %v7017 = vsel %vm3956, %v6499, -inf
        %v7018 = vsel %vm3956, %v6555, -inf
        %v7019 = vmax.f32 %v7017, %v7018
        %v7020 = vsel %vm3956, %v6506, -inf
        %v7021 = vsel %vm3956, %v6562, -inf
        %v7022 = vmax.f32 %v7020, %v7021
        %v7023 = vsel %vm3956, %v6513, -inf
        %v7024 = vsel %vm3956, %v6569, -inf
        %v7025 = vmax.f32 %v7023, %v7024
        %v7026 = vsel %vm3956, %v6576, -inf
        %v7027 = vsel %vm3956, %v6632, -inf
        %v7028 = vmax.f32 %v7026, %v7027
        %v7029 = vsel %vm3956, %v6583, -inf
        %v7030 = vsel %vm3956, %v6639, -inf
        %v7031 = vmax.f32 %v7029, %v7030
        %v7032 = vsel %vm3956, %v6590, -inf
        %v7033 = vsel %vm3956, %v6646, -inf
        %v7034 = vmax.f32 %v7032, %v7033
        %v7035 = vsel %vm3956, %v6597, -inf
        %v7036 = vsel %vm3956, %v6653, -inf
        %v7037 = vmax.f32 %v7035, %v7036
        %v7038 = vsel %vm3956, %v6604, -inf
        %v7039 = vsel %vm3956, %v6660, -inf
        %v7040 = vmax.f32 %v7038, %v7039
        %v7041 = vsel %vm3956, %v6611, -inf
        %v7042 = vsel %vm3956, %v6667, -inf
        %v7043 = vmax.f32 %v7041, %v7042
        %v7044 = vsel %vm3956, %v6618, -inf
        %v7045 = vsel %vm3956, %v6674, -inf
        %v7046 = vmax.f32 %v7044, %v7045
        %v7047 = vsel %vm3956, %v6625, -inf
        %v7048 = vsel %vm3956, %v6681, -inf
        %v7049 = vmax.f32 %v7047, %v7048
        %v7050 = vsel %vm3956, %v6688, -inf
        %v7051 = vsel %vm3956, %v6744, -inf
        %v7052 = vmax.f32 %v7050, %v7051
        %v7053 = vsel %vm3956, %v6695, -inf
        %v7054 = vsel %vm3956, %v6751, -inf
        %v7055 = vmax.f32 %v7053, %v7054
        %v7056 = vsel %vm3956, %v6702, -inf
        %v7057 = vsel %vm3956, %v6758, -inf
        %v7058 = vmax.f32 %v7056, %v7057
        %v7059 = vsel %vm3956, %v6709, -inf
        %v7060 = vsel %vm3956, %v6765, -inf
        %v7061 = vmax.f32 %v7059, %v7060
        %v7062 = vsel %vm3956, %v6716, -inf
        %v7063 = vsel %vm3956, %v6772, -inf
        %v7064 = vmax.f32 %v7062, %v7063
        %v7065 = vsel %vm3956, %v6723, -inf
        %v7066 = vsel %vm3956, %v6779, -inf
        %v7067 = vmax.f32 %v7065, %v7066
        %v7068 = vsel %vm3956, %v6730, -inf
        %v7069 = vsel %vm3956, %v6786, -inf
        %v7070 = vmax.f32 %v7068, %v7069
        %v7071 = vsel %vm3956, %v6737, -inf
        %v7072 = vsel %vm3956, %v6793, -inf
        %v7073 = vmax.f32 %v7071, %v7072
        %v7074 = vsel %vm3956, %v6800, -inf
        %v7075 = vsel %vm3956, %v6856, -inf
        %v7076 = vmax.f32 %v7074, %v7075
        %v7077 = vsel %vm3956, %v6807, -inf
        %v7078 = vsel %vm3956, %v6863, -inf
        %v7079 = vmax.f32 %v7077, %v7078
        %v7080 = vsel %vm3956, %v6814, -inf
        %v7081 = vsel %vm3956, %v6870, -inf
        %v7082 = vmax.f32 %v7080, %v7081
        %v7083 = vsel %vm3956, %v6821, -inf
        %v7084 = vsel %vm3956, %v6877, -inf
        %v7085 = vmax.f32 %v7083, %v7084
        %v7086 = vsel %vm3956, %v6828, -inf
        %v7087 = vsel %vm3956, %v6884, -inf
        %v7088 = vmax.f32 %v7086, %v7087
        %v7089 = vsel %vm3956, %v6835, -inf
        %v7090 = vsel %vm3956, %v6891, -inf
        %v7091 = vmax.f32 %v7089, %v7090
        %v7092 = vsel %vm3956, %v6842, -inf
        %v7093 = vsel %vm3956, %v6898, -inf
        %v7094 = vmax.f32 %v7092, %v7093
        %v7095 = vsel %vm3956, %v6849, -inf
        %v7096 = vsel %vm3956, %v6905, -inf
        %v7097 = vmax.f32 %v7095, %v7096
        %vm7162 = vcmask 1041409
        %v7163 = vsel %vm7162, %v6911, %v6908
        %vm7164 = vcmask 1042434
        %v7165 = vsel %vm7164, %v6914, %v7163
        %vm7166 = vcmask 1043459
        %v7167 = vsel %vm7166, %v6917, %v7165
        %vm7168 = vcmask 1044484
        %v7169 = vsel %vm7168, %v6920, %v7167
        %vm7170 = vcmask 1045509
        %v7171 = vsel %vm7170, %v6923, %v7169
        %vm7172 = vcmask 1046534
        %v7173 = vsel %vm7172, %v6926, %v7171
        %vm7174 = vcmask 1047559
        %v7175 = vsel %vm7174, %v6929, %v7173
        %v7176 = vsel %vm7162, %v6935, %v6932
        %v7177 = vsel %vm7164, %v6938, %v7176
        %v7178 = vsel %vm7166, %v6941, %v7177
        %v7179 = vsel %vm7168, %v6944, %v7178
        %v7180 = vsel %vm7170, %v6947, %v7179
        %v7181 = vsel %vm7172, %v6950, %v7180
        %v7182 = vsel %vm7174, %v6953, %v7181
        %v7183 = vsel %vm7162, %v6959, %v6956
        %v7184 = vsel %vm7164, %v6962, %v7183
        %v7185 = vsel %vm7166, %v6965, %v7184
        %v7186 = vsel %vm7168, %v6968, %v7185
        %v7187 = vsel %vm7170, %v6971, %v7186
        %v7188 = vsel %vm7172, %v6974, %v7187
        %v7189 = vsel %vm7174, %v6977, %v7188
        %v7190 = vsel %vm7162, %v6983, %v6980
        %v7191 = vsel %vm7164, %v6986, %v7190
        %v7192 = vsel %vm7166, %v6989, %v7191
        %v7193 = vsel %vm7168, %v6992, %v7192
        %v7194 = vsel %vm7170, %v6995, %v7193
        %v7195 = vsel %vm7172, %v6998, %v7194
        %v7196 = vsel %vm7174, %v7001, %v7195
        %v7197 = vsel %vm7162, %v7007, %v7004
        %v7198 = vsel %vm7164, %v7010, %v7197
        %v7199 = vsel %vm7166, %v7013, %v7198
        %v7200 = vsel %vm7168, %v7016, %v7199
        %v7201 = vsel %vm7170, %v7019, %v7200
        %v7202 = vsel %vm7172, %v7022, %v7201
        %v7203 = vsel %vm7174, %v7025, %v7202
        %v7204 = vsel %vm7162, %v7031, %v7028
        %v7205 = vsel %vm7164, %v7034, %v7204
        %v7206 = vsel %vm7166, %v7037, %v7205
        %v7207 = vsel %vm7168, %v7040, %v7206
        %v7208 = vsel %vm7170, %v7043, %v7207
        %v7209 = vsel %vm7172, %v7046, %v7208
        %v7210 = vsel %vm7174, %v7049, %v7209
        %v7211 = vsel %vm7162, %v7055, %v7052
        %v7212 = vsel %vm7164, %v7058, %v7211
        %v7213 = vsel %vm7166, %v7061, %v7212
        %v7214 = vsel %vm7168, %v7064, %v7213
        %v7215 = vsel %vm7170, %v7067, %v7214
        %v7216 = vsel %vm7172, %v7070, %v7215
        %v7217 = vsel %vm7174, %v7073, %v7216
        %v7218 = vsel %vm7162, %v7079, %v7076
        %v7219 = vsel %vm7164, %v7082, %v7218
        %v7220 = vsel %vm7166, %v7085, %v7219
        %v7221 = vsel %vm7168, %v7088, %v7220
        %v7222 = vsel %vm7170, %v7091, %v7221
        %v7223 = vsel %vm7172, %v7094, %v7222
        %v7224 = vsel %vm7174, %v7097, %v7223
        %7233 = vst.msk [vmem:[%s217] sm:$0xff] %vm3956, %v7175
        %7234 = vst.msk [vmem:[%s217 + $0x8] sm:$0xff] %vm3956, %v7182
        %7235 = vst.msk [vmem:[%s217 + $0x10] sm:$0xff] %vm3956, %v7189
        %7236 = vst.msk [vmem:[%s217 + $0x18] sm:$0xff] %vm3956, %v7196
        %7237 = vst.msk [vmem:[%s217 + $0x20] sm:$0xff] %vm3956, %v7203
        %7238 = vst.msk [vmem:[%s217 + $0x28] sm:$0xff] %vm3956, %v7210
        %7239 = vst.msk [vmem:[%s217 + $0x30] sm:$0xff] %vm3956, %v7217
        %7240 = vst.msk [vmem:[%s217 + $0x38] sm:$0xff] %vm3956, %v7224
        %s7241 = sand.u32 %s137, 1
        %s7242 = scalar_lea.sflag [#allocation5], %s7241
        %s7243 = sand.u32 %s137, 1
        %s7244 = smul.addr %s7243, 64
        %s7245 = scalar_lea.vmem [#allocation4], %s7244
        // Predicated region
        $region41: #{double_conv.1} parent=39 // pred_check
          %p7246 = pneg %p147
        $region42: #{double_conv.1} parent=39 // pred_check_branch
          %7248 = sbr.rel (%p7246) target = $region44
        $region43: #{double_conv.1} parent=39 // pred_region
          %7250 = vsyncadd %s7242, 0
          %s7251 = smul.addr %s19, 8
          %s7252 = smul.addr %s7251, 8
          %s7253 = scalar_lea.hbm %s5, %s7252
          %s7254 = sshll.u32 %s7245, 4
          %s7255 = int_to_ptr.vmem [resolvable:$true] %s7254
          %s7256 = sshll.u32 %s7253, 4
          %s7257 = int_to_ptr.hbm [resolvable:$true] %s7256
          %7262 = dma.vmem_to_hbm [thread:$0]  %s7255, 1024, %s7257, %s7242, 128, 128, 8
        $region44: #{double_conv.1} parent=39 // pred_fallthru
          _
      $region40: #{double_conv.1} parent=5 // pred_fallthru
        _
      %p7263 = scmp.le.s32.totalorder 2, %s14
      // Predicated region
      $region45: #{double_conv.1} parent=5 // pred_check
        %p7264 = pneg %p7263
      $region46: #{double_conv.1} parent=5 // pred_check_branch
        %7266 = sbr.rel (%p7264) target = $region48
      $region47: #{double_conv.1} parent=5 // pred_region
        %s7267 = ssub.s32 %s14, 2
        // Predicated region
        $region49: #{double_conv.1} parent=47 // pred_check
          %p7268 = pneg %p153
        $region50: #{double_conv.1} parent=47 // pred_check_branch
          %7270 = sbr.rel (%p7268) target = $region52
        $region51: #{double_conv.1} parent=47 // pred_region
          %s7271 = sand.u32 %s138, 1
          %s7272 = scalar_lea.sflag [#allocation5], %s7271
          %s7273 = sand.u32 %s138, 1
          %s7274 = smul.addr %s7273, 64
          %s7275 = scalar_lea.vmem [#allocation4], %s7274
          %7277 = dma.done %s7272, 1024
        $region52: #{double_conv.1} parent=47 // pred_fallthru
          _
      $region48: #{double_conv.1} parent=5 // pred_fallthru
        _
    $region6: #{double_conv.1} parent=1 // loop_footer
      %s18 = sadd.s32 1, %s14
    $region7: #{double_conv.1} parent=1 // loop_footer_branch
      %13 = sbr.rel target = $region3
    $region8: #{double_conv.1} parent=1 // loop_exit
      _
    %7278 = vsyncpa [#allocation5], 1
    %s7279 = scalar_lea.sflag [#allocation5], 1
    %7280 = vsyncpa %s7279, 1

</llo_original>
